<compile_context>
chip_gen: v5e
topology: v5e:2x2
jax: 0.10.0
libtpu: 0.0.40
codegen_flags: <defaults>
</compile_context>

<pallas_src>
import functools

import jax
import jax.numpy as jnp
from jax.experimental import pallas as pl
from jax.experimental.pallas import tpu as pltpu

IN_DIM = 28 * 28          # 784
IN_PAD = 896              # 7 * 128: lane-dense K for fc1
H1, H2, H3 = 1024, 256, 128
OUT = 10
OUT_PAD = 128             # lane-dense output width; sliced back to 10 in the wrapper


def _round_up(n, m):
    return ((n + m - 1) // m) * m


def _default_batch_tile():
    """MXU-filling M tile per TPU generation: 256 for v6e/v7x, 128 otherwise."""
    try:
        kind = jax.devices()[0].device_kind.lower()
    except Exception:
        return 256
    if ("v6" in kind) or ("v7" in kind) or ("7x" in kind):
        return 256
    return 128


def fcnet_kernel(x_ref, w1_ref, b1_ref, w2_ref, b2_ref,
                 w3_ref, b3_ref, w4_ref, b4_ref, o_ref):
    # fc1 + relu   (bf16 x bf16 -> f32 accumulate on the MXU by default)
    h = jnp.dot(x_ref[...], w1_ref[...], preferred_element_type=jnp.float32)
    h = jnp.maximum(h + b1_ref[...], 0.0)
    # fc2 + relu
    h = jnp.dot(h.astype(w2_ref.dtype), w2_ref[...], preferred_element_type=jnp.float32)
    h = jnp.maximum(h + b2_ref[...], 0.0)
    # fc3 + relu
    h = jnp.dot(h.astype(w3_ref.dtype), w3_ref[...], preferred_element_type=jnp.float32)
    h = jnp.maximum(h + b3_ref[...], 0.0)
    # fc4 (no activation); columns >= 10 are zero-padded and sliced off in the wrapper
    h = jnp.dot(h.astype(w4_ref.dtype), w4_ref[...], preferred_element_type=jnp.float32)
    o_ref[...] = (h + b4_ref[...]).astype(o_ref.dtype)


@functools.partial(jax.jit, static_argnames=("batch_tile", "compute_dtype"))
def _fcnet_impl(x2d, params, *, batch_tile, compute_dtype):
    w1, b1, w2, b2, w3, b3, w4, b4 = params
    B = x2d.shape[0]

    # Balanced batch tiling: tile <= batch_tile, multiple of 8 sublanes, grid steps
    # as even as possible (keeps both v7x TensorCores busy, minimizes pad waste).
    num_steps = pl.cdiv(B, batch_tile)
    tile = min(batch_tile, _round_up(pl.cdiv(B, num_steps), 8))
    num_steps = pl.cdiv(B, tile)
    b_pad = num_steps * tile

    # Zero-pad batch rows / fc1 K / fc4 N to lane-dense shapes; cast MXU operands.
    xp = jnp.pad(x2d, ((0, b_pad - B), (0, IN_PAD - IN_DIM))).astype(compute_dtype)
    w1p = jnp.pad(w1, ((0, IN_PAD - IN_DIM), (0, 0))).astype(compute_dtype)
    w2c = w2.astype(compute_dtype)
    w3c = w3.astype(compute_dtype)
    w4p = jnp.pad(w4, ((0, 0), (0, OUT_PAD - OUT))).astype(compute_dtype)
    # Biases stay f32: bias-add / ReLU operate on the f32 accumulators.
    b1r = b1.reshape(1, H1)
    b2r = b2.reshape(1, H2)
    b3r = b3.reshape(1, H3)
    b4r = jnp.pad(b4, (0, OUT_PAD - OUT)).reshape(1, OUT_PAD)

    def resident(shape):
        # Grid-invariant operand: whole array stays in VMEM for every grid step;
        # single-buffered because the block index never changes (no re-DMA).
        return pl.BlockSpec(shape, lambda i: (0, 0), pipeline_mode=pl.Buffered(1))

    out = pl.pallas_call(
        fcnet_kernel,
        out_shape=jax.ShapeDtypeStruct((b_pad, OUT_PAD), jnp.float32),
        grid_spec=pltpu.PrefetchScalarGridSpec(
            num_scalar_prefetch=0,
            grid=(num_steps,),
            in_specs=[
                pl.BlockSpec((tile, IN_PAD), lambda i: (i, 0)),   # x tile (pipelined)
                resident((IN_PAD, H1)), resident((1, H1)),
                resident((H1, H2)),     resident((1, H2)),
                resident((H2, H3)),     resident((1, H3)),
                resident((H3, OUT_PAD)), resident((1, OUT_PAD)),
            ],
            out_specs=pl.BlockSpec((tile, OUT_PAD), lambda i: (i, 0)),
        ),
        compiler_params=pltpu.CompilerParams(
            dimension_semantics=("parallel",),   # shards the batch grid over v7x's 2 TCs
            vmem_limit_bytes=32 * 1024 * 1024,   # headroom for large batch tiles
        ),
    )(xp, w1p, b1r, w2c, b2r, w3c, b3r, w4p, b4r)

    return out[:B, :OUT]


def fcnet_forward(x, params, batch_tile=None, compute_dtype=jnp.bfloat16):
    """x: (B, 1, 28, 28) float32 (NCHW, as in PyTorch). Returns logits (B, 10) f32.

    compute_dtype controls the MXU operand dtype. bf16 (default) runs the MXU at
    its native rate on v6e/v7x and halves the weight footprint/DMA; pass
    jnp.float32 for bit-accurate semantics of the original module.
    """
    if batch_tile is None:
        batch_tile = _default_batch_tile()
    B = x.shape[0]
    x2d = x.reshape(B, -1)                       # torch.flatten(x, 1)
    assert x2d.shape[1] == IN_DIM, x2d.shape
    return _fcnet_impl(x2d, tuple(params), batch_tile=int(batch_tile),
                       compute_dtype=compute_dtype)


def init_params(key):
    """nn.Linear-style init: U(-1/sqrt(fan_in), 1/sqrt(fan_in)).
    Weights stored as (in_features, out_features) = transpose of PyTorch layout."""
    dims = [(IN_DIM, H1), (H1, H2), (H2, H3), (H3, OUT)]
    params = []
    for (fan_in, fan_out) in dims:
        key, kw, kb = jax.random.split(key, 3)
        bound = 1.0 / (fan_in ** 0.5)
        w = jax.random.uniform(kw, (fan_in, fan_out), jnp.float32, -bound, bound)
        b = jax.random.uniform(kb, (fan_out,), jnp.float32, -bound, bound)
        params += [w, b]
    return tuple(params)


def reference_forward(x, params):
    """Pure-JAX f32 reference for correctness checking."""
    w1, b1, w2, b2, w3, b3, w4, b4 = params
    h = x.reshape(x.shape[0], -1)
    h = jnp.maximum(h @ w1 + b1, 0.0)
    h = jnp.maximum(h @ w2 + b2, 0.0)
    h = jnp.maximum(h @ w3 + b3, 0.0)
    return h @ w4 + b4


if __name__ == "__main__":
    key = jax.random.PRNGKey(0)
    kp, kx, kx2 = jax.random.split(key, 3)
    params = init_params(kp)

    # Small latency-path batch (single grid step, tile rounded up to the 8-sublane min).
    B = 8
    x = jax.random.normal(kx, (B, 1, 28, 28), jnp.float32)   # NCHW like PyTorch
    ref = reference_forward(x, params)

    # Strict f32 path: matches the original module's math.
    out_f32 = jax.block_until_ready(fcnet_forward(x, params, compute_dtype=jnp.float32))
    assert out_f32.shape == (B, OUT), out_f32.shape
    assert jnp.allclose(out_f32, ref, atol=1e-4, rtol=1e-4), "f32 path mismatch vs reference"

    # Default fast path: bf16 MXU operands with f32 accumulation -> looser tolerance.
    out_bf16 = jax.block_until_ready(fcnet_forward(x, params))
    assert out_bf16.shape == (B, OUT), out_bf16.shape
    assert jnp.allclose(out_bf16, ref, atol=3e-2, rtol=3e-2), "bf16 path mismatch vs reference"

    # Ragged batch exercises the batch-padding / output-slicing path.
    x12 = jax.random.normal(kx2, (12, 1, 28, 28), jnp.float32)
    out12 = jax.block_until_ready(fcnet_forward(x12, params, compute_dtype=jnp.float32))
    assert out12.shape == (12, OUT), out12.shape
    assert jnp.allclose(out12, reference_forward(x12, params), atol=1e-4, rtol=1e-4), \
        "ragged-batch path mismatch vs reference"

    print("KERNEL_OK")
</pallas_src>

<mosaic_0001>
module attributes {stable_mosaic.version = 11 : i64} {
  func.func @fcnet_kernel(%arg0: i32, %arg1: memref<8x896xf32, #tpu.memory_space<vmem>>, %arg2: memref<896x1024xf32, #tpu.memory_space<vmem>>, %arg3: memref<1x1024xf32, #tpu.memory_space<vmem>>, %arg4: memref<1024x256xf32, #tpu.memory_space<vmem>>, %arg5: memref<1x256xf32, #tpu.memory_space<vmem>>, %arg6: memref<256x128xf32, #tpu.memory_space<vmem>>, %arg7: memref<1x128xf32, #tpu.memory_space<vmem>>, %arg8: memref<128x128xf32, #tpu.memory_space<vmem>>, %arg9: memref<1x128xf32, #tpu.memory_space<vmem>>, %arg10: memref<8x128xf32, #tpu.memory_space<vmem>>) attributes {dimension_semantics = [#tpu.dimension_semantics<parallel>], iteration_bounds = array<i64: 1>, scalar_prefetch = 0 : i64, scratch_operands = 0 : i64, tpu.core_type = #tpu.core_type<tc>, window_params = [{transform_indices = @transform_0, window_bounds = array<i64: 8, 896>}, {pipeline_mode = #tpu.pipeline_mode<synchronous>, transform_indices = @transform_1, window_bounds = array<i64: 896, 1024>}, {pipeline_mode = #tpu.pipeline_mode<synchronous>, transform_indices = @transform_2, window_bounds = array<i64: 1, 1024>}, {pipeline_mode = #tpu.pipeline_mode<synchronous>, transform_indices = @transform_3, window_bounds = array<i64: 1024, 256>}, {pipeline_mode = #tpu.pipeline_mode<synchronous>, transform_indices = @transform_4, window_bounds = array<i64: 1, 256>}, {pipeline_mode = #tpu.pipeline_mode<synchronous>, transform_indices = @transform_5, window_bounds = array<i64: 256, 128>}, {pipeline_mode = #tpu.pipeline_mode<synchronous>, transform_indices = @transform_6, window_bounds = array<i64: 1, 128>}, {pipeline_mode = #tpu.pipeline_mode<synchronous>, transform_indices = @transform_7, window_bounds = array<i64: 128, 128>}, {pipeline_mode = #tpu.pipeline_mode<synchronous>, transform_indices = @transform_8, window_bounds = array<i64: 1, 128>}, {transform_indices = @transform_9, window_bounds = array<i64: 8, 128>}]} {
    %c0 = arith.constant 0 : index
    %c0_0 = arith.constant 0 : index
    %0 = vector.load %arg1[%c0, %c0_0] : memref<8x896xf32, #tpu.memory_space<vmem>>, vector<8x896xf32>
    %c0_1 = arith.constant 0 : index
    %c0_2 = arith.constant 0 : index
    %1 = vector.load %arg2[%c0_1, %c0_2] : memref<896x1024xf32, #tpu.memory_space<vmem>>, vector<896x1024xf32>
    %cst = arith.constant dense<0.000000e+00> : vector<8x1024xf32>
    %2 = tpu.matmul %0, %1, %cst {dimension_numbers = #tpu.dot_dimension_numbers<[1], [0], [0], [1], [0, 0, 1, 1], [], []>} : vector<8x896xf32>, vector<896x1024xf32>, vector<8x1024xf32> -> vector<8x1024xf32>
    %c0_3 = arith.constant 0 : index
    %c0_4 = arith.constant 0 : index
    %3 = vector.load %arg3[%c0_3, %c0_4] : memref<1x1024xf32, #tpu.memory_space<vmem>>, vector<1x1024xf32>
    %4 = vector.broadcast %3 : vector<1x1024xf32> to vector<8x1024xf32>
    %5 = arith.addf %2, %4 : vector<8x1024xf32>
    %cst_5 = arith.constant 0.000000e+00 : f32
    %6 = vector.broadcast %cst_5 : f32 to vector<8x1024xf32>
    %7 = arith.maximumf %5, %6 : vector<8x1024xf32>
    %c0_6 = arith.constant 0 : index
    %c0_7 = arith.constant 0 : index
    %8 = vector.load %arg4[%c0_6, %c0_7] : memref<1024x256xf32, #tpu.memory_space<vmem>>, vector<1024x256xf32>
    %cst_8 = arith.constant dense<0.000000e+00> : vector<8x256xf32>
    %9 = tpu.matmul %7, %8, %cst_8 {dimension_numbers = #tpu.dot_dimension_numbers<[1], [0], [0], [1], [0, 0, 1, 1], [], []>} : vector<8x1024xf32>, vector<1024x256xf32>, vector<8x256xf32> -> vector<8x256xf32>
    %c0_9 = arith.constant 0 : index
    %c0_10 = arith.constant 0 : index
    %10 = vector.load %arg5[%c0_9, %c0_10] : memref<1x256xf32, #tpu.memory_space<vmem>>, vector<1x256xf32>
    %11 = vector.broadcast %10 : vector<1x256xf32> to vector<8x256xf32>
    %12 = arith.addf %9, %11 : vector<8x256xf32>
    %cst_11 = arith.constant 0.000000e+00 : f32
    %13 = vector.broadcast %cst_11 : f32 to vector<8x256xf32>
    %14 = arith.maximumf %12, %13 : vector<8x256xf32>
    %c0_12 = arith.constant 0 : index
    %c0_13 = arith.constant 0 : index
    %15 = vector.load %arg6[%c0_12, %c0_13] : memref<256x128xf32, #tpu.memory_space<vmem>>, vector<256x128xf32>
    %cst_14 = arith.constant dense<0.000000e+00> : vector<8x128xf32>
    %16 = tpu.matmul %14, %15, %cst_14 {dimension_numbers = #tpu.dot_dimension_numbers<[1], [0], [0], [1], [0, 0, 1, 1], [], []>} : vector<8x256xf32>, vector<256x128xf32>, vector<8x128xf32> -> vector<8x128xf32>
    %c0_15 = arith.constant 0 : index
    %c0_16 = arith.constant 0 : index
    %17 = vector.load %arg7[%c0_15, %c0_16] : memref<1x128xf32, #tpu.memory_space<vmem>>, vector<1x128xf32>
    %18 = vector.broadcast %17 : vector<1x128xf32> to vector<8x128xf32>
    %19 = arith.addf %16, %18 : vector<8x128xf32>
    %cst_17 = arith.constant 0.000000e+00 : f32
    %20 = vector.broadcast %cst_17 : f32 to vector<8x128xf32>
    %21 = arith.maximumf %19, %20 : vector<8x128xf32>
    %c0_18 = arith.constant 0 : index
    %c0_19 = arith.constant 0 : index
    %22 = vector.load %arg8[%c0_18, %c0_19] : memref<128x128xf32, #tpu.memory_space<vmem>>, vector<128x128xf32>
    %cst_20 = arith.constant dense<0.000000e+00> : vector<8x128xf32>
    %23 = tpu.matmul %21, %22, %cst_20 {dimension_numbers = #tpu.dot_dimension_numbers<[1], [0], [0], [1], [0, 0, 1, 1], [], []>} : vector<8x128xf32>, vector<128x128xf32>, vector<8x128xf32> -> vector<8x128xf32>
    %c0_21 = arith.constant 0 : index
    %c0_22 = arith.constant 0 : index
    %24 = vector.load %arg9[%c0_21, %c0_22] : memref<1x128xf32, #tpu.memory_space<vmem>>, vector<1x128xf32>
    %25 = vector.broadcast %24 : vector<1x128xf32> to vector<8x128xf32>
    %26 = arith.addf %23, %25 : vector<8x128xf32>
    %c0_23 = arith.constant 0 : index
    %c0_24 = arith.constant 0 : index
    %27 = vector.load %arg10[%c0_23, %c0_24] : memref<8x128xf32, #tpu.memory_space<vmem>>, vector<8x128xf32>
    tpu.vector_store %arg10[%c0_23, %c0_24], %26 {strides = array<i32>} : memref<8x128xf32, #tpu.memory_space<vmem>>, vector<8x128xf32>,
    return
  }
  func.func @transform_0(%arg0: i32) -> (i32, i32) {
    %c0_i32 = arith.constant 0 : i32
    %c0_i32_0 = arith.constant 0 : i32
    return %arg0, %c0_i32 : i32, i32
  }
  func.func @transform_1(%arg0: i32) -> (i32, i32) {
    %c0_i32 = arith.constant 0 : i32
    %c0_i32_0 = arith.constant 0 : i32
    %c0_i32_1 = arith.constant 0 : i32
    return %c0_i32, %c0_i32_0 : i32, i32
  }
  func.func @transform_2(%arg0: i32) -> (i32, i32) {
    %c0_i32 = arith.constant 0 : i32
    %c0_i32_0 = arith.constant 0 : i32
    %c0_i32_1 = arith.constant 0 : i32
    return %c0_i32, %c0_i32_0 : i32, i32
  }
  func.func @transform_3(%arg0: i32) -> (i32, i32) {
    %c0_i32 = arith.constant 0 : i32
    %c0_i32_0 = arith.constant 0 : i32
    %c0_i32_1 = arith.constant 0 : i32
    return %c0_i32, %c0_i32_0 : i32, i32
  }
  func.func @transform_4(%arg0: i32) -> (i32, i32) {
    %c0_i32 = arith.constant 0 : i32
    %c0_i32_0 = arith.constant 0 : i32
    %c0_i32_1 = arith.constant 0 : i32
    return %c0_i32, %c0_i32_0 : i32, i32
  }
  func.func @transform_5(%arg0: i32) -> (i32, i32) {
    %c0_i32 = arith.constant 0 : i32
    %c0_i32_0 = arith.constant 0 : i32
    %c0_i32_1 = arith.constant 0 : i32
    return %c0_i32, %c0_i32_0 : i32, i32
  }
  func.func @transform_6(%arg0: i32) -> (i32, i32) {
    %c0_i32 = arith.constant 0 : i32
    %c0_i32_0 = arith.constant 0 : i32
    %c0_i32_1 = arith.constant 0 : i32
    return %c0_i32, %c0_i32_0 : i32, i32
  }
  func.func @transform_7(%arg0: i32) -> (i32, i32) {
    %c0_i32 = arith.constant 0 : i32
    %c0_i32_0 = arith.constant 0 : i32
    %c0_i32_1 = arith.constant 0 : i32
    return %c0_i32, %c0_i32_0 : i32, i32
  }
  func.func @transform_8(%arg0: i32) -> (i32, i32) {
    %c0_i32 = arith.constant 0 : i32
    %c0_i32_0 = arith.constant 0 : i32
    %c0_i32_1 = arith.constant 0 : i32
    return %c0_i32, %c0_i32_0 : i32, i32
  }
  func.func @transform_9(%arg0: i32) -> (i32, i32) {
    %c0_i32 = arith.constant 0 : i32
    %c0_i32_0 = arith.constant 0 : i32
    return %arg0, %c0_i32 : i32, i32
  }
}

</mosaic_0001>

<llo_original>
// kernel: _fcnet_impl.1
$region0: #{_fcnet_impl.1}
  #allocation0 [shape = 'u32[]', space=smem, size = 0x4, offset = 0x4, fixed_abs, tag = 'smem constant byte address 0x4 - core index']
  #allocation1 [shape = 'u32[72,128]{1,0:T(1,128)}', space=vmem, size = 0x9000, scoped, tag = 'internal scratch']
  %s0 = inlined_call_operand.vmem [shape: f32[8,896], index: 0, kind: input, shape index: {}]
  %s1 = inlined_call_operand.vmem [shape: f32[896,1024], index: 1, kind: input, shape index: {}]
  %s2 = inlined_call_operand.vmem [shape: f32[1,1024], index: 2, kind: input, shape index: {}]
  %s3 = inlined_call_operand.vmem [shape: f32[1024,256], index: 3, kind: input, shape index: {}]
  %s4 = inlined_call_operand.vmem [shape: f32[1,256], index: 4, kind: input, shape index: {}]
  %s5 = inlined_call_operand.vmem [shape: f32[256,128], index: 5, kind: input, shape index: {}]
  %s6 = inlined_call_operand.vmem [shape: f32[1,128], index: 6, kind: input, shape index: {}]
  %s7 = inlined_call_operand.vmem [shape: f32[128,128], index: 7, kind: input, shape index: {}]
  %s8 = inlined_call_operand.vmem [shape: f32[1,128], index: 8, kind: input, shape index: {}]
  %s9 = inlined_call_operand.hbm [shape: f32[8,128], index: 9, kind: output, shape index: {}]
  %s10 = sld [smem:[#allocation0]]
  $region46: #{_fcnet_impl.1} parent=0
    _
  %s12 = ssub.s32 1, %s10
  %s13 = scalar_select 0, %s12, %s10
  $region1: #{_fcnet_impl.1} parent=0
    #allocation2 [shape = 'u8[4096]{0}', space=vmem, size = 0x1000, scoped, tag = 'output window, operand 0, single buffered']
    #allocation3 [shape = 's32[1]{0}', space=sflag, size = 0x4, scoped, tag = 'scoped memory for _fcnet_impl.1']
    %14 = vsyncpa [#allocation3], 0
    // Predicated region
    $region2: #{_fcnet_impl.1} parent=1 // pred_check
      _
    $region3: #{_fcnet_impl.1} parent=1 // pred_check_branch
      %16 = sbr.rel (0) target = $region5
    $region4: #{_fcnet_impl.1} parent=1 // pred_region
      _
    $region5: #{_fcnet_impl.1} parent=1 // pred_fallthru
      _
    // Predicated region
    $region6: #{_fcnet_impl.1} parent=1 // pred_check
      _
    $region7: #{_fcnet_impl.1} parent=1 // pred_check_branch
      %18 = sbr.rel (0) target = $region9
    $region8: #{_fcnet_impl.1} parent=1 // pred_region
      _
    $region9: #{_fcnet_impl.1} parent=1 // pred_fallthru
      _
    // Predicated region
    $region10: #{_fcnet_impl.1} parent=1 // pred_check
      _
    $region11: #{_fcnet_impl.1} parent=1 // pred_check_branch
      %20 = sbr.rel (0) target = $region13
    $region12: #{_fcnet_impl.1} parent=1 // pred_region
      _
    $region13: #{_fcnet_impl.1} parent=1 // pred_fallthru
      _
    // Predicated region
    $region14: #{_fcnet_impl.1} parent=1 // pred_check
      _
    $region15: #{_fcnet_impl.1} parent=1 // pred_check_branch
      %22 = sbr.rel (0) target = $region17
    $region16: #{_fcnet_impl.1} parent=1 // pred_region
      _
    $region17: #{_fcnet_impl.1} parent=1 // pred_fallthru
      _
    // Predicated region
    $region18: #{_fcnet_impl.1} parent=1 // pred_check
      _
    $region19: #{_fcnet_impl.1} parent=1 // pred_check_branch
      %24 = sbr.rel (0) target = $region21
    $region20: #{_fcnet_impl.1} parent=1 // pred_region
      _
    $region21: #{_fcnet_impl.1} parent=1 // pred_fallthru
      _
    // Predicated region
    $region22: #{_fcnet_impl.1} parent=1 // pred_check
      _
    $region23: #{_fcnet_impl.1} parent=1 // pred_check_branch
      %26 = sbr.rel (0) target = $region25
    $region24: #{_fcnet_impl.1} parent=1 // pred_region
      _
    $region25: #{_fcnet_impl.1} parent=1 // pred_fallthru
      _
    // Predicated region
    $region26: #{_fcnet_impl.1} parent=1 // pred_check
      _
    $region27: #{_fcnet_impl.1} parent=1 // pred_check_branch
      %28 = sbr.rel (0) target = $region29
    $region28: #{_fcnet_impl.1} parent=1 // pred_region
      _
    $region29: #{_fcnet_impl.1} parent=1 // pred_fallthru
      _
    // Predicated region
    $region30: #{_fcnet_impl.1} parent=1 // pred_check
      _
    $region31: #{_fcnet_impl.1} parent=1 // pred_check_branch
      %30 = sbr.rel (0) target = $region33
    $region32: #{_fcnet_impl.1} parent=1 // pred_region
      _
    $region33: #{_fcnet_impl.1} parent=1 // pred_fallthru
      _
    // Predicated region
    $region34: #{_fcnet_impl.1} parent=1 // pred_check
      _
    $region35: #{_fcnet_impl.1} parent=1 // pred_check_branch
      %32 = sbr.rel (0) target = $region37
    $region36: #{_fcnet_impl.1} parent=1 // pred_region
      _
    $region37: #{_fcnet_impl.1} parent=1 // pred_fallthru
      _
    %v33 = vld [vmem:[%s0] sm:$0xff]
    %v34 = vld [vmem:[%s0 + $0x8] sm:$0xff]
    %v35 = vld [vmem:[%s0 + $0x10] sm:$0xff]
    %v36 = vld [vmem:[%s0 + $0x18] sm:$0xff]
    %v37 = vld [vmem:[%s0 + $0x20] sm:$0xff]
    %v38 = vld [vmem:[%s0 + $0x28] sm:$0xff]
    %v39 = vld [vmem:[%s0 + $0x30] sm:$0xff]
    %v40 = vld [vmem:[%s1] sm:$0xff]
    %v41 = vld [vmem:[%s1 + $0x8] sm:$0xff]
    %v42 = vld [vmem:[%s1 + $0x10] sm:$0xff]
    %v43 = vld [vmem:[%s1 + $0x18] sm:$0xff]
    %v44 = vld [vmem:[%s1 + $0x20] sm:$0xff]
    %v45 = vld [vmem:[%s1 + $0x28] sm:$0xff]
    %v46 = vld [vmem:[%s1 + $0x30] sm:$0xff]
    %v47 = vld [vmem:[%s1 + $0x38] sm:$0xff]
    %v48 = vld [vmem:[%s1 + $0x40] sm:$0xff]
    %v49 = vld [vmem:[%s1 + $0x48] sm:$0xff]
    %v50 = vld [vmem:[%s1 + $0x50] sm:$0xff]
    %v51 = vld [vmem:[%s1 + $0x58] sm:$0xff]
    %v52 = vld [vmem:[%s1 + $0x60] sm:$0xff]
    %v53 = vld [vmem:[%s1 + $0x68] sm:$0xff]
    %v54 = vld [vmem:[%s1 + $0x70] sm:$0xff]
    %v55 = vld [vmem:[%s1 + $0x78] sm:$0xff]
    %v56 = vld [vmem:[%s1 + $0x80] sm:$0xff]
    %v57 = vld [vmem:[%s1 + $0x88] sm:$0xff]
    %v58 = vld [vmem:[%s1 + $0x90] sm:$0xff]
    %v59 = vld [vmem:[%s1 + $0x98] sm:$0xff]
    %v60 = vld [vmem:[%s1 + $0xa0] sm:$0xff]
    %v61 = vld [vmem:[%s1 + $0xa8] sm:$0xff]
    %v62 = vld [vmem:[%s1 + $0xb0] sm:$0xff]
    %v63 = vld [vmem:[%s1 + $0xb8] sm:$0xff]
    %v64 = vld [vmem:[%s1 + $0xc0] sm:$0xff]
    %v65 = vld [vmem:[%s1 + $0xc8] sm:$0xff]
    %v66 = vld [vmem:[%s1 + $0xd0] sm:$0xff]
    %v67 = vld [vmem:[%s1 + $0xd8] sm:$0xff]
    %v68 = vld [vmem:[%s1 + $0xe0] sm:$0xff]
    %v69 = vld [vmem:[%s1 + $0xe8] sm:$0xff]
    %v70 = vld [vmem:[%s1 + $0xf0] sm:$0xff]
    %v71 = vld [vmem:[%s1 + $0xf8] sm:$0xff]
    %v72 = vld [vmem:[%s1 + $0x100] sm:$0xff]
    %v73 = vld [vmem:[%s1 + $0x108] sm:$0xff]
    %v74 = vld [vmem:[%s1 + $0x110] sm:$0xff]
    %v75 = vld [vmem:[%s1 + $0x118] sm:$0xff]
    %v76 = vld [vmem:[%s1 + $0x120] sm:$0xff]
    %v77 = vld [vmem:[%s1 + $0x128] sm:$0xff]
    %v78 = vld [vmem:[%s1 + $0x130] sm:$0xff]
    %v79 = vld [vmem:[%s1 + $0x138] sm:$0xff]
    %v80 = vld [vmem:[%s1 + $0x140] sm:$0xff]
    %v81 = vld [vmem:[%s1 + $0x148] sm:$0xff]
    %v82 = vld [vmem:[%s1 + $0x150] sm:$0xff]
    %v83 = vld [vmem:[%s1 + $0x158] sm:$0xff]
    %v84 = vld [vmem:[%s1 + $0x160] sm:$0xff]
    %v85 = vld [vmem:[%s1 + $0x168] sm:$0xff]
    %v86 = vld [vmem:[%s1 + $0x170] sm:$0xff]
    %v87 = vld [vmem:[%s1 + $0x178] sm:$0xff]
    %v88 = vld [vmem:[%s1 + $0x180] sm:$0xff]
    %v89 = vld [vmem:[%s1 + $0x188] sm:$0xff]
    %v90 = vld [vmem:[%s1 + $0x190] sm:$0xff]
    %v91 = vld [vmem:[%s1 + $0x198] sm:$0xff]
    %v92 = vld [vmem:[%s1 + $0x1a0] sm:$0xff]
    %v93 = vld [vmem:[%s1 + $0x1a8] sm:$0xff]
    %v94 = vld [vmem:[%s1 + $0x1b0] sm:$0xff]
    %v95 = vld [vmem:[%s1 + $0x1b8] sm:$0xff]
    %v96 = vld [vmem:[%s1 + $0x1c0] sm:$0xff]
    %v97 = vld [vmem:[%s1 + $0x1c8] sm:$0xff]
    %v98 = vld [vmem:[%s1 + $0x1d0] sm:$0xff]
    %v99 = vld [vmem:[%s1 + $0x1d8] sm:$0xff]
    %v100 = vld [vmem:[%s1 + $0x1e0] sm:$0xff]
    %v101 = vld [vmem:[%s1 + $0x1e8] sm:$0xff]
    %v102 = vld [vmem:[%s1 + $0x1f0] sm:$0xff]
    %v103 = vld [vmem:[%s1 + $0x1f8] sm:$0xff]
    %v104 = vld [vmem:[%s1 + $0x200] sm:$0xff]
    %v105 = vld [vmem:[%s1 + $0x208] sm:$0xff]
    %v106 = vld [vmem:[%s1 + $0x210] sm:$0xff]
    %v107 = vld [vmem:[%s1 + $0x218] sm:$0xff]
    %v108 = vld [vmem:[%s1 + $0x220] sm:$0xff]
    %v109 = vld [vmem:[%s1 + $0x228] sm:$0xff]
    %v110 = vld [vmem:[%s1 + $0x230] sm:$0xff]
    %v111 = vld [vmem:[%s1 + $0x238] sm:$0xff]
    %v112 = vld [vmem:[%s1 + $0x240] sm:$0xff]
    %v113 = vld [vmem:[%s1 + $0x248] sm:$0xff]
    %v114 = vld [vmem:[%s1 + $0x250] sm:$0xff]
    %v115 = vld [vmem:[%s1 + $0x258] sm:$0xff]
    %v116 = vld [vmem:[%s1 + $0x260] sm:$0xff]
    %v117 = vld [vmem:[%s1 + $0x268] sm:$0xff]
    %v118 = vld [vmem:[%s1 + $0x270] sm:$0xff]
    %v119 = vld [vmem:[%s1 + $0x278] sm:$0xff]
    %v120 = vld [vmem:[%s1 + $0x280] sm:$0xff]
    %v121 = vld [vmem:[%s1 + $0x288] sm:$0xff]
    %v122 = vld [vmem:[%s1 + $0x290] sm:$0xff]
    %v123 = vld [vmem:[%s1 + $0x298] sm:$0xff]
    %v124 = vld [vmem:[%s1 + $0x2a0] sm:$0xff]
    %v125 = vld [vmem:[%s1 + $0x2a8] sm:$0xff]
    %v126 = vld [vmem:[%s1 + $0x2b0] sm:$0xff]
    %v127 = vld [vmem:[%s1 + $0x2b8] sm:$0xff]
    %v128 = vld [vmem:[%s1 + $0x2c0] sm:$0xff]
    %v129 = vld [vmem:[%s1 + $0x2c8] sm:$0xff]
    %v130 = vld [vmem:[%s1 + $0x2d0] sm:$0xff]
    %v131 = vld [vmem:[%s1 + $0x2d8] sm:$0xff]
    %v132 = vld [vmem:[%s1 + $0x2e0] sm:$0xff]
    %v133 = vld [vmem:[%s1 + $0x2e8] sm:$0xff]
    %v134 = vld [vmem:[%s1 + $0x2f0] sm:$0xff]
    %v135 = vld [vmem:[%s1 + $0x2f8] sm:$0xff]
    %v136 = vld [vmem:[%s1 + $0x300] sm:$0xff]
    %v137 = vld [vmem:[%s1 + $0x308] sm:$0xff]
    %v138 = vld [vmem:[%s1 + $0x310] sm:$0xff]
    %v139 = vld [vmem:[%s1 + $0x318] sm:$0xff]
    %v140 = vld [vmem:[%s1 + $0x320] sm:$0xff]
    %v141 = vld [vmem:[%s1 + $0x328] sm:$0xff]
    %v142 = vld [vmem:[%s1 + $0x330] sm:$0xff]
    %v143 = vld [vmem:[%s1 + $0x338] sm:$0xff]
    %v144 = vld [vmem:[%s1 + $0x340] sm:$0xff]
    %v145 = vld [vmem:[%s1 + $0x348] sm:$0xff]
    %v146 = vld [vmem:[%s1 + $0x350] sm:$0xff]
    %v147 = vld [vmem:[%s1 + $0x358] sm:$0xff]
    %v148 = vld [vmem:[%s1 + $0x360] sm:$0xff]
    %v149 = vld [vmem:[%s1 + $0x368] sm:$0xff]
    %v150 = vld [vmem:[%s1 + $0x370] sm:$0xff]
    %v151 = vld [vmem:[%s1 + $0x378] sm:$0xff]
    %v152 = vld [vmem:[%s1 + $0x380] sm:$0xff]
    %v153 = vld [vmem:[%s1 + $0x388] sm:$0xff]
    %v154 = vld [vmem:[%s1 + $0x390] sm:$0xff]
    %v155 = vld [vmem:[%s1 + $0x398] sm:$0xff]
    %v156 = vld [vmem:[%s1 + $0x3a0] sm:$0xff]
    %v157 = vld [vmem:[%s1 + $0x3a8] sm:$0xff]
    %v158 = vld [vmem:[%s1 + $0x3b0] sm:$0xff]
    %v159 = vld [vmem:[%s1 + $0x3b8] sm:$0xff]
    %v160 = vld [vmem:[%s1 + $0x3c0] sm:$0xff]
    %v161 = vld [vmem:[%s1 + $0x3c8] sm:$0xff]
    %v162 = vld [vmem:[%s1 + $0x3d0] sm:$0xff]
    %v163 = vld [vmem:[%s1 + $0x3d8] sm:$0xff]
    %v164 = vld [vmem:[%s1 + $0x3e0] sm:$0xff]
    %v165 = vld [vmem:[%s1 + $0x3e8] sm:$0xff]
    %v166 = vld [vmem:[%s1 + $0x3f0] sm:$0xff]
    %v167 = vld [vmem:[%s1 + $0x3f8] sm:$0xff]
    %v168 = vld [vmem:[%s1 + $0x400] sm:$0xff]
    %v169 = vld [vmem:[%s1 + $0x408] sm:$0xff]
    %v170 = vld [vmem:[%s1 + $0x410] sm:$0xff]
    %v171 = vld [vmem:[%s1 + $0x418] sm:$0xff]
    %v172 = vld [vmem:[%s1 + $0x420] sm:$0xff]
    %v173 = vld [vmem:[%s1 + $0x428] sm:$0xff]
    %v174 = vld [vmem:[%s1 + $0x430] sm:$0xff]
    %v175 = vld [vmem:[%s1 + $0x438] sm:$0xff]
    %v176 = vld [vmem:[%s1 + $0x440] sm:$0xff]
    %v177 = vld [vmem:[%s1 + $0x448] sm:$0xff]
    %v178 = vld [vmem:[%s1 + $0x450] sm:$0xff]
    %v179 = vld [vmem:[%s1 + $0x458] sm:$0xff]
    %v180 = vld [vmem:[%s1 + $0x460] sm:$0xff]
    %v181 = vld [vmem:[%s1 + $0x468] sm:$0xff]
    %v182 = vld [vmem:[%s1 + $0x470] sm:$0xff]
    %v183 = vld [vmem:[%s1 + $0x478] sm:$0xff]
    %v184 = vld [vmem:[%s1 + $0x480] sm:$0xff]
    %v185 = vld [vmem:[%s1 + $0x488] sm:$0xff]
    %v186 = vld [vmem:[%s1 + $0x490] sm:$0xff]
    %v187 = vld [vmem:[%s1 + $0x498] sm:$0xff]
    %v188 = vld [vmem:[%s1 + $0x4a0] sm:$0xff]
    %v189 = vld [vmem:[%s1 + $0x4a8] sm:$0xff]
    %v190 = vld [vmem:[%s1 + $0x4b0] sm:$0xff]
    %v191 = vld [vmem:[%s1 + $0x4b8] sm:$0xff]
    %v192 = vld [vmem:[%s1 + $0x4c0] sm:$0xff]
    %v193 = vld [vmem:[%s1 + $0x4c8] sm:$0xff]
    %v194 = vld [vmem:[%s1 + $0x4d0] sm:$0xff]
    %v195 = vld [vmem:[%s1 + $0x4d8] sm:$0xff]
    %v196 = vld [vmem:[%s1 + $0x4e0] sm:$0xff]
    %v197 = vld [vmem:[%s1 + $0x4e8] sm:$0xff]
    %v198 = vld [vmem:[%s1 + $0x4f0] sm:$0xff]
    %v199 = vld [vmem:[%s1 + $0x4f8] sm:$0xff]
    %v200 = vld [vmem:[%s1 + $0x500] sm:$0xff]
    %v201 = vld [vmem:[%s1 + $0x508] sm:$0xff]
    %v202 = vld [vmem:[%s1 + $0x510] sm:$0xff]
    %v203 = vld [vmem:[%s1 + $0x518] sm:$0xff]
    %v204 = vld [vmem:[%s1 + $0x520] sm:$0xff]
    %v205 = vld [vmem:[%s1 + $0x528] sm:$0xff]
    %v206 = vld [vmem:[%s1 + $0x530] sm:$0xff]
    %v207 = vld [vmem:[%s1 + $0x538] sm:$0xff]
    %v208 = vld [vmem:[%s1 + $0x540] sm:$0xff]
    %v209 = vld [vmem:[%s1 + $0x548] sm:$0xff]
    %v210 = vld [vmem:[%s1 + $0x550] sm:$0xff]
    %v211 = vld [vmem:[%s1 + $0x558] sm:$0xff]
    %v212 = vld [vmem:[%s1 + $0x560] sm:$0xff]
    %v213 = vld [vmem:[%s1 + $0x568] sm:$0xff]
    %v214 = vld [vmem:[%s1 + $0x570] sm:$0xff]
    %v215 = vld [vmem:[%s1 + $0x578] sm:$0xff]
    %v216 = vld [vmem:[%s1 + $0x580] sm:$0xff]
    %v217 = vld [vmem:[%s1 + $0x588] sm:$0xff]
    %v218 = vld [vmem:[%s1 + $0x590] sm:$0xff]
    %v219 = vld [vmem:[%s1 + $0x598] sm:$0xff]
    %v220 = vld [vmem:[%s1 + $0x5a0] sm:$0xff]
    %v221 = vld [vmem:[%s1 + $0x5a8] sm:$0xff]
    %v222 = vld [vmem:[%s1 + $0x5b0] sm:$0xff]
    %v223 = vld [vmem:[%s1 + $0x5b8] sm:$0xff]
    %v224 = vld [vmem:[%s1 + $0x5c0] sm:$0xff]
    %v225 = vld [vmem:[%s1 + $0x5c8] sm:$0xff]
    %v226 = vld [vmem:[%s1 + $0x5d0] sm:$0xff]
    %v227 = vld [vmem:[%s1 + $0x5d8] sm:$0xff]
    %v228 = vld [vmem:[%s1 + $0x5e0] sm:$0xff]
    %v229 = vld [vmem:[%s1 + $0x5e8] sm:$0xff]
    %v230 = vld [vmem:[%s1 + $0x5f0] sm:$0xff]
    %v231 = vld [vmem:[%s1 + $0x5f8] sm:$0xff]
    %v232 = vld [vmem:[%s1 + $0x600] sm:$0xff]
    %v233 = vld [vmem:[%s1 + $0x608] sm:$0xff]
    %v234 = vld [vmem:[%s1 + $0x610] sm:$0xff]
    %v235 = vld [vmem:[%s1 + $0x618] sm:$0xff]
    %v236 = vld [vmem:[%s1 + $0x620] sm:$0xff]
    %v237 = vld [vmem:[%s1 + $0x628] sm:$0xff]
    %v238 = vld [vmem:[%s1 + $0x630] sm:$0xff]
    %v239 = vld [vmem:[%s1 + $0x638] sm:$0xff]
    %v240 = vld [vmem:[%s1 + $0x640] sm:$0xff]
    %v241 = vld [vmem:[%s1 + $0x648] sm:$0xff]
    %v242 = vld [vmem:[%s1 + $0x650] sm:$0xff]
    %v243 = vld [vmem:[%s1 + $0x658] sm:$0xff]
    %v244 = vld [vmem:[%s1 + $0x660] sm:$0xff]
    %v245 = vld [vmem:[%s1 + $0x668] sm:$0xff]
    %v246 = vld [vmem:[%s1 + $0x670] sm:$0xff]
    %v247 = vld [vmem:[%s1 + $0x678] sm:$0xff]
    %v248 = vld [vmem:[%s1 + $0x680] sm:$0xff]
    %v249 = vld [vmem:[%s1 + $0x688] sm:$0xff]
    %v250 = vld [vmem:[%s1 + $0x690] sm:$0xff]
    %v251 = vld [vmem:[%s1 + $0x698] sm:$0xff]
    %v252 = vld [vmem:[%s1 + $0x6a0] sm:$0xff]
    %v253 = vld [vmem:[%s1 + $0x6a8] sm:$0xff]
    %v254 = vld [vmem:[%s1 + $0x6b0] sm:$0xff]
    %v255 = vld [vmem:[%s1 + $0x6b8] sm:$0xff]
    %v256 = vld [vmem:[%s1 + $0x6c0] sm:$0xff]
    %v257 = vld [vmem:[%s1 + $0x6c8] sm:$0xff]
    %v258 = vld [vmem:[%s1 + $0x6d0] sm:$0xff]
    %v259 = vld [vmem:[%s1 + $0x6d8] sm:$0xff]
    %v260 = vld [vmem:[%s1 + $0x6e0] sm:$0xff]
    %v261 = vld [vmem:[%s1 + $0x6e8] sm:$0xff]
    %v262 = vld [vmem:[%s1 + $0x6f0] sm:$0xff]
    %v263 = vld [vmem:[%s1 + $0x6f8] sm:$0xff]
    %v264 = vld [vmem:[%s1 + $0x700] sm:$0xff]
    %v265 = vld [vmem:[%s1 + $0x708] sm:$0xff]
    %v266 = vld [vmem:[%s1 + $0x710] sm:$0xff]
    %v267 = vld [vmem:[%s1 + $0x718] sm:$0xff]
    %v268 = vld [vmem:[%s1 + $0x720] sm:$0xff]
    %v269 = vld [vmem:[%s1 + $0x728] sm:$0xff]
    %v270 = vld [vmem:[%s1 + $0x730] sm:$0xff]
    %v271 = vld [vmem:[%s1 + $0x738] sm:$0xff]
    %v272 = vld [vmem:[%s1 + $0x740] sm:$0xff]
    %v273 = vld [vmem:[%s1 + $0x748] sm:$0xff]
    %v274 = vld [vmem:[%s1 + $0x750] sm:$0xff]
    %v275 = vld [vmem:[%s1 + $0x758] sm:$0xff]
    %v276 = vld [vmem:[%s1 + $0x760] sm:$0xff]
    %v277 = vld [vmem:[%s1 + $0x768] sm:$0xff]
    %v278 = vld [vmem:[%s1 + $0x770] sm:$0xff]
    %v279 = vld [vmem:[%s1 + $0x778] sm:$0xff]
    %v280 = vld [vmem:[%s1 + $0x780] sm:$0xff]
    %v281 = vld [vmem:[%s1 + $0x788] sm:$0xff]
    %v282 = vld [vmem:[%s1 + $0x790] sm:$0xff]
    %v283 = vld [vmem:[%s1 + $0x798] sm:$0xff]
    %v284 = vld [vmem:[%s1 + $0x7a0] sm:$0xff]
    %v285 = vld [vmem:[%s1 + $0x7a8] sm:$0xff]
    %v286 = vld [vmem:[%s1 + $0x7b0] sm:$0xff]
    %v287 = vld [vmem:[%s1 + $0x7b8] sm:$0xff]
    %v288 = vld [vmem:[%s1 + $0x7c0] sm:$0xff]
    %v289 = vld [vmem:[%s1 + $0x7c8] sm:$0xff]
    %v290 = vld [vmem:[%s1 + $0x7d0] sm:$0xff]
    %v291 = vld [vmem:[%s1 + $0x7d8] sm:$0xff]
    %v292 = vld [vmem:[%s1 + $0x7e0] sm:$0xff]
    %v293 = vld [vmem:[%s1 + $0x7e8] sm:$0xff]
    %v294 = vld [vmem:[%s1 + $0x7f0] sm:$0xff]
    %v295 = vld [vmem:[%s1 + $0x7f8] sm:$0xff]
    %v296 = vld [vmem:[%s1 + $0x800] sm:$0xff]
    %v297 = vld [vmem:[%s1 + $0x808] sm:$0xff]
    %v298 = vld [vmem:[%s1 + $0x810] sm:$0xff]
    %v299 = vld [vmem:[%s1 + $0x818] sm:$0xff]
    %v300 = vld [vmem:[%s1 + $0x820] sm:$0xff]
    %v301 = vld [vmem:[%s1 + $0x828] sm:$0xff]
    %v302 = vld [vmem:[%s1 + $0x830] sm:$0xff]
    %v303 = vld [vmem:[%s1 + $0x838] sm:$0xff]
    %v304 = vld [vmem:[%s1 + $0x840] sm:$0xff]
    %v305 = vld [vmem:[%s1 + $0x848] sm:$0xff]
    %v306 = vld [vmem:[%s1 + $0x850] sm:$0xff]
    %v307 = vld [vmem:[%s1 + $0x858] sm:$0xff]
    %v308 = vld [vmem:[%s1 + $0x860] sm:$0xff]
    %v309 = vld [vmem:[%s1 + $0x868] sm:$0xff]
    %v310 = vld [vmem:[%s1 + $0x870] sm:$0xff]
    %v311 = vld [vmem:[%s1 + $0x878] sm:$0xff]
    %v312 = vld [vmem:[%s1 + $0x880] sm:$0xff]
    %v313 = vld [vmem:[%s1 + $0x888] sm:$0xff]
    %v314 = vld [vmem:[%s1 + $0x890] sm:$0xff]
    %v315 = vld [vmem:[%s1 + $0x898] sm:$0xff]
    %v316 = vld [vmem:[%s1 + $0x8a0] sm:$0xff]
    %v317 = vld [vmem:[%s1 + $0x8a8] sm:$0xff]
    %v318 = vld [vmem:[%s1 + $0x8b0] sm:$0xff]
    %v319 = vld [vmem:[%s1 + $0x8b8] sm:$0xff]
    %v320 = vld [vmem:[%s1 + $0x8c0] sm:$0xff]
    %v321 = vld [vmem:[%s1 + $0x8c8] sm:$0xff]
    %v322 = vld [vmem:[%s1 + $0x8d0] sm:$0xff]
    %v323 = vld [vmem:[%s1 + $0x8d8] sm:$0xff]
    %v324 = vld [vmem:[%s1 + $0x8e0] sm:$0xff]
    %v325 = vld [vmem:[%s1 + $0x8e8] sm:$0xff]
    %v326 = vld [vmem:[%s1 + $0x8f0] sm:$0xff]
    %v327 = vld [vmem:[%s1 + $0x8f8] sm:$0xff]
    %v328 = vld [vmem:[%s1 + $0x900] sm:$0xff]
    %v329 = vld [vmem:[%s1 + $0x908] sm:$0xff]
    %v330 = vld [vmem:[%s1 + $0x910] sm:$0xff]
    %v331 = vld [vmem:[%s1 + $0x918] sm:$0xff]
    %v332 = vld [vmem:[%s1 + $0x920] sm:$0xff]
    %v333 = vld [vmem:[%s1 + $0x928] sm:$0xff]
    %v334 = vld [vmem:[%s1 + $0x930] sm:$0xff]
    %v335 = vld [vmem:[%s1 + $0x938] sm:$0xff]
    %v336 = vld [vmem:[%s1 + $0x940] sm:$0xff]
    %v337 = vld [vmem:[%s1 + $0x948] sm:$0xff]
    %v338 = vld [vmem:[%s1 + $0x950] sm:$0xff]
    %v339 = vld [vmem:[%s1 + $0x958] sm:$0xff]
    %v340 = vld [vmem:[%s1 + $0x960] sm:$0xff]
    %v341 = vld [vmem:[%s1 + $0x968] sm:$0xff]
    %v342 = vld [vmem:[%s1 + $0x970] sm:$0xff]
    %v343 = vld [vmem:[%s1 + $0x978] sm:$0xff]
    %v344 = vld [vmem:[%s1 + $0x980] sm:$0xff]
    %v345 = vld [vmem:[%s1 + $0x988] sm:$0xff]
    %v346 = vld [vmem:[%s1 + $0x990] sm:$0xff]
    %v347 = vld [vmem:[%s1 + $0x998] sm:$0xff]
    %v348 = vld [vmem:[%s1 + $0x9a0] sm:$0xff]
    %v349 = vld [vmem:[%s1 + $0x9a8] sm:$0xff]
    %v350 = vld [vmem:[%s1 + $0x9b0] sm:$0xff]
    %v351 = vld [vmem:[%s1 + $0x9b8] sm:$0xff]
    %v352 = vld [vmem:[%s1 + $0x9c0] sm:$0xff]
    %v353 = vld [vmem:[%s1 + $0x9c8] sm:$0xff]
    %v354 = vld [vmem:[%s1 + $0x9d0] sm:$0xff]
    %v355 = vld [vmem:[%s1 + $0x9d8] sm:$0xff]
    %v356 = vld [vmem:[%s1 + $0x9e0] sm:$0xff]
    %v357 = vld [vmem:[%s1 + $0x9e8] sm:$0xff]
    %v358 = vld [vmem:[%s1 + $0x9f0] sm:$0xff]
    %v359 = vld [vmem:[%s1 + $0x9f8] sm:$0xff]
    %v360 = vld [vmem:[%s1 + $0xa00] sm:$0xff]
    %v361 = vld [vmem:[%s1 + $0xa08] sm:$0xff]
    %v362 = vld [vmem:[%s1 + $0xa10] sm:$0xff]
    %v363 = vld [vmem:[%s1 + $0xa18] sm:$0xff]
    %v364 = vld [vmem:[%s1 + $0xa20] sm:$0xff]
    %v365 = vld [vmem:[%s1 + $0xa28] sm:$0xff]
    %v366 = vld [vmem:[%s1 + $0xa30] sm:$0xff]
    %v367 = vld [vmem:[%s1 + $0xa38] sm:$0xff]
    %v368 = vld [vmem:[%s1 + $0xa40] sm:$0xff]
    %v369 = vld [vmem:[%s1 + $0xa48] sm:$0xff]
    %v370 = vld [vmem:[%s1 + $0xa50] sm:$0xff]
    %v371 = vld [vmem:[%s1 + $0xa58] sm:$0xff]
    %v372 = vld [vmem:[%s1 + $0xa60] sm:$0xff]
    %v373 = vld [vmem:[%s1 + $0xa68] sm:$0xff]
    %v374 = vld [vmem:[%s1 + $0xa70] sm:$0xff]
    %v375 = vld [vmem:[%s1 + $0xa78] sm:$0xff]
    %v376 = vld [vmem:[%s1 + $0xa80] sm:$0xff]
    %v377 = vld [vmem:[%s1 + $0xa88] sm:$0xff]
    %v378 = vld [vmem:[%s1 + $0xa90] sm:$0xff]
    %v379 = vld [vmem:[%s1 + $0xa98] sm:$0xff]
    %v380 = vld [vmem:[%s1 + $0xaa0] sm:$0xff]
    %v381 = vld [vmem:[%s1 + $0xaa8] sm:$0xff]
    %v382 = vld [vmem:[%s1 + $0xab0] sm:$0xff]
    %v383 = vld [vmem:[%s1 + $0xab8] sm:$0xff]
    %v384 = vld [vmem:[%s1 + $0xac0] sm:$0xff]
    %v385 = vld [vmem:[%s1 + $0xac8] sm:$0xff]
    %v386 = vld [vmem:[%s1 + $0xad0] sm:$0xff]
    %v387 = vld [vmem:[%s1 + $0xad8] sm:$0xff]
    %v388 = vld [vmem:[%s1 + $0xae0] sm:$0xff]
    %v389 = vld [vmem:[%s1 + $0xae8] sm:$0xff]
    %v390 = vld [vmem:[%s1 + $0xaf0] sm:$0xff]
    %v391 = vld [vmem:[%s1 + $0xaf8] sm:$0xff]
    %v392 = vld [vmem:[%s1 + $0xb00] sm:$0xff]
    %v393 = vld [vmem:[%s1 + $0xb08] sm:$0xff]
    %v394 = vld [vmem:[%s1 + $0xb10] sm:$0xff]
    %v395 = vld [vmem:[%s1 + $0xb18] sm:$0xff]
    %v396 = vld [vmem:[%s1 + $0xb20] sm:$0xff]
    %v397 = vld [vmem:[%s1 + $0xb28] sm:$0xff]
    %v398 = vld [vmem:[%s1 + $0xb30] sm:$0xff]
    %v399 = vld [vmem:[%s1 + $0xb38] sm:$0xff]
    %v400 = vld [vmem:[%s1 + $0xb40] sm:$0xff]
    %v401 = vld [vmem:[%s1 + $0xb48] sm:$0xff]
    %v402 = vld [vmem:[%s1 + $0xb50] sm:$0xff]
    %v403 = vld [vmem:[%s1 + $0xb58] sm:$0xff]
    %v404 = vld [vmem:[%s1 + $0xb60] sm:$0xff]
    %v405 = vld [vmem:[%s1 + $0xb68] sm:$0xff]
    %v406 = vld [vmem:[%s1 + $0xb70] sm:$0xff]
    %v407 = vld [vmem:[%s1 + $0xb78] sm:$0xff]
    %v408 = vld [vmem:[%s1 + $0xb80] sm:$0xff]
    %v409 = vld [vmem:[%s1 + $0xb88] sm:$0xff]
    %v410 = vld [vmem:[%s1 + $0xb90] sm:$0xff]
    %v411 = vld [vmem:[%s1 + $0xb98] sm:$0xff]
    %v412 = vld [vmem:[%s1 + $0xba0] sm:$0xff]
    %v413 = vld [vmem:[%s1 + $0xba8] sm:$0xff]
    %v414 = vld [vmem:[%s1 + $0xbb0] sm:$0xff]
    %v415 = vld [vmem:[%s1 + $0xbb8] sm:$0xff]
    %v416 = vld [vmem:[%s1 + $0xbc0] sm:$0xff]
    %v417 = vld [vmem:[%s1 + $0xbc8] sm:$0xff]
    %v418 = vld [vmem:[%s1 + $0xbd0] sm:$0xff]
    %v419 = vld [vmem:[%s1 + $0xbd8] sm:$0xff]
    %v420 = vld [vmem:[%s1 + $0xbe0] sm:$0xff]
    %v421 = vld [vmem:[%s1 + $0xbe8] sm:$0xff]
    %v422 = vld [vmem:[%s1 + $0xbf0] sm:$0xff]
    %v423 = vld [vmem:[%s1 + $0xbf8] sm:$0xff]
    %v424 = vld [vmem:[%s1 + $0xc00] sm:$0xff]
    %v425 = vld [vmem:[%s1 + $0xc08] sm:$0xff]
    %v426 = vld [vmem:[%s1 + $0xc10] sm:$0xff]
    %v427 = vld [vmem:[%s1 + $0xc18] sm:$0xff]
    %v428 = vld [vmem:[%s1 + $0xc20] sm:$0xff]
    %v429 = vld [vmem:[%s1 + $0xc28] sm:$0xff]
    %v430 = vld [vmem:[%s1 + $0xc30] sm:$0xff]
    %v431 = vld [vmem:[%s1 + $0xc38] sm:$0xff]
    %v432 = vld [vmem:[%s1 + $0xc40] sm:$0xff]
    %v433 = vld [vmem:[%s1 + $0xc48] sm:$0xff]
    %v434 = vld [vmem:[%s1 + $0xc50] sm:$0xff]
    %v435 = vld [vmem:[%s1 + $0xc58] sm:$0xff]
    %v436 = vld [vmem:[%s1 + $0xc60] sm:$0xff]
    %v437 = vld [vmem:[%s1 + $0xc68] sm:$0xff]
    %v438 = vld [vmem:[%s1 + $0xc70] sm:$0xff]
    %v439 = vld [vmem:[%s1 + $0xc78] sm:$0xff]
    %v440 = vld [vmem:[%s1 + $0xc80] sm:$0xff]
    %v441 = vld [vmem:[%s1 + $0xc88] sm:$0xff]
    %v442 = vld [vmem:[%s1 + $0xc90] sm:$0xff]
    %v443 = vld [vmem:[%s1 + $0xc98] sm:$0xff]
    %v444 = vld [vmem:[%s1 + $0xca0] sm:$0xff]
    %v445 = vld [vmem:[%s1 + $0xca8] sm:$0xff]
    %v446 = vld [vmem:[%s1 + $0xcb0] sm:$0xff]
    %v447 = vld [vmem:[%s1 + $0xcb8] sm:$0xff]
    %v448 = vld [vmem:[%s1 + $0xcc0] sm:$0xff]
    %v449 = vld [vmem:[%s1 + $0xcc8] sm:$0xff]
    %v450 = vld [vmem:[%s1 + $0xcd0] sm:$0xff]
    %v451 = vld [vmem:[%s1 + $0xcd8] sm:$0xff]
    %v452 = vld [vmem:[%s1 + $0xce0] sm:$0xff]
    %v453 = vld [vmem:[%s1 + $0xce8] sm:$0xff]
    %v454 = vld [vmem:[%s1 + $0xcf0] sm:$0xff]
    %v455 = vld [vmem:[%s1 + $0xcf8] sm:$0xff]
    %v456 = vld [vmem:[%s1 + $0xd00] sm:$0xff]
    %v457 = vld [vmem:[%s1 + $0xd08] sm:$0xff]
    %v458 = vld [vmem:[%s1 + $0xd10] sm:$0xff]
    %v459 = vld [vmem:[%s1 + $0xd18] sm:$0xff]
    %v460 = vld [vmem:[%s1 + $0xd20] sm:$0xff]
    %v461 = vld [vmem:[%s1 + $0xd28] sm:$0xff]
    %v462 = vld [vmem:[%s1 + $0xd30] sm:$0xff]
    %v463 = vld [vmem:[%s1 + $0xd38] sm:$0xff]
    %v464 = vld [vmem:[%s1 + $0xd40] sm:$0xff]
    %v465 = vld [vmem:[%s1 + $0xd48] sm:$0xff]
    %v466 = vld [vmem:[%s1 + $0xd50] sm:$0xff]
    %v467 = vld [vmem:[%s1 + $0xd58] sm:$0xff]
    %v468 = vld [vmem:[%s1 + $0xd60] sm:$0xff]
    %v469 = vld [vmem:[%s1 + $0xd68] sm:$0xff]
    %v470 = vld [vmem:[%s1 + $0xd70] sm:$0xff]
    %v471 = vld [vmem:[%s1 + $0xd78] sm:$0xff]
    %v472 = vld [vmem:[%s1 + $0xd80] sm:$0xff]
    %v473 = vld [vmem:[%s1 + $0xd88] sm:$0xff]
    %v474 = vld [vmem:[%s1 + $0xd90] sm:$0xff]
    %v475 = vld [vmem:[%s1 + $0xd98] sm:$0xff]
    %v476 = vld [vmem:[%s1 + $0xda0] sm:$0xff]
    %v477 = vld [vmem:[%s1 + $0xda8] sm:$0xff]
    %v478 = vld [vmem:[%s1 + $0xdb0] sm:$0xff]
    %v479 = vld [vmem:[%s1 + $0xdb8] sm:$0xff]
    %v480 = vld [vmem:[%s1 + $0xdc0] sm:$0xff]
    %v481 = vld [vmem:[%s1 + $0xdc8] sm:$0xff]
    %v482 = vld [vmem:[%s1 + $0xdd0] sm:$0xff]
    %v483 = vld [vmem:[%s1 + $0xdd8] sm:$0xff]
    %v484 = vld [vmem:[%s1 + $0xde0] sm:$0xff]
    %v485 = vld [vmem:[%s1 + $0xde8] sm:$0xff]
    %v486 = vld [vmem:[%s1 + $0xdf0] sm:$0xff]
    %v487 = vld [vmem:[%s1 + $0xdf8] sm:$0xff]
    %v488 = vld [vmem:[%s1 + $0xe00] sm:$0xff]
    %v489 = vld [vmem:[%s1 + $0xe08] sm:$0xff]
    %v490 = vld [vmem:[%s1 + $0xe10] sm:$0xff]
    %v491 = vld [vmem:[%s1 + $0xe18] sm:$0xff]
    %v492 = vld [vmem:[%s1 + $0xe20] sm:$0xff]
    %v493 = vld [vmem:[%s1 + $0xe28] sm:$0xff]
    %v494 = vld [vmem:[%s1 + $0xe30] sm:$0xff]
    %v495 = vld [vmem:[%s1 + $0xe38] sm:$0xff]
    %v496 = vld [vmem:[%s1 + $0xe40] sm:$0xff]
    %v497 = vld [vmem:[%s1 + $0xe48] sm:$0xff]
    %v498 = vld [vmem:[%s1 + $0xe50] sm:$0xff]
    %v499 = vld [vmem:[%s1 + $0xe58] sm:$0xff]
    %v500 = vld [vmem:[%s1 + $0xe60] sm:$0xff]
    %v501 = vld [vmem:[%s1 + $0xe68] sm:$0xff]
    %v502 = vld [vmem:[%s1 + $0xe70] sm:$0xff]
    %v503 = vld [vmem:[%s1 + $0xe78] sm:$0xff]
    %v504 = vld [vmem:[%s1 + $0xe80] sm:$0xff]
    %v505 = vld [vmem:[%s1 + $0xe88] sm:$0xff]
    %v506 = vld [vmem:[%s1 + $0xe90] sm:$0xff]
    %v507 = vld [vmem:[%s1 + $0xe98] sm:$0xff]
    %v508 = vld [vmem:[%s1 + $0xea0] sm:$0xff]
    %v509 = vld [vmem:[%s1 + $0xea8] sm:$0xff]
    %v510 = vld [vmem:[%s1 + $0xeb0] sm:$0xff]
    %v511 = vld [vmem:[%s1 + $0xeb8] sm:$0xff]
    %v512 = vld [vmem:[%s1 + $0xec0] sm:$0xff]
    %v513 = vld [vmem:[%s1 + $0xec8] sm:$0xff]
    %v514 = vld [vmem:[%s1 + $0xed0] sm:$0xff]
    %v515 = vld [vmem:[%s1 + $0xed8] sm:$0xff]
    %v516 = vld [vmem:[%s1 + $0xee0] sm:$0xff]
    %v517 = vld [vmem:[%s1 + $0xee8] sm:$0xff]
    %v518 = vld [vmem:[%s1 + $0xef0] sm:$0xff]
    %v519 = vld [vmem:[%s1 + $0xef8] sm:$0xff]
    %v520 = vld [vmem:[%s1 + $0xf00] sm:$0xff]
    %v521 = vld [vmem:[%s1 + $0xf08] sm:$0xff]
    %v522 = vld [vmem:[%s1 + $0xf10] sm:$0xff]
    %v523 = vld [vmem:[%s1 + $0xf18] sm:$0xff]
    %v524 = vld [vmem:[%s1 + $0xf20] sm:$0xff]
    %v525 = vld [vmem:[%s1 + $0xf28] sm:$0xff]
    %v526 = vld [vmem:[%s1 + $0xf30] sm:$0xff]
    %v527 = vld [vmem:[%s1 + $0xf38] sm:$0xff]
    %v528 = vld [vmem:[%s1 + $0xf40] sm:$0xff]
    %v529 = vld [vmem:[%s1 + $0xf48] sm:$0xff]
    %v530 = vld [vmem:[%s1 + $0xf50] sm:$0xff]
    %v531 = vld [vmem:[%s1 + $0xf58] sm:$0xff]
    %v532 = vld [vmem:[%s1 + $0xf60] sm:$0xff]
    %v533 = vld [vmem:[%s1 + $0xf68] sm:$0xff]
    %v534 = vld [vmem:[%s1 + $0xf70] sm:$0xff]
    %v535 = vld [vmem:[%s1 + $0xf78] sm:$0xff]
    %v536 = vld [vmem:[%s1 + $0xf80] sm:$0xff]
    %v537 = vld [vmem:[%s1 + $0xf88] sm:$0xff]
    %v538 = vld [vmem:[%s1 + $0xf90] sm:$0xff]
    %v539 = vld [vmem:[%s1 + $0xf98] sm:$0xff]
    %v540 = vld [vmem:[%s1 + $0xfa0] sm:$0xff]
    %v541 = vld [vmem:[%s1 + $0xfa8] sm:$0xff]
    %v542 = vld [vmem:[%s1 + $0xfb0] sm:$0xff]
    %v543 = vld [vmem:[%s1 + $0xfb8] sm:$0xff]
    %v544 = vld [vmem:[%s1 + $0xfc0] sm:$0xff]
    %v545 = vld [vmem:[%s1 + $0xfc8] sm:$0xff]
    %v546 = vld [vmem:[%s1 + $0xfd0] sm:$0xff]
    %v547 = vld [vmem:[%s1 + $0xfd8] sm:$0xff]
    %v548 = vld [vmem:[%s1 + $0xfe0] sm:$0xff]
    %v549 = vld [vmem:[%s1 + $0xfe8] sm:$0xff]
    %v550 = vld [vmem:[%s1 + $0xff0] sm:$0xff]
    %v551 = vld [vmem:[%s1 + $0xff8] sm:$0xff]
    %v552 = vld [vmem:[%s1 + $0x1000] sm:$0xff]
    %v553 = vld [vmem:[%s1 + $0x1008] sm:$0xff]
    %v554 = vld [vmem:[%s1 + $0x1010] sm:$0xff]
    %v555 = vld [vmem:[%s1 + $0x1018] sm:$0xff]
    %v556 = vld [vmem:[%s1 + $0x1020] sm:$0xff]
    %v557 = vld [vmem:[%s1 + $0x1028] sm:$0xff]
    %v558 = vld [vmem:[%s1 + $0x1030] sm:$0xff]
    %v559 = vld [vmem:[%s1 + $0x1038] sm:$0xff]
    %v560 = vld [vmem:[%s1 + $0x1040] sm:$0xff]
    %v561 = vld [vmem:[%s1 + $0x1048] sm:$0xff]
    %v562 = vld [vmem:[%s1 + $0x1050] sm:$0xff]
    %v563 = vld [vmem:[%s1 + $0x1058] sm:$0xff]
    %v564 = vld [vmem:[%s1 + $0x1060] sm:$0xff]
    %v565 = vld [vmem:[%s1 + $0x1068] sm:$0xff]
    %v566 = vld [vmem:[%s1 + $0x1070] sm:$0xff]
    %v567 = vld [vmem:[%s1 + $0x1078] sm:$0xff]
    %v568 = vld [vmem:[%s1 + $0x1080] sm:$0xff]
    %v569 = vld [vmem:[%s1 + $0x1088] sm:$0xff]
    %v570 = vld [vmem:[%s1 + $0x1090] sm:$0xff]
    %v571 = vld [vmem:[%s1 + $0x1098] sm:$0xff]
    %v572 = vld [vmem:[%s1 + $0x10a0] sm:$0xff]
    %v573 = vld [vmem:[%s1 + $0x10a8] sm:$0xff]
    %v574 = vld [vmem:[%s1 + $0x10b0] sm:$0xff]
    %v575 = vld [vmem:[%s1 + $0x10b8] sm:$0xff]
    %v576 = vld [vmem:[%s1 + $0x10c0] sm:$0xff]
    %v577 = vld [vmem:[%s1 + $0x10c8] sm:$0xff]
    %v578 = vld [vmem:[%s1 + $0x10d0] sm:$0xff]
    %v579 = vld [vmem:[%s1 + $0x10d8] sm:$0xff]
    %v580 = vld [vmem:[%s1 + $0x10e0] sm:$0xff]
    %v581 = vld [vmem:[%s1 + $0x10e8] sm:$0xff]
    %v582 = vld [vmem:[%s1 + $0x10f0] sm:$0xff]
    %v583 = vld [vmem:[%s1 + $0x10f8] sm:$0xff]
    %v584 = vld [vmem:[%s1 + $0x1100] sm:$0xff]
    %v585 = vld [vmem:[%s1 + $0x1108] sm:$0xff]
    %v586 = vld [vmem:[%s1 + $0x1110] sm:$0xff]
    %v587 = vld [vmem:[%s1 + $0x1118] sm:$0xff]
    %v588 = vld [vmem:[%s1 + $0x1120] sm:$0xff]
    %v589 = vld [vmem:[%s1 + $0x1128] sm:$0xff]
    %v590 = vld [vmem:[%s1 + $0x1130] sm:$0xff]
    %v591 = vld [vmem:[%s1 + $0x1138] sm:$0xff]
    %v592 = vld [vmem:[%s1 + $0x1140] sm:$0xff]
    %v593 = vld [vmem:[%s1 + $0x1148] sm:$0xff]
    %v594 = vld [vmem:[%s1 + $0x1150] sm:$0xff]
    %v595 = vld [vmem:[%s1 + $0x1158] sm:$0xff]
    %v596 = vld [vmem:[%s1 + $0x1160] sm:$0xff]
    %v597 = vld [vmem:[%s1 + $0x1168] sm:$0xff]
    %v598 = vld [vmem:[%s1 + $0x1170] sm:$0xff]
    %v599 = vld [vmem:[%s1 + $0x1178] sm:$0xff]
    %v600 = vld [vmem:[%s1 + $0x1180] sm:$0xff]
    %v601 = vld [vmem:[%s1 + $0x1188] sm:$0xff]
    %v602 = vld [vmem:[%s1 + $0x1190] sm:$0xff]
    %v603 = vld [vmem:[%s1 + $0x1198] sm:$0xff]
    %v604 = vld [vmem:[%s1 + $0x11a0] sm:$0xff]
    %v605 = vld [vmem:[%s1 + $0x11a8] sm:$0xff]
    %v606 = vld [vmem:[%s1 + $0x11b0] sm:$0xff]
    %v607 = vld [vmem:[%s1 + $0x11b8] sm:$0xff]
    %v608 = vld [vmem:[%s1 + $0x11c0] sm:$0xff]
    %v609 = vld [vmem:[%s1 + $0x11c8] sm:$0xff]
    %v610 = vld [vmem:[%s1 + $0x11d0] sm:$0xff]
    %v611 = vld [vmem:[%s1 + $0x11d8] sm:$0xff]
    %v612 = vld [vmem:[%s1 + $0x11e0] sm:$0xff]
    %v613 = vld [vmem:[%s1 + $0x11e8] sm:$0xff]
    %v614 = vld [vmem:[%s1 + $0x11f0] sm:$0xff]
    %v615 = vld [vmem:[%s1 + $0x11f8] sm:$0xff]
    %v616 = vld [vmem:[%s1 + $0x1200] sm:$0xff]
    %v617 = vld [vmem:[%s1 + $0x1208] sm:$0xff]
    %v618 = vld [vmem:[%s1 + $0x1210] sm:$0xff]
    %v619 = vld [vmem:[%s1 + $0x1218] sm:$0xff]
    %v620 = vld [vmem:[%s1 + $0x1220] sm:$0xff]
    %v621 = vld [vmem:[%s1 + $0x1228] sm:$0xff]
    %v622 = vld [vmem:[%s1 + $0x1230] sm:$0xff]
    %v623 = vld [vmem:[%s1 + $0x1238] sm:$0xff]
    %v624 = vld [vmem:[%s1 + $0x1240] sm:$0xff]
    %v625 = vld [vmem:[%s1 + $0x1248] sm:$0xff]
    %v626 = vld [vmem:[%s1 + $0x1250] sm:$0xff]
    %v627 = vld [vmem:[%s1 + $0x1258] sm:$0xff]
    %v628 = vld [vmem:[%s1 + $0x1260] sm:$0xff]
    %v629 = vld [vmem:[%s1 + $0x1268] sm:$0xff]
    %v630 = vld [vmem:[%s1 + $0x1270] sm:$0xff]
    %v631 = vld [vmem:[%s1 + $0x1278] sm:$0xff]
    %v632 = vld [vmem:[%s1 + $0x1280] sm:$0xff]
    %v633 = vld [vmem:[%s1 + $0x1288] sm:$0xff]
    %v634 = vld [vmem:[%s1 + $0x1290] sm:$0xff]
    %v635 = vld [vmem:[%s1 + $0x1298] sm:$0xff]
    %v636 = vld [vmem:[%s1 + $0x12a0] sm:$0xff]
    %v637 = vld [vmem:[%s1 + $0x12a8] sm:$0xff]
    %v638 = vld [vmem:[%s1 + $0x12b0] sm:$0xff]
    %v639 = vld [vmem:[%s1 + $0x12b8] sm:$0xff]
    %v640 = vld [vmem:[%s1 + $0x12c0] sm:$0xff]
    %v641 = vld [vmem:[%s1 + $0x12c8] sm:$0xff]
    %v642 = vld [vmem:[%s1 + $0x12d0] sm:$0xff]
    %v643 = vld [vmem:[%s1 + $0x12d8] sm:$0xff]
    %v644 = vld [vmem:[%s1 + $0x12e0] sm:$0xff]
    %v645 = vld [vmem:[%s1 + $0x12e8] sm:$0xff]
    %v646 = vld [vmem:[%s1 + $0x12f0] sm:$0xff]
    %v647 = vld [vmem:[%s1 + $0x12f8] sm:$0xff]
    %v648 = vld [vmem:[%s1 + $0x1300] sm:$0xff]
    %v649 = vld [vmem:[%s1 + $0x1308] sm:$0xff]
    %v650 = vld [vmem:[%s1 + $0x1310] sm:$0xff]
    %v651 = vld [vmem:[%s1 + $0x1318] sm:$0xff]
    %v652 = vld [vmem:[%s1 + $0x1320] sm:$0xff]
    %v653 = vld [vmem:[%s1 + $0x1328] sm:$0xff]
    %v654 = vld [vmem:[%s1 + $0x1330] sm:$0xff]
    %v655 = vld [vmem:[%s1 + $0x1338] sm:$0xff]
    %v656 = vld [vmem:[%s1 + $0x1340] sm:$0xff]
    %v657 = vld [vmem:[%s1 + $0x1348] sm:$0xff]
    %v658 = vld [vmem:[%s1 + $0x1350] sm:$0xff]
    %v659 = vld [vmem:[%s1 + $0x1358] sm:$0xff]
    %v660 = vld [vmem:[%s1 + $0x1360] sm:$0xff]
    %v661 = vld [vmem:[%s1 + $0x1368] sm:$0xff]
    %v662 = vld [vmem:[%s1 + $0x1370] sm:$0xff]
    %v663 = vld [vmem:[%s1 + $0x1378] sm:$0xff]
    %v664 = vld [vmem:[%s1 + $0x1380] sm:$0xff]
    %v665 = vld [vmem:[%s1 + $0x1388] sm:$0xff]
    %v666 = vld [vmem:[%s1 + $0x1390] sm:$0xff]
    %v667 = vld [vmem:[%s1 + $0x1398] sm:$0xff]
    %v668 = vld [vmem:[%s1 + $0x13a0] sm:$0xff]
    %v669 = vld [vmem:[%s1 + $0x13a8] sm:$0xff]
    %v670 = vld [vmem:[%s1 + $0x13b0] sm:$0xff]
    %v671 = vld [vmem:[%s1 + $0x13b8] sm:$0xff]
    %v672 = vld [vmem:[%s1 + $0x13c0] sm:$0xff]
    %v673 = vld [vmem:[%s1 + $0x13c8] sm:$0xff]
    %v674 = vld [vmem:[%s1 + $0x13d0] sm:$0xff]
    %v675 = vld [vmem:[%s1 + $0x13d8] sm:$0xff]
    %v676 = vld [vmem:[%s1 + $0x13e0] sm:$0xff]
    %v677 = vld [vmem:[%s1 + $0x13e8] sm:$0xff]
    %v678 = vld [vmem:[%s1 + $0x13f0] sm:$0xff]
    %v679 = vld [vmem:[%s1 + $0x13f8] sm:$0xff]
    %v680 = vld [vmem:[%s1 + $0x1400] sm:$0xff]
    %v681 = vld [vmem:[%s1 + $0x1408] sm:$0xff]
    %v682 = vld [vmem:[%s1 + $0x1410] sm:$0xff]
    %v683 = vld [vmem:[%s1 + $0x1418] sm:$0xff]
    %v684 = vld [vmem:[%s1 + $0x1420] sm:$0xff]
    %v685 = vld [vmem:[%s1 + $0x1428] sm:$0xff]
    %v686 = vld [vmem:[%s1 + $0x1430] sm:$0xff]
    %v687 = vld [vmem:[%s1 + $0x1438] sm:$0xff]
    %v688 = vld [vmem:[%s1 + $0x1440] sm:$0xff]
    %v689 = vld [vmem:[%s1 + $0x1448] sm:$0xff]
    %v690 = vld [vmem:[%s1 + $0x1450] sm:$0xff]
    %v691 = vld [vmem:[%s1 + $0x1458] sm:$0xff]
    %v692 = vld [vmem:[%s1 + $0x1460] sm:$0xff]
    %v693 = vld [vmem:[%s1 + $0x1468] sm:$0xff]
    %v694 = vld [vmem:[%s1 + $0x1470] sm:$0xff]
    %v695 = vld [vmem:[%s1 + $0x1478] sm:$0xff]
    %v696 = vld [vmem:[%s1 + $0x1480] sm:$0xff]
    %v697 = vld [vmem:[%s1 + $0x1488] sm:$0xff]
    %v698 = vld [vmem:[%s1 + $0x1490] sm:$0xff]
    %v699 = vld [vmem:[%s1 + $0x1498] sm:$0xff]
    %v700 = vld [vmem:[%s1 + $0x14a0] sm:$0xff]
    %v701 = vld [vmem:[%s1 + $0x14a8] sm:$0xff]
    %v702 = vld [vmem:[%s1 + $0x14b0] sm:$0xff]
    %v703 = vld [vmem:[%s1 + $0x14b8] sm:$0xff]
    %v704 = vld [vmem:[%s1 + $0x14c0] sm:$0xff]
    %v705 = vld [vmem:[%s1 + $0x14c8] sm:$0xff]
    %v706 = vld [vmem:[%s1 + $0x14d0] sm:$0xff]
    %v707 = vld [vmem:[%s1 + $0x14d8] sm:$0xff]
    %v708 = vld [vmem:[%s1 + $0x14e0] sm:$0xff]
    %v709 = vld [vmem:[%s1 + $0x14e8] sm:$0xff]
    %v710 = vld [vmem:[%s1 + $0x14f0] sm:$0xff]
    %v711 = vld [vmem:[%s1 + $0x14f8] sm:$0xff]
    %v712 = vld [vmem:[%s1 + $0x1500] sm:$0xff]
    %v713 = vld [vmem:[%s1 + $0x1508] sm:$0xff]
    %v714 = vld [vmem:[%s1 + $0x1510] sm:$0xff]
    %v715 = vld [vmem:[%s1 + $0x1518] sm:$0xff]
    %v716 = vld [vmem:[%s1 + $0x1520] sm:$0xff]
    %v717 = vld [vmem:[%s1 + $0x1528] sm:$0xff]
    %v718 = vld [vmem:[%s1 + $0x1530] sm:$0xff]
    %v719 = vld [vmem:[%s1 + $0x1538] sm:$0xff]
    %v720 = vld [vmem:[%s1 + $0x1540] sm:$0xff]
    %v721 = vld [vmem:[%s1 + $0x1548] sm:$0xff]
    %v722 = vld [vmem:[%s1 + $0x1550] sm:$0xff]
    %v723 = vld [vmem:[%s1 + $0x1558] sm:$0xff]
    %v724 = vld [vmem:[%s1 + $0x1560] sm:$0xff]
    %v725 = vld [vmem:[%s1 + $0x1568] sm:$0xff]
    %v726 = vld [vmem:[%s1 + $0x1570] sm:$0xff]
    %v727 = vld [vmem:[%s1 + $0x1578] sm:$0xff]
    %v728 = vld [vmem:[%s1 + $0x1580] sm:$0xff]
    %v729 = vld [vmem:[%s1 + $0x1588] sm:$0xff]
    %v730 = vld [vmem:[%s1 + $0x1590] sm:$0xff]
    %v731 = vld [vmem:[%s1 + $0x1598] sm:$0xff]
    %v732 = vld [vmem:[%s1 + $0x15a0] sm:$0xff]
    %v733 = vld [vmem:[%s1 + $0x15a8] sm:$0xff]
    %v734 = vld [vmem:[%s1 + $0x15b0] sm:$0xff]
    %v735 = vld [vmem:[%s1 + $0x15b8] sm:$0xff]
    %v736 = vld [vmem:[%s1 + $0x15c0] sm:$0xff]
    %v737 = vld [vmem:[%s1 + $0x15c8] sm:$0xff]
    %v738 = vld [vmem:[%s1 + $0x15d0] sm:$0xff]
    %v739 = vld [vmem:[%s1 + $0x15d8] sm:$0xff]
    %v740 = vld [vmem:[%s1 + $0x15e0] sm:$0xff]
    %v741 = vld [vmem:[%s1 + $0x15e8] sm:$0xff]
    %v742 = vld [vmem:[%s1 + $0x15f0] sm:$0xff]
    %v743 = vld [vmem:[%s1 + $0x15f8] sm:$0xff]
    %v744 = vld [vmem:[%s1 + $0x1600] sm:$0xff]
    %v745 = vld [vmem:[%s1 + $0x1608] sm:$0xff]
    %v746 = vld [vmem:[%s1 + $0x1610] sm:$0xff]
    %v747 = vld [vmem:[%s1 + $0x1618] sm:$0xff]
    %v748 = vld [vmem:[%s1 + $0x1620] sm:$0xff]
    %v749 = vld [vmem:[%s1 + $0x1628] sm:$0xff]
    %v750 = vld [vmem:[%s1 + $0x1630] sm:$0xff]
    %v751 = vld [vmem:[%s1 + $0x1638] sm:$0xff]
    %v752 = vld [vmem:[%s1 + $0x1640] sm:$0xff]
    %v753 = vld [vmem:[%s1 + $0x1648] sm:$0xff]
    %v754 = vld [vmem:[%s1 + $0x1650] sm:$0xff]
    %v755 = vld [vmem:[%s1 + $0x1658] sm:$0xff]
    %v756 = vld [vmem:[%s1 + $0x1660] sm:$0xff]
    %v757 = vld [vmem:[%s1 + $0x1668] sm:$0xff]
    %v758 = vld [vmem:[%s1 + $0x1670] sm:$0xff]
    %v759 = vld [vmem:[%s1 + $0x1678] sm:$0xff]
    %v760 = vld [vmem:[%s1 + $0x1680] sm:$0xff]
    %v761 = vld [vmem:[%s1 + $0x1688] sm:$0xff]
    %v762 = vld [vmem:[%s1 + $0x1690] sm:$0xff]
    %v763 = vld [vmem:[%s1 + $0x1698] sm:$0xff]
    %v764 = vld [vmem:[%s1 + $0x16a0] sm:$0xff]
    %v765 = vld [vmem:[%s1 + $0x16a8] sm:$0xff]
    %v766 = vld [vmem:[%s1 + $0x16b0] sm:$0xff]
    %v767 = vld [vmem:[%s1 + $0x16b8] sm:$0xff]
    %v768 = vld [vmem:[%s1 + $0x16c0] sm:$0xff]
    %v769 = vld [vmem:[%s1 + $0x16c8] sm:$0xff]
    %v770 = vld [vmem:[%s1 + $0x16d0] sm:$0xff]
    %v771 = vld [vmem:[%s1 + $0x16d8] sm:$0xff]
    %v772 = vld [vmem:[%s1 + $0x16e0] sm:$0xff]
    %v773 = vld [vmem:[%s1 + $0x16e8] sm:$0xff]
    %v774 = vld [vmem:[%s1 + $0x16f0] sm:$0xff]
    %v775 = vld [vmem:[%s1 + $0x16f8] sm:$0xff]
    %v776 = vld [vmem:[%s1 + $0x1700] sm:$0xff]
    %v777 = vld [vmem:[%s1 + $0x1708] sm:$0xff]
    %v778 = vld [vmem:[%s1 + $0x1710] sm:$0xff]
    %v779 = vld [vmem:[%s1 + $0x1718] sm:$0xff]
    %v780 = vld [vmem:[%s1 + $0x1720] sm:$0xff]
    %v781 = vld [vmem:[%s1 + $0x1728] sm:$0xff]
    %v782 = vld [vmem:[%s1 + $0x1730] sm:$0xff]
    %v783 = vld [vmem:[%s1 + $0x1738] sm:$0xff]
    %v784 = vld [vmem:[%s1 + $0x1740] sm:$0xff]
    %v785 = vld [vmem:[%s1 + $0x1748] sm:$0xff]
    %v786 = vld [vmem:[%s1 + $0x1750] sm:$0xff]
    %v787 = vld [vmem:[%s1 + $0x1758] sm:$0xff]
    %v788 = vld [vmem:[%s1 + $0x1760] sm:$0xff]
    %v789 = vld [vmem:[%s1 + $0x1768] sm:$0xff]
    %v790 = vld [vmem:[%s1 + $0x1770] sm:$0xff]
    %v791 = vld [vmem:[%s1 + $0x1778] sm:$0xff]
    %v792 = vld [vmem:[%s1 + $0x1780] sm:$0xff]
    %v793 = vld [vmem:[%s1 + $0x1788] sm:$0xff]
    %v794 = vld [vmem:[%s1 + $0x1790] sm:$0xff]
    %v795 = vld [vmem:[%s1 + $0x1798] sm:$0xff]
    %v796 = vld [vmem:[%s1 + $0x17a0] sm:$0xff]
    %v797 = vld [vmem:[%s1 + $0x17a8] sm:$0xff]
    %v798 = vld [vmem:[%s1 + $0x17b0] sm:$0xff]
    %v799 = vld [vmem:[%s1 + $0x17b8] sm:$0xff]
    %v800 = vld [vmem:[%s1 + $0x17c0] sm:$0xff]
    %v801 = vld [vmem:[%s1 + $0x17c8] sm:$0xff]
    %v802 = vld [vmem:[%s1 + $0x17d0] sm:$0xff]
    %v803 = vld [vmem:[%s1 + $0x17d8] sm:$0xff]
    %v804 = vld [vmem:[%s1 + $0x17e0] sm:$0xff]
    %v805 = vld [vmem:[%s1 + $0x17e8] sm:$0xff]
    %v806 = vld [vmem:[%s1 + $0x17f0] sm:$0xff]
    %v807 = vld [vmem:[%s1 + $0x17f8] sm:$0xff]
    %v808 = vld [vmem:[%s1 + $0x1800] sm:$0xff]
    %v809 = vld [vmem:[%s1 + $0x1808] sm:$0xff]
    %v810 = vld [vmem:[%s1 + $0x1810] sm:$0xff]
    %v811 = vld [vmem:[%s1 + $0x1818] sm:$0xff]
    %v812 = vld [vmem:[%s1 + $0x1820] sm:$0xff]
    %v813 = vld [vmem:[%s1 + $0x1828] sm:$0xff]
    %v814 = vld [vmem:[%s1 + $0x1830] sm:$0xff]
    %v815 = vld [vmem:[%s1 + $0x1838] sm:$0xff]
    %v816 = vld [vmem:[%s1 + $0x1840] sm:$0xff]
    %v817 = vld [vmem:[%s1 + $0x1848] sm:$0xff]
    %v818 = vld [vmem:[%s1 + $0x1850] sm:$0xff]
    %v819 = vld [vmem:[%s1 + $0x1858] sm:$0xff]
    %v820 = vld [vmem:[%s1 + $0x1860] sm:$0xff]
    %v821 = vld [vmem:[%s1 + $0x1868] sm:$0xff]
    %v822 = vld [vmem:[%s1 + $0x1870] sm:$0xff]
    %v823 = vld [vmem:[%s1 + $0x1878] sm:$0xff]
    %v824 = vld [vmem:[%s1 + $0x1880] sm:$0xff]
    %v825 = vld [vmem:[%s1 + $0x1888] sm:$0xff]
    %v826 = vld [vmem:[%s1 + $0x1890] sm:$0xff]
    %v827 = vld [vmem:[%s1 + $0x1898] sm:$0xff]
    %v828 = vld [vmem:[%s1 + $0x18a0] sm:$0xff]
    %v829 = vld [vmem:[%s1 + $0x18a8] sm:$0xff]
    %v830 = vld [vmem:[%s1 + $0x18b0] sm:$0xff]
    %v831 = vld [vmem:[%s1 + $0x18b8] sm:$0xff]
    %v832 = vld [vmem:[%s1 + $0x18c0] sm:$0xff]
    %v833 = vld [vmem:[%s1 + $0x18c8] sm:$0xff]
    %v834 = vld [vmem:[%s1 + $0x18d0] sm:$0xff]
    %v835 = vld [vmem:[%s1 + $0x18d8] sm:$0xff]
    %v836 = vld [vmem:[%s1 + $0x18e0] sm:$0xff]
    %v837 = vld [vmem:[%s1 + $0x18e8] sm:$0xff]
    %v838 = vld [vmem:[%s1 + $0x18f0] sm:$0xff]
    %v839 = vld [vmem:[%s1 + $0x18f8] sm:$0xff]
    %v840 = vld [vmem:[%s1 + $0x1900] sm:$0xff]
    %v841 = vld [vmem:[%s1 + $0x1908] sm:$0xff]
    %v842 = vld [vmem:[%s1 + $0x1910] sm:$0xff]
    %v843 = vld [vmem:[%s1 + $0x1918] sm:$0xff]
    %v844 = vld [vmem:[%s1 + $0x1920] sm:$0xff]
    %v845 = vld [vmem:[%s1 + $0x1928] sm:$0xff]
    %v846 = vld [vmem:[%s1 + $0x1930] sm:$0xff]
    %v847 = vld [vmem:[%s1 + $0x1938] sm:$0xff]
    %v848 = vld [vmem:[%s1 + $0x1940] sm:$0xff]
    %v849 = vld [vmem:[%s1 + $0x1948] sm:$0xff]
    %v850 = vld [vmem:[%s1 + $0x1950] sm:$0xff]
    %v851 = vld [vmem:[%s1 + $0x1958] sm:$0xff]
    %v852 = vld [vmem:[%s1 + $0x1960] sm:$0xff]
    %v853 = vld [vmem:[%s1 + $0x1968] sm:$0xff]
    %v854 = vld [vmem:[%s1 + $0x1970] sm:$0xff]
    %v855 = vld [vmem:[%s1 + $0x1978] sm:$0xff]
    %v856 = vld [vmem:[%s1 + $0x1980] sm:$0xff]
    %v857 = vld [vmem:[%s1 + $0x1988] sm:$0xff]
    %v858 = vld [vmem:[%s1 + $0x1990] sm:$0xff]
    %v859 = vld [vmem:[%s1 + $0x1998] sm:$0xff]
    %v860 = vld [vmem:[%s1 + $0x19a0] sm:$0xff]
    %v861 = vld [vmem:[%s1 + $0x19a8] sm:$0xff]
    %v862 = vld [vmem:[%s1 + $0x19b0] sm:$0xff]
    %v863 = vld [vmem:[%s1 + $0x19b8] sm:$0xff]
    %v864 = vld [vmem:[%s1 + $0x19c0] sm:$0xff]
    %v865 = vld [vmem:[%s1 + $0x19c8] sm:$0xff]
    %v866 = vld [vmem:[%s1 + $0x19d0] sm:$0xff]
    %v867 = vld [vmem:[%s1 + $0x19d8] sm:$0xff]
    %v868 = vld [vmem:[%s1 + $0x19e0] sm:$0xff]
    %v869 = vld [vmem:[%s1 + $0x19e8] sm:$0xff]
    %v870 = vld [vmem:[%s1 + $0x19f0] sm:$0xff]
    %v871 = vld [vmem:[%s1 + $0x19f8] sm:$0xff]
    %v872 = vld [vmem:[%s1 + $0x1a00] sm:$0xff]
    %v873 = vld [vmem:[%s1 + $0x1a08] sm:$0xff]
    %v874 = vld [vmem:[%s1 + $0x1a10] sm:$0xff]
    %v875 = vld [vmem:[%s1 + $0x1a18] sm:$0xff]
    %v876 = vld [vmem:[%s1 + $0x1a20] sm:$0xff]
    %v877 = vld [vmem:[%s1 + $0x1a28] sm:$0xff]
    %v878 = vld [vmem:[%s1 + $0x1a30] sm:$0xff]
    %v879 = vld [vmem:[%s1 + $0x1a38] sm:$0xff]
    %v880 = vld [vmem:[%s1 + $0x1a40] sm:$0xff]
    %v881 = vld [vmem:[%s1 + $0x1a48] sm:$0xff]
    %v882 = vld [vmem:[%s1 + $0x1a50] sm:$0xff]
    %v883 = vld [vmem:[%s1 + $0x1a58] sm:$0xff]
    %v884 = vld [vmem:[%s1 + $0x1a60] sm:$0xff]
    %v885 = vld [vmem:[%s1 + $0x1a68] sm:$0xff]
    %v886 = vld [vmem:[%s1 + $0x1a70] sm:$0xff]
    %v887 = vld [vmem:[%s1 + $0x1a78] sm:$0xff]
    %v888 = vld [vmem:[%s1 + $0x1a80] sm:$0xff]
    %v889 = vld [vmem:[%s1 + $0x1a88] sm:$0xff]
    %v890 = vld [vmem:[%s1 + $0x1a90] sm:$0xff]
    %v891 = vld [vmem:[%s1 + $0x1a98] sm:$0xff]
    %v892 = vld [vmem:[%s1 + $0x1aa0] sm:$0xff]
    %v893 = vld [vmem:[%s1 + $0x1aa8] sm:$0xff]
    %v894 = vld [vmem:[%s1 + $0x1ab0] sm:$0xff]
    %v895 = vld [vmem:[%s1 + $0x1ab8] sm:$0xff]
    %v896 = vld [vmem:[%s1 + $0x1ac0] sm:$0xff]
    %v897 = vld [vmem:[%s1 + $0x1ac8] sm:$0xff]
    %v898 = vld [vmem:[%s1 + $0x1ad0] sm:$0xff]
    %v899 = vld [vmem:[%s1 + $0x1ad8] sm:$0xff]
    %v900 = vld [vmem:[%s1 + $0x1ae0] sm:$0xff]
    %v901 = vld [vmem:[%s1 + $0x1ae8] sm:$0xff]
    %v902 = vld [vmem:[%s1 + $0x1af0] sm:$0xff]
    %v903 = vld [vmem:[%s1 + $0x1af8] sm:$0xff]
    %v904 = vld [vmem:[%s1 + $0x1b00] sm:$0xff]
    %v905 = vld [vmem:[%s1 + $0x1b08] sm:$0xff]
    %v906 = vld [vmem:[%s1 + $0x1b10] sm:$0xff]
    %v907 = vld [vmem:[%s1 + $0x1b18] sm:$0xff]
    %v908 = vld [vmem:[%s1 + $0x1b20] sm:$0xff]
    %v909 = vld [vmem:[%s1 + $0x1b28] sm:$0xff]
    %v910 = vld [vmem:[%s1 + $0x1b30] sm:$0xff]
    %v911 = vld [vmem:[%s1 + $0x1b38] sm:$0xff]
    %v912 = vld [vmem:[%s1 + $0x1b40] sm:$0xff]
    %v913 = vld [vmem:[%s1 + $0x1b48] sm:$0xff]
    %v914 = vld [vmem:[%s1 + $0x1b50] sm:$0xff]
    %v915 = vld [vmem:[%s1 + $0x1b58] sm:$0xff]
    %v916 = vld [vmem:[%s1 + $0x1b60] sm:$0xff]
    %v917 = vld [vmem:[%s1 + $0x1b68] sm:$0xff]
    %v918 = vld [vmem:[%s1 + $0x1b70] sm:$0xff]
    %v919 = vld [vmem:[%s1 + $0x1b78] sm:$0xff]
    %v920 = vld [vmem:[%s1 + $0x1b80] sm:$0xff]
    %v921 = vld [vmem:[%s1 + $0x1b88] sm:$0xff]
    %v922 = vld [vmem:[%s1 + $0x1b90] sm:$0xff]
    %v923 = vld [vmem:[%s1 + $0x1b98] sm:$0xff]
    %v924 = vld [vmem:[%s1 + $0x1ba0] sm:$0xff]
    %v925 = vld [vmem:[%s1 + $0x1ba8] sm:$0xff]
    %v926 = vld [vmem:[%s1 + $0x1bb0] sm:$0xff]
    %v927 = vld [vmem:[%s1 + $0x1bb8] sm:$0xff]
    %v928 = vld [vmem:[%s1 + $0x1bc0] sm:$0xff]
    %v929 = vld [vmem:[%s1 + $0x1bc8] sm:$0xff]
    %v930 = vld [vmem:[%s1 + $0x1bd0] sm:$0xff]
    %v931 = vld [vmem:[%s1 + $0x1bd8] sm:$0xff]
    %v932 = vld [vmem:[%s1 + $0x1be0] sm:$0xff]
    %v933 = vld [vmem:[%s1 + $0x1be8] sm:$0xff]
    %v934 = vld [vmem:[%s1 + $0x1bf0] sm:$0xff]
    %v935 = vld [vmem:[%s1 + $0x1bf8] sm:$0xff]
    %v936 = vld [vmem:[%s2] sm:$0xff]
    %v938 = vperm.slane %v936, 0
    %v939 = vperm.slane %v936, 1
    %v940 = vperm.slane %v936, 2
    %v941 = vperm.slane %v936, 3
    %v942 = vperm.slane %v936, 4
    %v943 = vperm.slane %v936, 5
    %v944 = vperm.slane %v936, 6
    %v945 = vperm.slane %v936, 7
    %954 = vmatpush.msra.mxu0 %v160
    %955 = vmatpush.msra.mxu0 %v152
    %956 = vmatpush.msra.mxu0 %v144
    %957 = vmatpush.msra.mxu0 %v136
    %958 = vmatpush.msra.mxu0 %v128
    %959 = vmatpush.msra.mxu0 %v120
    %960 = vmatpush.msra.mxu0 %v112
    %961 = vmatpush.msra.mxu0 %v104
    %962 = vmatpush.msra.mxu0 %v96
    %963 = vmatpush.msra.mxu0 %v88
    %964 = vmatpush.msra.mxu0 %v80
    %965 = vmatpush.msra.mxu0 %v72
    %966 = vmatpush.msra.mxu0 %v64
    %967 = vmatpush.msra.mxu0 %v56
    %968 = vmatpush.msra.mxu0 %v48
    %969 = vmatpush.msra.mxu0 %v40
    %970 = vmatmul.f32.gmra.mxu0 %v33
    %v971 = vpop.f32.mrf.mxu0
    %v972 = vadd.f32 %v938, %v971
    %973 = vdwg.mxu0
    %974 = vmatpush.msra.mxu0 %v288
    %975 = vmatpush.msra.mxu0 %v280
    %976 = vmatpush.msra.mxu0 %v272
    %977 = vmatpush.msra.mxu0 %v264
    %978 = vmatpush.msra.mxu0 %v256
    %979 = vmatpush.msra.mxu0 %v248
    %980 = vmatpush.msra.mxu0 %v240
    %981 = vmatpush.msra.mxu0 %v232
    %982 = vmatpush.msra.mxu0 %v224
    %983 = vmatpush.msra.mxu0 %v216
    %984 = vmatpush.msra.mxu0 %v208
    %985 = vmatpush.msra.mxu0 %v200
    %986 = vmatpush.msra.mxu0 %v192
    %987 = vmatpush.msra.mxu0 %v184
    %988 = vmatpush.msra.mxu0 %v176
    %989 = vmatpush.msra.mxu0 %v168
    %990 = vmatmul.f32.gmra.mxu0 %v34
    %v991 = vpop.f32.mrf.mxu0
    %v992 = vadd.f32 %v972, %v991
    %993 = vdwg.mxu0
    %994 = vmatpush.msra.mxu0 %v416
    %995 = vmatpush.msra.mxu0 %v408
    %996 = vmatpush.msra.mxu0 %v400
    %997 = vmatpush.msra.mxu0 %v392
    %998 = vmatpush.msra.mxu0 %v384
    %999 = vmatpush.msra.mxu0 %v376
    %1000 = vmatpush.msra.mxu0 %v368
    %1001 = vmatpush.msra.mxu0 %v360
    %1002 = vmatpush.msra.mxu0 %v352
    %1003 = vmatpush.msra.mxu0 %v344
    %1004 = vmatpush.msra.mxu0 %v336
    %1005 = vmatpush.msra.mxu0 %v328
    %1006 = vmatpush.msra.mxu0 %v320
    %1007 = vmatpush.msra.mxu0 %v312
    %1008 = vmatpush.msra.mxu0 %v304
    %1009 = vmatpush.msra.mxu0 %v296
    %1010 = vmatmul.f32.gmra.mxu0 %v35
    %v1011 = vpop.f32.mrf.mxu0
    %v1012 = vadd.f32 %v992, %v1011
    %1013 = vdwg.mxu0
    %1014 = vmatpush.msra.mxu0 %v544
    %1015 = vmatpush.msra.mxu0 %v536
    %1016 = vmatpush.msra.mxu0 %v528
    %1017 = vmatpush.msra.mxu0 %v520
    %1018 = vmatpush.msra.mxu0 %v512
    %1019 = vmatpush.msra.mxu0 %v504
    %1020 = vmatpush.msra.mxu0 %v496
    %1021 = vmatpush.msra.mxu0 %v488
    %1022 = vmatpush.msra.mxu0 %v480
    %1023 = vmatpush.msra.mxu0 %v472
    %1024 = vmatpush.msra.mxu0 %v464
    %1025 = vmatpush.msra.mxu0 %v456
    %1026 = vmatpush.msra.mxu0 %v448
    %1027 = vmatpush.msra.mxu0 %v440
    %1028 = vmatpush.msra.mxu0 %v432
    %1029 = vmatpush.msra.mxu0 %v424
    %1030 = vmatmul.f32.gmra.mxu0 %v36
    %v1031 = vpop.f32.mrf.mxu0
    %v1032 = vadd.f32 %v1012, %v1031
    %1033 = vdwg.mxu0
    %1034 = vmatpush.msra.mxu0 %v672
    %1035 = vmatpush.msra.mxu0 %v664
    %1036 = vmatpush.msra.mxu0 %v656
    %1037 = vmatpush.msra.mxu0 %v648
    %1038 = vmatpush.msra.mxu0 %v640
    %1039 = vmatpush.msra.mxu0 %v632
    %1040 = vmatpush.msra.mxu0 %v624
    %1041 = vmatpush.msra.mxu0 %v616
    %1042 = vmatpush.msra.mxu0 %v608
    %1043 = vmatpush.msra.mxu0 %v600
    %1044 = vmatpush.msra.mxu0 %v592
    %1045 = vmatpush.msra.mxu0 %v584
    %1046 = vmatpush.msra.mxu0 %v576
    %1047 = vmatpush.msra.mxu0 %v568
    %1048 = vmatpush.msra.mxu0 %v560
    %1049 = vmatpush.msra.mxu0 %v552
    %1050 = vmatmul.f32.gmra.mxu0 %v37
    %v1051 = vpop.f32.mrf.mxu0
    %v1052 = vadd.f32 %v1032, %v1051
    %1053 = vdwg.mxu0
    %1054 = vmatpush.msra.mxu0 %v800
    %1055 = vmatpush.msra.mxu0 %v792
    %1056 = vmatpush.msra.mxu0 %v784
    %1057 = vmatpush.msra.mxu0 %v776
    %1058 = vmatpush.msra.mxu0 %v768
    %1059 = vmatpush.msra.mxu0 %v760
    %1060 = vmatpush.msra.mxu0 %v752
    %1061 = vmatpush.msra.mxu0 %v744
    %1062 = vmatpush.msra.mxu0 %v736
    %1063 = vmatpush.msra.mxu0 %v728
    %1064 = vmatpush.msra.mxu0 %v720
    %1065 = vmatpush.msra.mxu0 %v712
    %1066 = vmatpush.msra.mxu0 %v704
    %1067 = vmatpush.msra.mxu0 %v696
    %1068 = vmatpush.msra.mxu0 %v688
    %1069 = vmatpush.msra.mxu0 %v680
    %1070 = vmatmul.f32.gmra.mxu0 %v38
    %v1071 = vpop.f32.mrf.mxu0
    %v1072 = vadd.f32 %v1052, %v1071
    %1073 = vdwg.mxu0
    %1074 = vmatpush.msra.mxu0 %v928
    %1075 = vmatpush.msra.mxu0 %v920
    %1076 = vmatpush.msra.mxu0 %v912
    %1077 = vmatpush.msra.mxu0 %v904
    %1078 = vmatpush.msra.mxu0 %v896
    %1079 = vmatpush.msra.mxu0 %v888
    %1080 = vmatpush.msra.mxu0 %v880
    %1081 = vmatpush.msra.mxu0 %v872
    %1082 = vmatpush.msra.mxu0 %v864
    %1083 = vmatpush.msra.mxu0 %v856
    %1084 = vmatpush.msra.mxu0 %v848
    %1085 = vmatpush.msra.mxu0 %v840
    %1086 = vmatpush.msra.mxu0 %v832
    %1087 = vmatpush.msra.mxu0 %v824
    %1088 = vmatpush.msra.mxu0 %v816
    %1089 = vmatpush.msra.mxu0 %v808
    %1090 = vmatmul.f32.gmra.mxu0 %v39
    %v1091 = vpop.f32.mrf.mxu0
    %v1092 = vadd.f32 %v1072, %v1091
    %1093 = vdwg.mxu0
    %1094 = vmatpush.msra.mxu0 %v161
    %1095 = vmatpush.msra.mxu0 %v153
    %1096 = vmatpush.msra.mxu0 %v145
    %1097 = vmatpush.msra.mxu0 %v137
    %1098 = vmatpush.msra.mxu0 %v129
    %1099 = vmatpush.msra.mxu0 %v121
    %1100 = vmatpush.msra.mxu0 %v113
    %1101 = vmatpush.msra.mxu0 %v105
    %1102 = vmatpush.msra.mxu0 %v97
    %1103 = vmatpush.msra.mxu0 %v89
    %1104 = vmatpush.msra.mxu0 %v81
    %1105 = vmatpush.msra.mxu0 %v73
    %1106 = vmatpush.msra.mxu0 %v65
    %1107 = vmatpush.msra.mxu0 %v57
    %1108 = vmatpush.msra.mxu0 %v49
    %1109 = vmatpush.msra.mxu0 %v41
    %1110 = vmatmul.f32.gmra.mxu0 %v33
    %v1111 = vpop.f32.mrf.mxu0
    %v1112 = vadd.f32 %v939, %v1111
    %1113 = vdwg.mxu0
    %1114 = vmatpush.msra.mxu0 %v289
    %1115 = vmatpush.msra.mxu0 %v281
    %1116 = vmatpush.msra.mxu0 %v273
    %1117 = vmatpush.msra.mxu0 %v265
    %1118 = vmatpush.msra.mxu0 %v257
    %1119 = vmatpush.msra.mxu0 %v249
    %1120 = vmatpush.msra.mxu0 %v241
    %1121 = vmatpush.msra.mxu0 %v233
    %1122 = vmatpush.msra.mxu0 %v225
    %1123 = vmatpush.msra.mxu0 %v217
    %1124 = vmatpush.msra.mxu0 %v209
    %1125 = vmatpush.msra.mxu0 %v201
    %1126 = vmatpush.msra.mxu0 %v193
    %1127 = vmatpush.msra.mxu0 %v185
    %1128 = vmatpush.msra.mxu0 %v177
    %1129 = vmatpush.msra.mxu0 %v169
    %1130 = vmatmul.f32.gmra.mxu0 %v34
    %v1131 = vpop.f32.mrf.mxu0
    %v1132 = vadd.f32 %v1112, %v1131
    %1133 = vdwg.mxu0
    %1134 = vmatpush.msra.mxu0 %v417
    %1135 = vmatpush.msra.mxu0 %v409
    %1136 = vmatpush.msra.mxu0 %v401
    %1137 = vmatpush.msra.mxu0 %v393
    %1138 = vmatpush.msra.mxu0 %v385
    %1139 = vmatpush.msra.mxu0 %v377
    %1140 = vmatpush.msra.mxu0 %v369
    %1141 = vmatpush.msra.mxu0 %v361
    %1142 = vmatpush.msra.mxu0 %v353
    %1143 = vmatpush.msra.mxu0 %v345
    %1144 = vmatpush.msra.mxu0 %v337
    %1145 = vmatpush.msra.mxu0 %v329
    %1146 = vmatpush.msra.mxu0 %v321
    %1147 = vmatpush.msra.mxu0 %v313
    %1148 = vmatpush.msra.mxu0 %v305
    %1149 = vmatpush.msra.mxu0 %v297
    %1150 = vmatmul.f32.gmra.mxu0 %v35
    %v1151 = vpop.f32.mrf.mxu0
    %v1152 = vadd.f32 %v1132, %v1151
    %1153 = vdwg.mxu0
    %1154 = vmatpush.msra.mxu0 %v545
    %1155 = vmatpush.msra.mxu0 %v537
    %1156 = vmatpush.msra.mxu0 %v529
    %1157 = vmatpush.msra.mxu0 %v521
    %1158 = vmatpush.msra.mxu0 %v513
    %1159 = vmatpush.msra.mxu0 %v505
    %1160 = vmatpush.msra.mxu0 %v497
    %1161 = vmatpush.msra.mxu0 %v489
    %1162 = vmatpush.msra.mxu0 %v481
    %1163 = vmatpush.msra.mxu0 %v473
    %1164 = vmatpush.msra.mxu0 %v465
    %1165 = vmatpush.msra.mxu0 %v457
    %1166 = vmatpush.msra.mxu0 %v449
    %1167 = vmatpush.msra.mxu0 %v441
    %1168 = vmatpush.msra.mxu0 %v433
    %1169 = vmatpush.msra.mxu0 %v425
    %1170 = vmatmul.f32.gmra.mxu0 %v36
    %v1171 = vpop.f32.mrf.mxu0
    %v1172 = vadd.f32 %v1152, %v1171
    %1173 = vdwg.mxu0
    %1174 = vmatpush.msra.mxu0 %v673
    %1175 = vmatpush.msra.mxu0 %v665
    %1176 = vmatpush.msra.mxu0 %v657
    %1177 = vmatpush.msra.mxu0 %v649
    %1178 = vmatpush.msra.mxu0 %v641
    %1179 = vmatpush.msra.mxu0 %v633
    %1180 = vmatpush.msra.mxu0 %v625
    %1181 = vmatpush.msra.mxu0 %v617
    %1182 = vmatpush.msra.mxu0 %v609
    %1183 = vmatpush.msra.mxu0 %v601
    %1184 = vmatpush.msra.mxu0 %v593
    %1185 = vmatpush.msra.mxu0 %v585
    %1186 = vmatpush.msra.mxu0 %v577
    %1187 = vmatpush.msra.mxu0 %v569
    %1188 = vmatpush.msra.mxu0 %v561
    %1189 = vmatpush.msra.mxu0 %v553
    %1190 = vmatmul.f32.gmra.mxu0 %v37
    %v1191 = vpop.f32.mrf.mxu0
    %v1192 = vadd.f32 %v1172, %v1191
    %1193 = vdwg.mxu0
    %1194 = vmatpush.msra.mxu0 %v801
    %1195 = vmatpush.msra.mxu0 %v793
    %1196 = vmatpush.msra.mxu0 %v785
    %1197 = vmatpush.msra.mxu0 %v777
    %1198 = vmatpush.msra.mxu0 %v769
    %1199 = vmatpush.msra.mxu0 %v761
    %1200 = vmatpush.msra.mxu0 %v753
    %1201 = vmatpush.msra.mxu0 %v745
    %1202 = vmatpush.msra.mxu0 %v737
    %1203 = vmatpush.msra.mxu0 %v729
    %1204 = vmatpush.msra.mxu0 %v721
    %1205 = vmatpush.msra.mxu0 %v713
    %1206 = vmatpush.msra.mxu0 %v705
    %1207 = vmatpush.msra.mxu0 %v697
    %1208 = vmatpush.msra.mxu0 %v689
    %1209 = vmatpush.msra.mxu0 %v681
    %1210 = vmatmul.f32.gmra.mxu0 %v38
    %v1211 = vpop.f32.mrf.mxu0
    %v1212 = vadd.f32 %v1192, %v1211
    %1213 = vdwg.mxu0
    %1214 = vmatpush.msra.mxu0 %v929
    %1215 = vmatpush.msra.mxu0 %v921
    %1216 = vmatpush.msra.mxu0 %v913
    %1217 = vmatpush.msra.mxu0 %v905
    %1218 = vmatpush.msra.mxu0 %v897
    %1219 = vmatpush.msra.mxu0 %v889
    %1220 = vmatpush.msra.mxu0 %v881
    %1221 = vmatpush.msra.mxu0 %v873
    %1222 = vmatpush.msra.mxu0 %v865
    %1223 = vmatpush.msra.mxu0 %v857
    %1224 = vmatpush.msra.mxu0 %v849
    %1225 = vmatpush.msra.mxu0 %v841
    %1226 = vmatpush.msra.mxu0 %v833
    %1227 = vmatpush.msra.mxu0 %v825
    %1228 = vmatpush.msra.mxu0 %v817
    %1229 = vmatpush.msra.mxu0 %v809
    %1230 = vmatmul.f32.gmra.mxu0 %v39
    %v1231 = vpop.f32.mrf.mxu0
    %v1232 = vadd.f32 %v1212, %v1231
    %1233 = vdwg.mxu0
    %1234 = vmatpush.msra.mxu0 %v162
    %1235 = vmatpush.msra.mxu0 %v154
    %1236 = vmatpush.msra.mxu0 %v146
    %1237 = vmatpush.msra.mxu0 %v138
    %1238 = vmatpush.msra.mxu0 %v130
    %1239 = vmatpush.msra.mxu0 %v122
    %1240 = vmatpush.msra.mxu0 %v114
    %1241 = vmatpush.msra.mxu0 %v106
    %1242 = vmatpush.msra.mxu0 %v98
    %1243 = vmatpush.msra.mxu0 %v90
    %1244 = vmatpush.msra.mxu0 %v82
    %1245 = vmatpush.msra.mxu0 %v74
    %1246 = vmatpush.msra.mxu0 %v66
    %1247 = vmatpush.msra.mxu0 %v58
    %1248 = vmatpush.msra.mxu0 %v50
    %1249 = vmatpush.msra.mxu0 %v42
    %1250 = vmatmul.f32.gmra.mxu0 %v33
    %v1251 = vpop.f32.mrf.mxu0
    %v1252 = vadd.f32 %v940, %v1251
    %1253 = vdwg.mxu0
    %1254 = vmatpush.msra.mxu0 %v290
    %1255 = vmatpush.msra.mxu0 %v282
    %1256 = vmatpush.msra.mxu0 %v274
    %1257 = vmatpush.msra.mxu0 %v266
    %1258 = vmatpush.msra.mxu0 %v258
    %1259 = vmatpush.msra.mxu0 %v250
    %1260 = vmatpush.msra.mxu0 %v242
    %1261 = vmatpush.msra.mxu0 %v234
    %1262 = vmatpush.msra.mxu0 %v226
    %1263 = vmatpush.msra.mxu0 %v218
    %1264 = vmatpush.msra.mxu0 %v210
    %1265 = vmatpush.msra.mxu0 %v202
    %1266 = vmatpush.msra.mxu0 %v194
    %1267 = vmatpush.msra.mxu0 %v186
    %1268 = vmatpush.msra.mxu0 %v178
    %1269 = vmatpush.msra.mxu0 %v170
    %1270 = vmatmul.f32.gmra.mxu0 %v34
    %v1271 = vpop.f32.mrf.mxu0
    %v1272 = vadd.f32 %v1252, %v1271
    %1273 = vdwg.mxu0
    %1274 = vmatpush.msra.mxu0 %v418
    %1275 = vmatpush.msra.mxu0 %v410
    %1276 = vmatpush.msra.mxu0 %v402
    %1277 = vmatpush.msra.mxu0 %v394
    %1278 = vmatpush.msra.mxu0 %v386
    %1279 = vmatpush.msra.mxu0 %v378
    %1280 = vmatpush.msra.mxu0 %v370
    %1281 = vmatpush.msra.mxu0 %v362
    %1282 = vmatpush.msra.mxu0 %v354
    %1283 = vmatpush.msra.mxu0 %v346
    %1284 = vmatpush.msra.mxu0 %v338
    %1285 = vmatpush.msra.mxu0 %v330
    %1286 = vmatpush.msra.mxu0 %v322
    %1287 = vmatpush.msra.mxu0 %v314
    %1288 = vmatpush.msra.mxu0 %v306
    %1289 = vmatpush.msra.mxu0 %v298
    %1290 = vmatmul.f32.gmra.mxu0 %v35
    %v1291 = vpop.f32.mrf.mxu0
    %v1292 = vadd.f32 %v1272, %v1291
    %1293 = vdwg.mxu0
    %1294 = vmatpush.msra.mxu0 %v546
    %1295 = vmatpush.msra.mxu0 %v538
    %1296 = vmatpush.msra.mxu0 %v530
    %1297 = vmatpush.msra.mxu0 %v522
    %1298 = vmatpush.msra.mxu0 %v514
    %1299 = vmatpush.msra.mxu0 %v506
    %1300 = vmatpush.msra.mxu0 %v498
    %1301 = vmatpush.msra.mxu0 %v490
    %1302 = vmatpush.msra.mxu0 %v482
    %1303 = vmatpush.msra.mxu0 %v474
    %1304 = vmatpush.msra.mxu0 %v466
    %1305 = vmatpush.msra.mxu0 %v458
    %1306 = vmatpush.msra.mxu0 %v450
    %1307 = vmatpush.msra.mxu0 %v442
    %1308 = vmatpush.msra.mxu0 %v434
    %1309 = vmatpush.msra.mxu0 %v426
    %1310 = vmatmul.f32.gmra.mxu0 %v36
    %v1311 = vpop.f32.mrf.mxu0
    %v1312 = vadd.f32 %v1292, %v1311
    %1313 = vdwg.mxu0
    %1314 = vmatpush.msra.mxu0 %v674
    %1315 = vmatpush.msra.mxu0 %v666
    %1316 = vmatpush.msra.mxu0 %v658
    %1317 = vmatpush.msra.mxu0 %v650
    %1318 = vmatpush.msra.mxu0 %v642
    %1319 = vmatpush.msra.mxu0 %v634
    %1320 = vmatpush.msra.mxu0 %v626
    %1321 = vmatpush.msra.mxu0 %v618
    %1322 = vmatpush.msra.mxu0 %v610
    %1323 = vmatpush.msra.mxu0 %v602
    %1324 = vmatpush.msra.mxu0 %v594
    %1325 = vmatpush.msra.mxu0 %v586
    %1326 = vmatpush.msra.mxu0 %v578
    %1327 = vmatpush.msra.mxu0 %v570
    %1328 = vmatpush.msra.mxu0 %v562
    %1329 = vmatpush.msra.mxu0 %v554
    %1330 = vmatmul.f32.gmra.mxu0 %v37
    %v1331 = vpop.f32.mrf.mxu0
    %v1332 = vadd.f32 %v1312, %v1331
    %1333 = vdwg.mxu0
    %1334 = vmatpush.msra.mxu0 %v802
    %1335 = vmatpush.msra.mxu0 %v794
    %1336 = vmatpush.msra.mxu0 %v786
    %1337 = vmatpush.msra.mxu0 %v778
    %1338 = vmatpush.msra.mxu0 %v770
    %1339 = vmatpush.msra.mxu0 %v762
    %1340 = vmatpush.msra.mxu0 %v754
    %1341 = vmatpush.msra.mxu0 %v746
    %1342 = vmatpush.msra.mxu0 %v738
    %1343 = vmatpush.msra.mxu0 %v730
    %1344 = vmatpush.msra.mxu0 %v722
    %1345 = vmatpush.msra.mxu0 %v714
    %1346 = vmatpush.msra.mxu0 %v706
    %1347 = vmatpush.msra.mxu0 %v698
    %1348 = vmatpush.msra.mxu0 %v690
    %1349 = vmatpush.msra.mxu0 %v682
    %1350 = vmatmul.f32.gmra.mxu0 %v38
    %v1351 = vpop.f32.mrf.mxu0
    %v1352 = vadd.f32 %v1332, %v1351
    %1353 = vdwg.mxu0
    %1354 = vmatpush.msra.mxu0 %v930
    %1355 = vmatpush.msra.mxu0 %v922
    %1356 = vmatpush.msra.mxu0 %v914
    %1357 = vmatpush.msra.mxu0 %v906
    %1358 = vmatpush.msra.mxu0 %v898
    %1359 = vmatpush.msra.mxu0 %v890
    %1360 = vmatpush.msra.mxu0 %v882
    %1361 = vmatpush.msra.mxu0 %v874
    %1362 = vmatpush.msra.mxu0 %v866
    %1363 = vmatpush.msra.mxu0 %v858
    %1364 = vmatpush.msra.mxu0 %v850
    %1365 = vmatpush.msra.mxu0 %v842
    %1366 = vmatpush.msra.mxu0 %v834
    %1367 = vmatpush.msra.mxu0 %v826
    %1368 = vmatpush.msra.mxu0 %v818
    %1369 = vmatpush.msra.mxu0 %v810
    %1370 = vmatmul.f32.gmra.mxu0 %v39
    %v1371 = vpop.f32.mrf.mxu0
    %v1372 = vadd.f32 %v1352, %v1371
    %1373 = vdwg.mxu0
    %1374 = vmatpush.msra.mxu0 %v163
    %1375 = vmatpush.msra.mxu0 %v155
    %1376 = vmatpush.msra.mxu0 %v147
    %1377 = vmatpush.msra.mxu0 %v139
    %1378 = vmatpush.msra.mxu0 %v131
    %1379 = vmatpush.msra.mxu0 %v123
    %1380 = vmatpush.msra.mxu0 %v115
    %1381 = vmatpush.msra.mxu0 %v107
    %1382 = vmatpush.msra.mxu0 %v99
    %1383 = vmatpush.msra.mxu0 %v91
    %1384 = vmatpush.msra.mxu0 %v83
    %1385 = vmatpush.msra.mxu0 %v75
    %1386 = vmatpush.msra.mxu0 %v67
    %1387 = vmatpush.msra.mxu0 %v59
    %1388 = vmatpush.msra.mxu0 %v51
    %1389 = vmatpush.msra.mxu0 %v43
    %1390 = vmatmul.f32.gmra.mxu0 %v33
    %v1391 = vpop.f32.mrf.mxu0
    %v1392 = vadd.f32 %v941, %v1391
    %1393 = vdwg.mxu0
    %1394 = vmatpush.msra.mxu0 %v291
    %1395 = vmatpush.msra.mxu0 %v283
    %1396 = vmatpush.msra.mxu0 %v275
    %1397 = vmatpush.msra.mxu0 %v267
    %1398 = vmatpush.msra.mxu0 %v259
    %1399 = vmatpush.msra.mxu0 %v251
    %1400 = vmatpush.msra.mxu0 %v243
    %1401 = vmatpush.msra.mxu0 %v235
    %1402 = vmatpush.msra.mxu0 %v227
    %1403 = vmatpush.msra.mxu0 %v219
    %1404 = vmatpush.msra.mxu0 %v211
    %1405 = vmatpush.msra.mxu0 %v203
    %1406 = vmatpush.msra.mxu0 %v195
    %1407 = vmatpush.msra.mxu0 %v187
    %1408 = vmatpush.msra.mxu0 %v179
    %1409 = vmatpush.msra.mxu0 %v171
    %1410 = vmatmul.f32.gmra.mxu0 %v34
    %v1411 = vpop.f32.mrf.mxu0
    %v1412 = vadd.f32 %v1392, %v1411
    %1413 = vdwg.mxu0
    %1414 = vmatpush.msra.mxu0 %v419
    %1415 = vmatpush.msra.mxu0 %v411
    %1416 = vmatpush.msra.mxu0 %v403
    %1417 = vmatpush.msra.mxu0 %v395
    %1418 = vmatpush.msra.mxu0 %v387
    %1419 = vmatpush.msra.mxu0 %v379
    %1420 = vmatpush.msra.mxu0 %v371
    %1421 = vmatpush.msra.mxu0 %v363
    %1422 = vmatpush.msra.mxu0 %v355
    %1423 = vmatpush.msra.mxu0 %v347
    %1424 = vmatpush.msra.mxu0 %v339
    %1425 = vmatpush.msra.mxu0 %v331
    %1426 = vmatpush.msra.mxu0 %v323
    %1427 = vmatpush.msra.mxu0 %v315
    %1428 = vmatpush.msra.mxu0 %v307
    %1429 = vmatpush.msra.mxu0 %v299
    %1430 = vmatmul.f32.gmra.mxu0 %v35
    %v1431 = vpop.f32.mrf.mxu0
    %v1432 = vadd.f32 %v1412, %v1431
    %1433 = vdwg.mxu0
    %1434 = vmatpush.msra.mxu0 %v547
    %1435 = vmatpush.msra.mxu0 %v539
    %1436 = vmatpush.msra.mxu0 %v531
    %1437 = vmatpush.msra.mxu0 %v523
    %1438 = vmatpush.msra.mxu0 %v515
    %1439 = vmatpush.msra.mxu0 %v507
    %1440 = vmatpush.msra.mxu0 %v499
    %1441 = vmatpush.msra.mxu0 %v491
    %1442 = vmatpush.msra.mxu0 %v483
    %1443 = vmatpush.msra.mxu0 %v475
    %1444 = vmatpush.msra.mxu0 %v467
    %1445 = vmatpush.msra.mxu0 %v459
    %1446 = vmatpush.msra.mxu0 %v451
    %1447 = vmatpush.msra.mxu0 %v443
    %1448 = vmatpush.msra.mxu0 %v435
    %1449 = vmatpush.msra.mxu0 %v427
    %1450 = vmatmul.f32.gmra.mxu0 %v36
    %v1451 = vpop.f32.mrf.mxu0
    %v1452 = vadd.f32 %v1432, %v1451
    %1453 = vdwg.mxu0
    %1454 = vmatpush.msra.mxu0 %v675
    %1455 = vmatpush.msra.mxu0 %v667
    %1456 = vmatpush.msra.mxu0 %v659
    %1457 = vmatpush.msra.mxu0 %v651
    %1458 = vmatpush.msra.mxu0 %v643
    %1459 = vmatpush.msra.mxu0 %v635
    %1460 = vmatpush.msra.mxu0 %v627
    %1461 = vmatpush.msra.mxu0 %v619
    %1462 = vmatpush.msra.mxu0 %v611
    %1463 = vmatpush.msra.mxu0 %v603
    %1464 = vmatpush.msra.mxu0 %v595
    %1465 = vmatpush.msra.mxu0 %v587
    %1466 = vmatpush.msra.mxu0 %v579
    %1467 = vmatpush.msra.mxu0 %v571
    %1468 = vmatpush.msra.mxu0 %v563
    %1469 = vmatpush.msra.mxu0 %v555
    %1470 = vmatmul.f32.gmra.mxu0 %v37
    %v1471 = vpop.f32.mrf.mxu0
    %v1472 = vadd.f32 %v1452, %v1471
    %1473 = vdwg.mxu0
    %1474 = vmatpush.msra.mxu0 %v803
    %1475 = vmatpush.msra.mxu0 %v795
    %1476 = vmatpush.msra.mxu0 %v787
    %1477 = vmatpush.msra.mxu0 %v779
    %1478 = vmatpush.msra.mxu0 %v771
    %1479 = vmatpush.msra.mxu0 %v763
    %1480 = vmatpush.msra.mxu0 %v755
    %1481 = vmatpush.msra.mxu0 %v747
    %1482 = vmatpush.msra.mxu0 %v739
    %1483 = vmatpush.msra.mxu0 %v731
    %1484 = vmatpush.msra.mxu0 %v723
    %1485 = vmatpush.msra.mxu0 %v715
    %1486 = vmatpush.msra.mxu0 %v707
    %1487 = vmatpush.msra.mxu0 %v699
    %1488 = vmatpush.msra.mxu0 %v691
    %1489 = vmatpush.msra.mxu0 %v683
    %1490 = vmatmul.f32.gmra.mxu0 %v38
    %v1491 = vpop.f32.mrf.mxu0
    %v1492 = vadd.f32 %v1472, %v1491
    %1493 = vdwg.mxu0
    %1494 = vmatpush.msra.mxu0 %v931
    %1495 = vmatpush.msra.mxu0 %v923
    %1496 = vmatpush.msra.mxu0 %v915
    %1497 = vmatpush.msra.mxu0 %v907
    %1498 = vmatpush.msra.mxu0 %v899
    %1499 = vmatpush.msra.mxu0 %v891
    %1500 = vmatpush.msra.mxu0 %v883
    %1501 = vmatpush.msra.mxu0 %v875
    %1502 = vmatpush.msra.mxu0 %v867
    %1503 = vmatpush.msra.mxu0 %v859
    %1504 = vmatpush.msra.mxu0 %v851
    %1505 = vmatpush.msra.mxu0 %v843
    %1506 = vmatpush.msra.mxu0 %v835
    %1507 = vmatpush.msra.mxu0 %v827
    %1508 = vmatpush.msra.mxu0 %v819
    %1509 = vmatpush.msra.mxu0 %v811
    %1510 = vmatmul.f32.gmra.mxu0 %v39
    %v1511 = vpop.f32.mrf.mxu0
    %v1512 = vadd.f32 %v1492, %v1511
    %1513 = vdwg.mxu0
    %1514 = vmatpush.msra.mxu0 %v164
    %1515 = vmatpush.msra.mxu0 %v156
    %1516 = vmatpush.msra.mxu0 %v148
    %1517 = vmatpush.msra.mxu0 %v140
    %1518 = vmatpush.msra.mxu0 %v132
    %1519 = vmatpush.msra.mxu0 %v124
    %1520 = vmatpush.msra.mxu0 %v116
    %1521 = vmatpush.msra.mxu0 %v108
    %1522 = vmatpush.msra.mxu0 %v100
    %1523 = vmatpush.msra.mxu0 %v92
    %1524 = vmatpush.msra.mxu0 %v84
    %1525 = vmatpush.msra.mxu0 %v76
    %1526 = vmatpush.msra.mxu0 %v68
    %1527 = vmatpush.msra.mxu0 %v60
    %1528 = vmatpush.msra.mxu0 %v52
    %1529 = vmatpush.msra.mxu0 %v44
    %1530 = vmatmul.f32.gmra.mxu0 %v33
    %v1531 = vpop.f32.mrf.mxu0
    %v1532 = vadd.f32 %v942, %v1531
    %1533 = vdwg.mxu0
    %1534 = vmatpush.msra.mxu0 %v292
    %1535 = vmatpush.msra.mxu0 %v284
    %1536 = vmatpush.msra.mxu0 %v276
    %1537 = vmatpush.msra.mxu0 %v268
    %1538 = vmatpush.msra.mxu0 %v260
    %1539 = vmatpush.msra.mxu0 %v252
    %1540 = vmatpush.msra.mxu0 %v244
    %1541 = vmatpush.msra.mxu0 %v236
    %1542 = vmatpush.msra.mxu0 %v228
    %1543 = vmatpush.msra.mxu0 %v220
    %1544 = vmatpush.msra.mxu0 %v212
    %1545 = vmatpush.msra.mxu0 %v204
    %1546 = vmatpush.msra.mxu0 %v196
    %1547 = vmatpush.msra.mxu0 %v188
    %1548 = vmatpush.msra.mxu0 %v180
    %1549 = vmatpush.msra.mxu0 %v172
    %1550 = vmatmul.f32.gmra.mxu0 %v34
    %v1551 = vpop.f32.mrf.mxu0
    %v1552 = vadd.f32 %v1532, %v1551
    %1553 = vdwg.mxu0
    %1554 = vmatpush.msra.mxu0 %v420
    %1555 = vmatpush.msra.mxu0 %v412
    %1556 = vmatpush.msra.mxu0 %v404
    %1557 = vmatpush.msra.mxu0 %v396
    %1558 = vmatpush.msra.mxu0 %v388
    %1559 = vmatpush.msra.mxu0 %v380
    %1560 = vmatpush.msra.mxu0 %v372
    %1561 = vmatpush.msra.mxu0 %v364
    %1562 = vmatpush.msra.mxu0 %v356
    %1563 = vmatpush.msra.mxu0 %v348
    %1564 = vmatpush.msra.mxu0 %v340
    %1565 = vmatpush.msra.mxu0 %v332
    %1566 = vmatpush.msra.mxu0 %v324
    %1567 = vmatpush.msra.mxu0 %v316
    %1568 = vmatpush.msra.mxu0 %v308
    %1569 = vmatpush.msra.mxu0 %v300
    %1570 = vmatmul.f32.gmra.mxu0 %v35
    %v1571 = vpop.f32.mrf.mxu0
    %v1572 = vadd.f32 %v1552, %v1571
    %1573 = vdwg.mxu0
    %1574 = vmatpush.msra.mxu0 %v548
    %1575 = vmatpush.msra.mxu0 %v540
    %1576 = vmatpush.msra.mxu0 %v532
    %1577 = vmatpush.msra.mxu0 %v524
    %1578 = vmatpush.msra.mxu0 %v516
    %1579 = vmatpush.msra.mxu0 %v508
    %1580 = vmatpush.msra.mxu0 %v500
    %1581 = vmatpush.msra.mxu0 %v492
    %1582 = vmatpush.msra.mxu0 %v484
    %1583 = vmatpush.msra.mxu0 %v476
    %1584 = vmatpush.msra.mxu0 %v468
    %1585 = vmatpush.msra.mxu0 %v460
    %1586 = vmatpush.msra.mxu0 %v452
    %1587 = vmatpush.msra.mxu0 %v444
    %1588 = vmatpush.msra.mxu0 %v436
    %1589 = vmatpush.msra.mxu0 %v428
    %1590 = vmatmul.f32.gmra.mxu0 %v36
    %v1591 = vpop.f32.mrf.mxu0
    %v1592 = vadd.f32 %v1572, %v1591
    %1593 = vdwg.mxu0
    %1594 = vmatpush.msra.mxu0 %v676
    %1595 = vmatpush.msra.mxu0 %v668
    %1596 = vmatpush.msra.mxu0 %v660
    %1597 = vmatpush.msra.mxu0 %v652
    %1598 = vmatpush.msra.mxu0 %v644
    %1599 = vmatpush.msra.mxu0 %v636
    %1600 = vmatpush.msra.mxu0 %v628
    %1601 = vmatpush.msra.mxu0 %v620
    %1602 = vmatpush.msra.mxu0 %v612
    %1603 = vmatpush.msra.mxu0 %v604
    %1604 = vmatpush.msra.mxu0 %v596
    %1605 = vmatpush.msra.mxu0 %v588
    %1606 = vmatpush.msra.mxu0 %v580
    %1607 = vmatpush.msra.mxu0 %v572
    %1608 = vmatpush.msra.mxu0 %v564
    %1609 = vmatpush.msra.mxu0 %v556
    %1610 = vmatmul.f32.gmra.mxu0 %v37
    %v1611 = vpop.f32.mrf.mxu0
    %v1612 = vadd.f32 %v1592, %v1611
    %1613 = vdwg.mxu0
    %1614 = vmatpush.msra.mxu0 %v804
    %1615 = vmatpush.msra.mxu0 %v796
    %1616 = vmatpush.msra.mxu0 %v788
    %1617 = vmatpush.msra.mxu0 %v780
    %1618 = vmatpush.msra.mxu0 %v772
    %1619 = vmatpush.msra.mxu0 %v764
    %1620 = vmatpush.msra.mxu0 %v756
    %1621 = vmatpush.msra.mxu0 %v748
    %1622 = vmatpush.msra.mxu0 %v740
    %1623 = vmatpush.msra.mxu0 %v732
    %1624 = vmatpush.msra.mxu0 %v724
    %1625 = vmatpush.msra.mxu0 %v716
    %1626 = vmatpush.msra.mxu0 %v708
    %1627 = vmatpush.msra.mxu0 %v700
    %1628 = vmatpush.msra.mxu0 %v692
    %1629 = vmatpush.msra.mxu0 %v684
    %1630 = vmatmul.f32.gmra.mxu0 %v38
    %v1631 = vpop.f32.mrf.mxu0
    %v1632 = vadd.f32 %v1612, %v1631
    %1633 = vdwg.mxu0
    %1634 = vmatpush.msra.mxu0 %v932
    %1635 = vmatpush.msra.mxu0 %v924
    %1636 = vmatpush.msra.mxu0 %v916
    %1637 = vmatpush.msra.mxu0 %v908
    %1638 = vmatpush.msra.mxu0 %v900
    %1639 = vmatpush.msra.mxu0 %v892
    %1640 = vmatpush.msra.mxu0 %v884
    %1641 = vmatpush.msra.mxu0 %v876
    %1642 = vmatpush.msra.mxu0 %v868
    %1643 = vmatpush.msra.mxu0 %v860
    %1644 = vmatpush.msra.mxu0 %v852
    %1645 = vmatpush.msra.mxu0 %v844
    %1646 = vmatpush.msra.mxu0 %v836
    %1647 = vmatpush.msra.mxu0 %v828
    %1648 = vmatpush.msra.mxu0 %v820
    %1649 = vmatpush.msra.mxu0 %v812
    %1650 = vmatmul.f32.gmra.mxu0 %v39
    %v1651 = vpop.f32.mrf.mxu0
    %v1652 = vadd.f32 %v1632, %v1651
    %1653 = vdwg.mxu0
    %1654 = vmatpush.msra.mxu0 %v165
    %1655 = vmatpush.msra.mxu0 %v157
    %1656 = vmatpush.msra.mxu0 %v149
    %1657 = vmatpush.msra.mxu0 %v141
    %1658 = vmatpush.msra.mxu0 %v133
    %1659 = vmatpush.msra.mxu0 %v125
    %1660 = vmatpush.msra.mxu0 %v117
    %1661 = vmatpush.msra.mxu0 %v109
    %1662 = vmatpush.msra.mxu0 %v101
    %1663 = vmatpush.msra.mxu0 %v93
    %1664 = vmatpush.msra.mxu0 %v85
    %1665 = vmatpush.msra.mxu0 %v77
    %1666 = vmatpush.msra.mxu0 %v69
    %1667 = vmatpush.msra.mxu0 %v61
    %1668 = vmatpush.msra.mxu0 %v53
    %1669 = vmatpush.msra.mxu0 %v45
    %1670 = vmatmul.f32.gmra.mxu0 %v33
    %v1671 = vpop.f32.mrf.mxu0
    %v1672 = vadd.f32 %v943, %v1671
    %1673 = vdwg.mxu0
    %1674 = vmatpush.msra.mxu0 %v293
    %1675 = vmatpush.msra.mxu0 %v285
    %1676 = vmatpush.msra.mxu0 %v277
    %1677 = vmatpush.msra.mxu0 %v269
    %1678 = vmatpush.msra.mxu0 %v261
    %1679 = vmatpush.msra.mxu0 %v253
    %1680 = vmatpush.msra.mxu0 %v245
    %1681 = vmatpush.msra.mxu0 %v237
    %1682 = vmatpush.msra.mxu0 %v229
    %1683 = vmatpush.msra.mxu0 %v221
    %1684 = vmatpush.msra.mxu0 %v213
    %1685 = vmatpush.msra.mxu0 %v205
    %1686 = vmatpush.msra.mxu0 %v197
    %1687 = vmatpush.msra.mxu0 %v189
    %1688 = vmatpush.msra.mxu0 %v181
    %1689 = vmatpush.msra.mxu0 %v173
    %1690 = vmatmul.f32.gmra.mxu0 %v34
    %v1691 = vpop.f32.mrf.mxu0
    %v1692 = vadd.f32 %v1672, %v1691
    %1693 = vdwg.mxu0
    %1694 = vmatpush.msra.mxu0 %v421
    %1695 = vmatpush.msra.mxu0 %v413
    %1696 = vmatpush.msra.mxu0 %v405
    %1697 = vmatpush.msra.mxu0 %v397
    %1698 = vmatpush.msra.mxu0 %v389
    %1699 = vmatpush.msra.mxu0 %v381
    %1700 = vmatpush.msra.mxu0 %v373
    %1701 = vmatpush.msra.mxu0 %v365
    %1702 = vmatpush.msra.mxu0 %v357
    %1703 = vmatpush.msra.mxu0 %v349
    %1704 = vmatpush.msra.mxu0 %v341
    %1705 = vmatpush.msra.mxu0 %v333
    %1706 = vmatpush.msra.mxu0 %v325
    %1707 = vmatpush.msra.mxu0 %v317
    %1708 = vmatpush.msra.mxu0 %v309
    %1709 = vmatpush.msra.mxu0 %v301
    %1710 = vmatmul.f32.gmra.mxu0 %v35
    %v1711 = vpop.f32.mrf.mxu0
    %v1712 = vadd.f32 %v1692, %v1711
    %1713 = vdwg.mxu0
    %1714 = vmatpush.msra.mxu0 %v549
    %1715 = vmatpush.msra.mxu0 %v541
    %1716 = vmatpush.msra.mxu0 %v533
    %1717 = vmatpush.msra.mxu0 %v525
    %1718 = vmatpush.msra.mxu0 %v517
    %1719 = vmatpush.msra.mxu0 %v509
    %1720 = vmatpush.msra.mxu0 %v501
    %1721 = vmatpush.msra.mxu0 %v493
    %1722 = vmatpush.msra.mxu0 %v485
    %1723 = vmatpush.msra.mxu0 %v477
    %1724 = vmatpush.msra.mxu0 %v469
    %1725 = vmatpush.msra.mxu0 %v461
    %1726 = vmatpush.msra.mxu0 %v453
    %1727 = vmatpush.msra.mxu0 %v445
    %1728 = vmatpush.msra.mxu0 %v437
    %1729 = vmatpush.msra.mxu0 %v429
    %1730 = vmatmul.f32.gmra.mxu0 %v36
    %v1731 = vpop.f32.mrf.mxu0
    %v1732 = vadd.f32 %v1712, %v1731
    %1733 = vdwg.mxu0
    %1734 = vmatpush.msra.mxu0 %v677
    %1735 = vmatpush.msra.mxu0 %v669
    %1736 = vmatpush.msra.mxu0 %v661
    %1737 = vmatpush.msra.mxu0 %v653
    %1738 = vmatpush.msra.mxu0 %v645
    %1739 = vmatpush.msra.mxu0 %v637
    %1740 = vmatpush.msra.mxu0 %v629
    %1741 = vmatpush.msra.mxu0 %v621
    %1742 = vmatpush.msra.mxu0 %v613
    %1743 = vmatpush.msra.mxu0 %v605
    %1744 = vmatpush.msra.mxu0 %v597
    %1745 = vmatpush.msra.mxu0 %v589
    %1746 = vmatpush.msra.mxu0 %v581
    %1747 = vmatpush.msra.mxu0 %v573
    %1748 = vmatpush.msra.mxu0 %v565
    %1749 = vmatpush.msra.mxu0 %v557
    %1750 = vmatmul.f32.gmra.mxu0 %v37
    %v1751 = vpop.f32.mrf.mxu0
    %v1752 = vadd.f32 %v1732, %v1751
    %1753 = vdwg.mxu0
    %1754 = vmatpush.msra.mxu0 %v805
    %1755 = vmatpush.msra.mxu0 %v797
    %1756 = vmatpush.msra.mxu0 %v789
    %1757 = vmatpush.msra.mxu0 %v781
    %1758 = vmatpush.msra.mxu0 %v773
    %1759 = vmatpush.msra.mxu0 %v765
    %1760 = vmatpush.msra.mxu0 %v757
    %1761 = vmatpush.msra.mxu0 %v749
    %1762 = vmatpush.msra.mxu0 %v741
    %1763 = vmatpush.msra.mxu0 %v733
    %1764 = vmatpush.msra.mxu0 %v725
    %1765 = vmatpush.msra.mxu0 %v717
    %1766 = vmatpush.msra.mxu0 %v709
    %1767 = vmatpush.msra.mxu0 %v701
    %1768 = vmatpush.msra.mxu0 %v693
    %1769 = vmatpush.msra.mxu0 %v685
    %1770 = vmatmul.f32.gmra.mxu0 %v38
    %v1771 = vpop.f32.mrf.mxu0
    %v1772 = vadd.f32 %v1752, %v1771
    %1773 = vdwg.mxu0
    %1774 = vmatpush.msra.mxu0 %v933
    %1775 = vmatpush.msra.mxu0 %v925
    %1776 = vmatpush.msra.mxu0 %v917
    %1777 = vmatpush.msra.mxu0 %v909
    %1778 = vmatpush.msra.mxu0 %v901
    %1779 = vmatpush.msra.mxu0 %v893
    %1780 = vmatpush.msra.mxu0 %v885
    %1781 = vmatpush.msra.mxu0 %v877
    %1782 = vmatpush.msra.mxu0 %v869
    %1783 = vmatpush.msra.mxu0 %v861
    %1784 = vmatpush.msra.mxu0 %v853
    %1785 = vmatpush.msra.mxu0 %v845
    %1786 = vmatpush.msra.mxu0 %v837
    %1787 = vmatpush.msra.mxu0 %v829
    %1788 = vmatpush.msra.mxu0 %v821
    %1789 = vmatpush.msra.mxu0 %v813
    %1790 = vmatmul.f32.gmra.mxu0 %v39
    %v1791 = vpop.f32.mrf.mxu0
    %v1792 = vadd.f32 %v1772, %v1791
    %1793 = vdwg.mxu0
    %1794 = vmatpush.msra.mxu0 %v166
    %1795 = vmatpush.msra.mxu0 %v158
    %1796 = vmatpush.msra.mxu0 %v150
    %1797 = vmatpush.msra.mxu0 %v142
    %1798 = vmatpush.msra.mxu0 %v134
    %1799 = vmatpush.msra.mxu0 %v126
    %1800 = vmatpush.msra.mxu0 %v118
    %1801 = vmatpush.msra.mxu0 %v110
    %1802 = vmatpush.msra.mxu0 %v102
    %1803 = vmatpush.msra.mxu0 %v94
    %1804 = vmatpush.msra.mxu0 %v86
    %1805 = vmatpush.msra.mxu0 %v78
    %1806 = vmatpush.msra.mxu0 %v70
    %1807 = vmatpush.msra.mxu0 %v62
    %1808 = vmatpush.msra.mxu0 %v54
    %1809 = vmatpush.msra.mxu0 %v46
    %1810 = vmatmul.f32.gmra.mxu0 %v33
    %v1811 = vpop.f32.mrf.mxu0
    %v1812 = vadd.f32 %v944, %v1811
    %1813 = vdwg.mxu0
    %1814 = vmatpush.msra.mxu0 %v294
    %1815 = vmatpush.msra.mxu0 %v286
    %1816 = vmatpush.msra.mxu0 %v278
    %1817 = vmatpush.msra.mxu0 %v270
    %1818 = vmatpush.msra.mxu0 %v262
    %1819 = vmatpush.msra.mxu0 %v254
    %1820 = vmatpush.msra.mxu0 %v246
    %1821 = vmatpush.msra.mxu0 %v238
    %1822 = vmatpush.msra.mxu0 %v230
    %1823 = vmatpush.msra.mxu0 %v222
    %1824 = vmatpush.msra.mxu0 %v214
    %1825 = vmatpush.msra.mxu0 %v206
    %1826 = vmatpush.msra.mxu0 %v198
    %1827 = vmatpush.msra.mxu0 %v190
    %1828 = vmatpush.msra.mxu0 %v182
    %1829 = vmatpush.msra.mxu0 %v174
    %1830 = vmatmul.f32.gmra.mxu0 %v34
    %v1831 = vpop.f32.mrf.mxu0
    %v1832 = vadd.f32 %v1812, %v1831
    %1833 = vdwg.mxu0
    %1834 = vmatpush.msra.mxu0 %v422
    %1835 = vmatpush.msra.mxu0 %v414
    %1836 = vmatpush.msra.mxu0 %v406
    %1837 = vmatpush.msra.mxu0 %v398
    %1838 = vmatpush.msra.mxu0 %v390
    %1839 = vmatpush.msra.mxu0 %v382
    %1840 = vmatpush.msra.mxu0 %v374
    %1841 = vmatpush.msra.mxu0 %v366
    %1842 = vmatpush.msra.mxu0 %v358
    %1843 = vmatpush.msra.mxu0 %v350
    %1844 = vmatpush.msra.mxu0 %v342
    %1845 = vmatpush.msra.mxu0 %v334
    %1846 = vmatpush.msra.mxu0 %v326
    %1847 = vmatpush.msra.mxu0 %v318
    %1848 = vmatpush.msra.mxu0 %v310
    %1849 = vmatpush.msra.mxu0 %v302
    %1850 = vmatmul.f32.gmra.mxu0 %v35
    %v1851 = vpop.f32.mrf.mxu0
    %v1852 = vadd.f32 %v1832, %v1851
    %1853 = vdwg.mxu0
    %1854 = vmatpush.msra.mxu0 %v550
    %1855 = vmatpush.msra.mxu0 %v542
    %1856 = vmatpush.msra.mxu0 %v534
    %1857 = vmatpush.msra.mxu0 %v526
    %1858 = vmatpush.msra.mxu0 %v518
    %1859 = vmatpush.msra.mxu0 %v510
    %1860 = vmatpush.msra.mxu0 %v502
    %1861 = vmatpush.msra.mxu0 %v494
    %1862 = vmatpush.msra.mxu0 %v486
    %1863 = vmatpush.msra.mxu0 %v478
    %1864 = vmatpush.msra.mxu0 %v470
    %1865 = vmatpush.msra.mxu0 %v462
    %1866 = vmatpush.msra.mxu0 %v454
    %1867 = vmatpush.msra.mxu0 %v446
    %1868 = vmatpush.msra.mxu0 %v438
    %1869 = vmatpush.msra.mxu0 %v430
    %1870 = vmatmul.f32.gmra.mxu0 %v36
    %v1871 = vpop.f32.mrf.mxu0
    %v1872 = vadd.f32 %v1852, %v1871
    %1873 = vdwg.mxu0
    %1874 = vmatpush.msra.mxu0 %v678
    %1875 = vmatpush.msra.mxu0 %v670
    %1876 = vmatpush.msra.mxu0 %v662
    %1877 = vmatpush.msra.mxu0 %v654
    %1878 = vmatpush.msra.mxu0 %v646
    %1879 = vmatpush.msra.mxu0 %v638
    %1880 = vmatpush.msra.mxu0 %v630
    %1881 = vmatpush.msra.mxu0 %v622
    %1882 = vmatpush.msra.mxu0 %v614
    %1883 = vmatpush.msra.mxu0 %v606
    %1884 = vmatpush.msra.mxu0 %v598
    %1885 = vmatpush.msra.mxu0 %v590
    %1886 = vmatpush.msra.mxu0 %v582
    %1887 = vmatpush.msra.mxu0 %v574
    %1888 = vmatpush.msra.mxu0 %v566
    %1889 = vmatpush.msra.mxu0 %v558
    %1890 = vmatmul.f32.gmra.mxu0 %v37
    %v1891 = vpop.f32.mrf.mxu0
    %v1892 = vadd.f32 %v1872, %v1891
    %1893 = vdwg.mxu0
    %1894 = vmatpush.msra.mxu0 %v806
    %1895 = vmatpush.msra.mxu0 %v798
    %1896 = vmatpush.msra.mxu0 %v790
    %1897 = vmatpush.msra.mxu0 %v782
    %1898 = vmatpush.msra.mxu0 %v774
    %1899 = vmatpush.msra.mxu0 %v766
    %1900 = vmatpush.msra.mxu0 %v758
    %1901 = vmatpush.msra.mxu0 %v750
    %1902 = vmatpush.msra.mxu0 %v742
    %1903 = vmatpush.msra.mxu0 %v734
    %1904 = vmatpush.msra.mxu0 %v726
    %1905 = vmatpush.msra.mxu0 %v718
    %1906 = vmatpush.msra.mxu0 %v710
    %1907 = vmatpush.msra.mxu0 %v702
    %1908 = vmatpush.msra.mxu0 %v694
    %1909 = vmatpush.msra.mxu0 %v686
    %1910 = vmatmul.f32.gmra.mxu0 %v38
    %v1911 = vpop.f32.mrf.mxu0
    %v1912 = vadd.f32 %v1892, %v1911
    %1913 = vdwg.mxu0
    %1914 = vmatpush.msra.mxu0 %v934
    %1915 = vmatpush.msra.mxu0 %v926
    %1916 = vmatpush.msra.mxu0 %v918
    %1917 = vmatpush.msra.mxu0 %v910
    %1918 = vmatpush.msra.mxu0 %v902
    %1919 = vmatpush.msra.mxu0 %v894
    %1920 = vmatpush.msra.mxu0 %v886
    %1921 = vmatpush.msra.mxu0 %v878
    %1922 = vmatpush.msra.mxu0 %v870
    %1923 = vmatpush.msra.mxu0 %v862
    %1924 = vmatpush.msra.mxu0 %v854
    %1925 = vmatpush.msra.mxu0 %v846
    %1926 = vmatpush.msra.mxu0 %v838
    %1927 = vmatpush.msra.mxu0 %v830
    %1928 = vmatpush.msra.mxu0 %v822
    %1929 = vmatpush.msra.mxu0 %v814
    %1930 = vmatmul.f32.gmra.mxu0 %v39
    %v1931 = vpop.f32.mrf.mxu0
    %v1932 = vadd.f32 %v1912, %v1931
    %1933 = vdwg.mxu0
    %1934 = vmatpush.msra.mxu0 %v167
    %1935 = vmatpush.msra.mxu0 %v159
    %1936 = vmatpush.msra.mxu0 %v151
    %1937 = vmatpush.msra.mxu0 %v143
    %1938 = vmatpush.msra.mxu0 %v135
    %1939 = vmatpush.msra.mxu0 %v127
    %1940 = vmatpush.msra.mxu0 %v119
    %1941 = vmatpush.msra.mxu0 %v111
    %1942 = vmatpush.msra.mxu0 %v103
    %1943 = vmatpush.msra.mxu0 %v95
    %1944 = vmatpush.msra.mxu0 %v87
    %1945 = vmatpush.msra.mxu0 %v79
    %1946 = vmatpush.msra.mxu0 %v71
    %1947 = vmatpush.msra.mxu0 %v63
    %1948 = vmatpush.msra.mxu0 %v55
    %1949 = vmatpush.msra.mxu0 %v47
    %1950 = vmatmul.f32.gmra.mxu0 %v33
    %v1951 = vpop.f32.mrf.mxu0
    %v1952 = vadd.f32 %v945, %v1951
    %1953 = vdwg.mxu0
    %1954 = vmatpush.msra.mxu0 %v295
    %1955 = vmatpush.msra.mxu0 %v287
    %1956 = vmatpush.msra.mxu0 %v279
    %1957 = vmatpush.msra.mxu0 %v271
    %1958 = vmatpush.msra.mxu0 %v263
    %1959 = vmatpush.msra.mxu0 %v255
    %1960 = vmatpush.msra.mxu0 %v247
    %1961 = vmatpush.msra.mxu0 %v239
    %1962 = vmatpush.msra.mxu0 %v231
    %1963 = vmatpush.msra.mxu0 %v223
    %1964 = vmatpush.msra.mxu0 %v215
    %1965 = vmatpush.msra.mxu0 %v207
    %1966 = vmatpush.msra.mxu0 %v199
    %1967 = vmatpush.msra.mxu0 %v191
    %1968 = vmatpush.msra.mxu0 %v183
    %1969 = vmatpush.msra.mxu0 %v175
    %1970 = vmatmul.f32.gmra.mxu0 %v34
    %v1971 = vpop.f32.mrf.mxu0
    %v1972 = vadd.f32 %v1952, %v1971
    %1973 = vdwg.mxu0
    %1974 = vmatpush.msra.mxu0 %v423
    %1975 = vmatpush.msra.mxu0 %v415
    %1976 = vmatpush.msra.mxu0 %v407
    %1977 = vmatpush.msra.mxu0 %v399
    %1978 = vmatpush.msra.mxu0 %v391
    %1979 = vmatpush.msra.mxu0 %v383
    %1980 = vmatpush.msra.mxu0 %v375
    %1981 = vmatpush.msra.mxu0 %v367
    %1982 = vmatpush.msra.mxu0 %v359
    %1983 = vmatpush.msra.mxu0 %v351
    %1984 = vmatpush.msra.mxu0 %v343
    %1985 = vmatpush.msra.mxu0 %v335
    %1986 = vmatpush.msra.mxu0 %v327
    %1987 = vmatpush.msra.mxu0 %v319
    %1988 = vmatpush.msra.mxu0 %v311
    %1989 = vmatpush.msra.mxu0 %v303
    %1990 = vmatmul.f32.gmra.mxu0 %v35
    %v1991 = vpop.f32.mrf.mxu0
    %v1992 = vadd.f32 %v1972, %v1991
    %1993 = vdwg.mxu0
    %1994 = vmatpush.msra.mxu0 %v551
    %1995 = vmatpush.msra.mxu0 %v543
    %1996 = vmatpush.msra.mxu0 %v535
    %1997 = vmatpush.msra.mxu0 %v527
    %1998 = vmatpush.msra.mxu0 %v519
    %1999 = vmatpush.msra.mxu0 %v511
    %2000 = vmatpush.msra.mxu0 %v503
    %2001 = vmatpush.msra.mxu0 %v495
    %2002 = vmatpush.msra.mxu0 %v487
    %2003 = vmatpush.msra.mxu0 %v479
    %2004 = vmatpush.msra.mxu0 %v471
    %2005 = vmatpush.msra.mxu0 %v463
    %2006 = vmatpush.msra.mxu0 %v455
    %2007 = vmatpush.msra.mxu0 %v447
    %2008 = vmatpush.msra.mxu0 %v439
    %2009 = vmatpush.msra.mxu0 %v431
    %2010 = vmatmul.f32.gmra.mxu0 %v36
    %v2011 = vpop.f32.mrf.mxu0
    %v2012 = vadd.f32 %v1992, %v2011
    %2013 = vdwg.mxu0
    %2014 = vmatpush.msra.mxu0 %v679
    %2015 = vmatpush.msra.mxu0 %v671
    %2016 = vmatpush.msra.mxu0 %v663
    %2017 = vmatpush.msra.mxu0 %v655
    %2018 = vmatpush.msra.mxu0 %v647
    %2019 = vmatpush.msra.mxu0 %v639
    %2020 = vmatpush.msra.mxu0 %v631
    %2021 = vmatpush.msra.mxu0 %v623
    %2022 = vmatpush.msra.mxu0 %v615
    %2023 = vmatpush.msra.mxu0 %v607
    %2024 = vmatpush.msra.mxu0 %v599
    %2025 = vmatpush.msra.mxu0 %v591
    %2026 = vmatpush.msra.mxu0 %v583
    %2027 = vmatpush.msra.mxu0 %v575
    %2028 = vmatpush.msra.mxu0 %v567
    %2029 = vmatpush.msra.mxu0 %v559
    %2030 = vmatmul.f32.gmra.mxu0 %v37
    %v2031 = vpop.f32.mrf.mxu0
    %v2032 = vadd.f32 %v2012, %v2031
    %2033 = vdwg.mxu0
    %2034 = vmatpush.msra.mxu0 %v807
    %2035 = vmatpush.msra.mxu0 %v799
    %2036 = vmatpush.msra.mxu0 %v791
    %2037 = vmatpush.msra.mxu0 %v783
    %2038 = vmatpush.msra.mxu0 %v775
    %2039 = vmatpush.msra.mxu0 %v767
    %2040 = vmatpush.msra.mxu0 %v759
    %2041 = vmatpush.msra.mxu0 %v751
    %2042 = vmatpush.msra.mxu0 %v743
    %2043 = vmatpush.msra.mxu0 %v735
    %2044 = vmatpush.msra.mxu0 %v727
    %2045 = vmatpush.msra.mxu0 %v719
    %2046 = vmatpush.msra.mxu0 %v711
    %2047 = vmatpush.msra.mxu0 %v703
    %2048 = vmatpush.msra.mxu0 %v695
    %2049 = vmatpush.msra.mxu0 %v687
    %2050 = vmatmul.f32.gmra.mxu0 %v38
    %v2051 = vpop.f32.mrf.mxu0
    %v2052 = vadd.f32 %v2032, %v2051
    %2053 = vdwg.mxu0
    %2054 = vmatpush.msra.mxu0 %v935
    %2055 = vmatpush.msra.mxu0 %v927
    %2056 = vmatpush.msra.mxu0 %v919
    %2057 = vmatpush.msra.mxu0 %v911
    %2058 = vmatpush.msra.mxu0 %v903
    %2059 = vmatpush.msra.mxu0 %v895
    %2060 = vmatpush.msra.mxu0 %v887
    %2061 = vmatpush.msra.mxu0 %v879
    %2062 = vmatpush.msra.mxu0 %v871
    %2063 = vmatpush.msra.mxu0 %v863
    %2064 = vmatpush.msra.mxu0 %v855
    %2065 = vmatpush.msra.mxu0 %v847
    %2066 = vmatpush.msra.mxu0 %v839
    %2067 = vmatpush.msra.mxu0 %v831
    %2068 = vmatpush.msra.mxu0 %v823
    %2069 = vmatpush.msra.mxu0 %v815
    %2070 = vmatmul.f32.gmra.mxu0 %v39
    %v2071 = vpop.f32.mrf.mxu0
    %v2072 = vadd.f32 %v2052, %v2071
    %2073 = vdwg.mxu0
    %v2074 = vmax.f32 %v1092, 0.0
    %v2075 = vmax.f32 %v1232, 0.0
    %v2076 = vmax.f32 %v1372, 0.0
    %v2077 = vmax.f32 %v1512, 0.0
    %v2078 = vmax.f32 %v1652, 0.0
    %v2079 = vmax.f32 %v1792, 0.0
    %v2080 = vmax.f32 %v1932, 0.0
    %v2081 = vmax.f32 %v2072, 0.0
    %v2082 = vld [vmem:[%s3] sm:$0xff]
    %v2083 = vld [vmem:[%s3 + $0x8] sm:$0xff]
    %v2084 = vld [vmem:[%s3 + $0x10] sm:$0xff]
    %v2085 = vld [vmem:[%s3 + $0x18] sm:$0xff]
    %v2086 = vld [vmem:[%s3 + $0x20] sm:$0xff]
    %v2087 = vld [vmem:[%s3 + $0x28] sm:$0xff]
    %v2088 = vld [vmem:[%s3 + $0x30] sm:$0xff]
    %v2089 = vld [vmem:[%s3 + $0x38] sm:$0xff]
    %v2090 = vld [vmem:[%s3 + $0x40] sm:$0xff]
    %v2091 = vld [vmem:[%s3 + $0x48] sm:$0xff]
    %v2092 = vld [vmem:[%s3 + $0x50] sm:$0xff]
    %v2093 = vld [vmem:[%s3 + $0x58] sm:$0xff]
    %v2094 = vld [vmem:[%s3 + $0x60] sm:$0xff]
    %v2095 = vld [vmem:[%s3 + $0x68] sm:$0xff]
    %v2096 = vld [vmem:[%s3 + $0x70] sm:$0xff]
    %v2097 = vld [vmem:[%s3 + $0x78] sm:$0xff]
    %v2098 = vld [vmem:[%s3 + $0x80] sm:$0xff]
    %v2099 = vld [vmem:[%s3 + $0x88] sm:$0xff]
    %v2100 = vld [vmem:[%s3 + $0x90] sm:$0xff]
    %v2101 = vld [vmem:[%s3 + $0x98] sm:$0xff]
    %v2102 = vld [vmem:[%s3 + $0xa0] sm:$0xff]
    %v2103 = vld [vmem:[%s3 + $0xa8] sm:$0xff]
    %v2104 = vld [vmem:[%s3 + $0xb0] sm:$0xff]
    %v2105 = vld [vmem:[%s3 + $0xb8] sm:$0xff]
    %v2106 = vld [vmem:[%s3 + $0xc0] sm:$0xff]
    %v2107 = vld [vmem:[%s3 + $0xc8] sm:$0xff]
    %v2108 = vld [vmem:[%s3 + $0xd0] sm:$0xff]
    %v2109 = vld [vmem:[%s3 + $0xd8] sm:$0xff]
    %v2110 = vld [vmem:[%s3 + $0xe0] sm:$0xff]
    %v2111 = vld [vmem:[%s3 + $0xe8] sm:$0xff]
    %v2112 = vld [vmem:[%s3 + $0xf0] sm:$0xff]
    %v2113 = vld [vmem:[%s3 + $0xf8] sm:$0xff]
    %v2114 = vld [vmem:[%s3 + $0x100] sm:$0xff]
    %v2115 = vld [vmem:[%s3 + $0x108] sm:$0xff]
    %v2116 = vld [vmem:[%s3 + $0x110] sm:$0xff]
    %v2117 = vld [vmem:[%s3 + $0x118] sm:$0xff]
    %v2118 = vld [vmem:[%s3 + $0x120] sm:$0xff]
    %v2119 = vld [vmem:[%s3 + $0x128] sm:$0xff]
    %v2120 = vld [vmem:[%s3 + $0x130] sm:$0xff]
    %v2121 = vld [vmem:[%s3 + $0x138] sm:$0xff]
    %v2122 = vld [vmem:[%s3 + $0x140] sm:$0xff]
    %v2123 = vld [vmem:[%s3 + $0x148] sm:$0xff]
    %v2124 = vld [vmem:[%s3 + $0x150] sm:$0xff]
    %v2125 = vld [vmem:[%s3 + $0x158] sm:$0xff]
    %v2126 = vld [vmem:[%s3 + $0x160] sm:$0xff]
    %v2127 = vld [vmem:[%s3 + $0x168] sm:$0xff]
    %v2128 = vld [vmem:[%s3 + $0x170] sm:$0xff]
    %v2129 = vld [vmem:[%s3 + $0x178] sm:$0xff]
    %v2130 = vld [vmem:[%s3 + $0x180] sm:$0xff]
    %v2131 = vld [vmem:[%s3 + $0x188] sm:$0xff]
    %v2132 = vld [vmem:[%s3 + $0x190] sm:$0xff]
    %v2133 = vld [vmem:[%s3 + $0x198] sm:$0xff]
    %v2134 = vld [vmem:[%s3 + $0x1a0] sm:$0xff]
    %v2135 = vld [vmem:[%s3 + $0x1a8] sm:$0xff]
    %v2136 = vld [vmem:[%s3 + $0x1b0] sm:$0xff]
    %v2137 = vld [vmem:[%s3 + $0x1b8] sm:$0xff]
    %v2138 = vld [vmem:[%s3 + $0x1c0] sm:$0xff]
    %v2139 = vld [vmem:[%s3 + $0x1c8] sm:$0xff]
    %v2140 = vld [vmem:[%s3 + $0x1d0] sm:$0xff]
    %v2141 = vld [vmem:[%s3 + $0x1d8] sm:$0xff]
    %v2142 = vld [vmem:[%s3 + $0x1e0] sm:$0xff]
    %v2143 = vld [vmem:[%s3 + $0x1e8] sm:$0xff]
    %v2144 = vld [vmem:[%s3 + $0x1f0] sm:$0xff]
    %v2145 = vld [vmem:[%s3 + $0x1f8] sm:$0xff]
    %v2146 = vld [vmem:[%s3 + $0x200] sm:$0xff]
    %v2147 = vld [vmem:[%s3 + $0x208] sm:$0xff]
    %v2148 = vld [vmem:[%s3 + $0x210] sm:$0xff]
    %v2149 = vld [vmem:[%s3 + $0x218] sm:$0xff]
    %v2150 = vld [vmem:[%s3 + $0x220] sm:$0xff]
    %v2151 = vld [vmem:[%s3 + $0x228] sm:$0xff]
    %v2152 = vld [vmem:[%s3 + $0x230] sm:$0xff]
    %v2153 = vld [vmem:[%s3 + $0x238] sm:$0xff]
    %v2154 = vld [vmem:[%s3 + $0x240] sm:$0xff]
    %v2155 = vld [vmem:[%s3 + $0x248] sm:$0xff]
    %v2156 = vld [vmem:[%s3 + $0x250] sm:$0xff]
    %v2157 = vld [vmem:[%s3 + $0x258] sm:$0xff]
    %v2158 = vld [vmem:[%s3 + $0x260] sm:$0xff]
    %v2159 = vld [vmem:[%s3 + $0x268] sm:$0xff]
    %v2160 = vld [vmem:[%s3 + $0x270] sm:$0xff]
    %v2161 = vld [vmem:[%s3 + $0x278] sm:$0xff]
    %v2162 = vld [vmem:[%s3 + $0x280] sm:$0xff]
    %v2163 = vld [vmem:[%s3 + $0x288] sm:$0xff]
    %v2164 = vld [vmem:[%s3 + $0x290] sm:$0xff]
    %v2165 = vld [vmem:[%s3 + $0x298] sm:$0xff]
    %v2166 = vld [vmem:[%s3 + $0x2a0] sm:$0xff]
    %v2167 = vld [vmem:[%s3 + $0x2a8] sm:$0xff]
    %v2168 = vld [vmem:[%s3 + $0x2b0] sm:$0xff]
    %v2169 = vld [vmem:[%s3 + $0x2b8] sm:$0xff]
    %v2170 = vld [vmem:[%s3 + $0x2c0] sm:$0xff]
    %v2171 = vld [vmem:[%s3 + $0x2c8] sm:$0xff]
    %v2172 = vld [vmem:[%s3 + $0x2d0] sm:$0xff]
    %v2173 = vld [vmem:[%s3 + $0x2d8] sm:$0xff]
    %v2174 = vld [vmem:[%s3 + $0x2e0] sm:$0xff]
    %v2175 = vld [vmem:[%s3 + $0x2e8] sm:$0xff]
    %v2176 = vld [vmem:[%s3 + $0x2f0] sm:$0xff]
    %v2177 = vld [vmem:[%s3 + $0x2f8] sm:$0xff]
    %v2178 = vld [vmem:[%s3 + $0x300] sm:$0xff]
    %v2179 = vld [vmem:[%s3 + $0x308] sm:$0xff]
    %v2180 = vld [vmem:[%s3 + $0x310] sm:$0xff]
    %v2181 = vld [vmem:[%s3 + $0x318] sm:$0xff]
    %v2182 = vld [vmem:[%s3 + $0x320] sm:$0xff]
    %v2183 = vld [vmem:[%s3 + $0x328] sm:$0xff]
    %v2184 = vld [vmem:[%s3 + $0x330] sm:$0xff]
    %v2185 = vld [vmem:[%s3 + $0x338] sm:$0xff]
    %v2186 = vld [vmem:[%s3 + $0x340] sm:$0xff]
    %v2187 = vld [vmem:[%s3 + $0x348] sm:$0xff]
    %v2188 = vld [vmem:[%s3 + $0x350] sm:$0xff]
    %v2189 = vld [vmem:[%s3 + $0x358] sm:$0xff]
    %v2190 = vld [vmem:[%s3 + $0x360] sm:$0xff]
    %v2191 = vld [vmem:[%s3 + $0x368] sm:$0xff]
    %v2192 = vld [vmem:[%s3 + $0x370] sm:$0xff]
    %v2193 = vld [vmem:[%s3 + $0x378] sm:$0xff]
    %v2194 = vld [vmem:[%s3 + $0x380] sm:$0xff]
    %v2195 = vld [vmem:[%s3 + $0x388] sm:$0xff]
    %v2196 = vld [vmem:[%s3 + $0x390] sm:$0xff]
    %v2197 = vld [vmem:[%s3 + $0x398] sm:$0xff]
    %v2198 = vld [vmem:[%s3 + $0x3a0] sm:$0xff]
    %v2199 = vld [vmem:[%s3 + $0x3a8] sm:$0xff]
    %v2200 = vld [vmem:[%s3 + $0x3b0] sm:$0xff]
    %v2201 = vld [vmem:[%s3 + $0x3b8] sm:$0xff]
    %v2202 = vld [vmem:[%s3 + $0x3c0] sm:$0xff]
    %v2203 = vld [vmem:[%s3 + $0x3c8] sm:$0xff]
    %v2204 = vld [vmem:[%s3 + $0x3d0] sm:$0xff]
    %v2205 = vld [vmem:[%s3 + $0x3d8] sm:$0xff]
    %v2206 = vld [vmem:[%s3 + $0x3e0] sm:$0xff]
    %v2207 = vld [vmem:[%s3 + $0x3e8] sm:$0xff]
    %v2208 = vld [vmem:[%s3 + $0x3f0] sm:$0xff]
    %v2209 = vld [vmem:[%s3 + $0x3f8] sm:$0xff]
    %v2210 = vld [vmem:[%s3 + $0x400] sm:$0xff]
    %v2211 = vld [vmem:[%s3 + $0x408] sm:$0xff]
    %v2212 = vld [vmem:[%s3 + $0x410] sm:$0xff]
    %v2213 = vld [vmem:[%s3 + $0x418] sm:$0xff]
    %v2214 = vld [vmem:[%s3 + $0x420] sm:$0xff]
    %v2215 = vld [vmem:[%s3 + $0x428] sm:$0xff]
    %v2216 = vld [vmem:[%s3 + $0x430] sm:$0xff]
    %v2217 = vld [vmem:[%s3 + $0x438] sm:$0xff]
    %v2218 = vld [vmem:[%s3 + $0x440] sm:$0xff]
    %v2219 = vld [vmem:[%s3 + $0x448] sm:$0xff]
    %v2220 = vld [vmem:[%s3 + $0x450] sm:$0xff]
    %v2221 = vld [vmem:[%s3 + $0x458] sm:$0xff]
    %v2222 = vld [vmem:[%s3 + $0x460] sm:$0xff]
    %v2223 = vld [vmem:[%s3 + $0x468] sm:$0xff]
    %v2224 = vld [vmem:[%s3 + $0x470] sm:$0xff]
    %v2225 = vld [vmem:[%s3 + $0x478] sm:$0xff]
    %v2226 = vld [vmem:[%s3 + $0x480] sm:$0xff]
    %v2227 = vld [vmem:[%s3 + $0x488] sm:$0xff]
    %v2228 = vld [vmem:[%s3 + $0x490] sm:$0xff]
    %v2229 = vld [vmem:[%s3 + $0x498] sm:$0xff]
    %v2230 = vld [vmem:[%s3 + $0x4a0] sm:$0xff]
    %v2231 = vld [vmem:[%s3 + $0x4a8] sm:$0xff]
    %v2232 = vld [vmem:[%s3 + $0x4b0] sm:$0xff]
    %v2233 = vld [vmem:[%s3 + $0x4b8] sm:$0xff]
    %v2234 = vld [vmem:[%s3 + $0x4c0] sm:$0xff]
    %v2235 = vld [vmem:[%s3 + $0x4c8] sm:$0xff]
    %v2236 = vld [vmem:[%s3 + $0x4d0] sm:$0xff]
    %v2237 = vld [vmem:[%s3 + $0x4d8] sm:$0xff]
    %v2238 = vld [vmem:[%s3 + $0x4e0] sm:$0xff]
    %v2239 = vld [vmem:[%s3 + $0x4e8] sm:$0xff]
    %v2240 = vld [vmem:[%s3 + $0x4f0] sm:$0xff]
    %v2241 = vld [vmem:[%s3 + $0x4f8] sm:$0xff]
    %v2242 = vld [vmem:[%s3 + $0x500] sm:$0xff]
    %v2243 = vld [vmem:[%s3 + $0x508] sm:$0xff]
    %v2244 = vld [vmem:[%s3 + $0x510] sm:$0xff]
    %v2245 = vld [vmem:[%s3 + $0x518] sm:$0xff]
    %v2246 = vld [vmem:[%s3 + $0x520] sm:$0xff]
    %v2247 = vld [vmem:[%s3 + $0x528] sm:$0xff]
    %v2248 = vld [vmem:[%s3 + $0x530] sm:$0xff]
    %v2249 = vld [vmem:[%s3 + $0x538] sm:$0xff]
    %v2250 = vld [vmem:[%s3 + $0x540] sm:$0xff]
    %v2251 = vld [vmem:[%s3 + $0x548] sm:$0xff]
    %v2252 = vld [vmem:[%s3 + $0x550] sm:$0xff]
    %v2253 = vld [vmem:[%s3 + $0x558] sm:$0xff]
    %v2254 = vld [vmem:[%s3 + $0x560] sm:$0xff]
    %v2255 = vld [vmem:[%s3 + $0x568] sm:$0xff]
    %v2256 = vld [vmem:[%s3 + $0x570] sm:$0xff]
    %v2257 = vld [vmem:[%s3 + $0x578] sm:$0xff]
    %v2258 = vld [vmem:[%s3 + $0x580] sm:$0xff]
    %v2259 = vld [vmem:[%s3 + $0x588] sm:$0xff]
    %v2260 = vld [vmem:[%s3 + $0x590] sm:$0xff]
    %v2261 = vld [vmem:[%s3 + $0x598] sm:$0xff]
    %v2262 = vld [vmem:[%s3 + $0x5a0] sm:$0xff]
    %v2263 = vld [vmem:[%s3 + $0x5a8] sm:$0xff]
    %v2264 = vld [vmem:[%s3 + $0x5b0] sm:$0xff]
    %v2265 = vld [vmem:[%s3 + $0x5b8] sm:$0xff]
    %v2266 = vld [vmem:[%s3 + $0x5c0] sm:$0xff]
    %v2267 = vld [vmem:[%s3 + $0x5c8] sm:$0xff]
    %v2268 = vld [vmem:[%s3 + $0x5d0] sm:$0xff]
    %v2269 = vld [vmem:[%s3 + $0x5d8] sm:$0xff]
    %v2270 = vld [vmem:[%s3 + $0x5e0] sm:$0xff]
    %v2271 = vld [vmem:[%s3 + $0x5e8] sm:$0xff]
    %v2272 = vld [vmem:[%s3 + $0x5f0] sm:$0xff]
    %v2273 = vld [vmem:[%s3 + $0x5f8] sm:$0xff]
    %v2274 = vld [vmem:[%s3 + $0x600] sm:$0xff]
    %v2275 = vld [vmem:[%s3 + $0x608] sm:$0xff]
    %v2276 = vld [vmem:[%s3 + $0x610] sm:$0xff]
    %v2277 = vld [vmem:[%s3 + $0x618] sm:$0xff]
    %v2278 = vld [vmem:[%s3 + $0x620] sm:$0xff]
    %v2279 = vld [vmem:[%s3 + $0x628] sm:$0xff]
    %v2280 = vld [vmem:[%s3 + $0x630] sm:$0xff]
    %v2281 = vld [vmem:[%s3 + $0x638] sm:$0xff]
    %v2282 = vld [vmem:[%s3 + $0x640] sm:$0xff]
    %v2283 = vld [vmem:[%s3 + $0x648] sm:$0xff]
    %v2284 = vld [vmem:[%s3 + $0x650] sm:$0xff]
    %v2285 = vld [vmem:[%s3 + $0x658] sm:$0xff]
    %v2286 = vld [vmem:[%s3 + $0x660] sm:$0xff]
    %v2287 = vld [vmem:[%s3 + $0x668] sm:$0xff]
    %v2288 = vld [vmem:[%s3 + $0x670] sm:$0xff]
    %v2289 = vld [vmem:[%s3 + $0x678] sm:$0xff]
    %v2290 = vld [vmem:[%s3 + $0x680] sm:$0xff]
    %v2291 = vld [vmem:[%s3 + $0x688] sm:$0xff]
    %v2292 = vld [vmem:[%s3 + $0x690] sm:$0xff]
    %v2293 = vld [vmem:[%s3 + $0x698] sm:$0xff]
    %v2294 = vld [vmem:[%s3 + $0x6a0] sm:$0xff]
    %v2295 = vld [vmem:[%s3 + $0x6a8] sm:$0xff]
    %v2296 = vld [vmem:[%s3 + $0x6b0] sm:$0xff]
    %v2297 = vld [vmem:[%s3 + $0x6b8] sm:$0xff]
    %v2298 = vld [vmem:[%s3 + $0x6c0] sm:$0xff]
    %v2299 = vld [vmem:[%s3 + $0x6c8] sm:$0xff]
    %v2300 = vld [vmem:[%s3 + $0x6d0] sm:$0xff]
    %v2301 = vld [vmem:[%s3 + $0x6d8] sm:$0xff]
    %v2302 = vld [vmem:[%s3 + $0x6e0] sm:$0xff]
    %v2303 = vld [vmem:[%s3 + $0x6e8] sm:$0xff]
    %v2304 = vld [vmem:[%s3 + $0x6f0] sm:$0xff]
    %v2305 = vld [vmem:[%s3 + $0x6f8] sm:$0xff]
    %v2306 = vld [vmem:[%s3 + $0x700] sm:$0xff]
    %v2307 = vld [vmem:[%s3 + $0x708] sm:$0xff]
    %v2308 = vld [vmem:[%s3 + $0x710] sm:$0xff]
    %v2309 = vld [vmem:[%s3 + $0x718] sm:$0xff]
    %v2310 = vld [vmem:[%s3 + $0x720] sm:$0xff]
    %v2311 = vld [vmem:[%s3 + $0x728] sm:$0xff]
    %v2312 = vld [vmem:[%s3 + $0x730] sm:$0xff]
    %v2313 = vld [vmem:[%s3 + $0x738] sm:$0xff]
    %v2314 = vld [vmem:[%s3 + $0x740] sm:$0xff]
    %v2315 = vld [vmem:[%s3 + $0x748] sm:$0xff]
    %v2316 = vld [vmem:[%s3 + $0x750] sm:$0xff]
    %v2317 = vld [vmem:[%s3 + $0x758] sm:$0xff]
    %v2318 = vld [vmem:[%s3 + $0x760] sm:$0xff]
    %v2319 = vld [vmem:[%s3 + $0x768] sm:$0xff]
    %v2320 = vld [vmem:[%s3 + $0x770] sm:$0xff]
    %v2321 = vld [vmem:[%s3 + $0x778] sm:$0xff]
    %v2322 = vld [vmem:[%s3 + $0x780] sm:$0xff]
    %v2323 = vld [vmem:[%s3 + $0x788] sm:$0xff]
    %v2324 = vld [vmem:[%s3 + $0x790] sm:$0xff]
    %v2325 = vld [vmem:[%s3 + $0x798] sm:$0xff]
    %v2326 = vld [vmem:[%s3 + $0x7a0] sm:$0xff]
    %v2327 = vld [vmem:[%s3 + $0x7a8] sm:$0xff]
    %v2328 = vld [vmem:[%s3 + $0x7b0] sm:$0xff]
    %v2329 = vld [vmem:[%s3 + $0x7b8] sm:$0xff]
    %v2330 = vld [vmem:[%s3 + $0x7c0] sm:$0xff]
    %v2331 = vld [vmem:[%s3 + $0x7c8] sm:$0xff]
    %v2332 = vld [vmem:[%s3 + $0x7d0] sm:$0xff]
    %v2333 = vld [vmem:[%s3 + $0x7d8] sm:$0xff]
    %v2334 = vld [vmem:[%s3 + $0x7e0] sm:$0xff]
    %v2335 = vld [vmem:[%s3 + $0x7e8] sm:$0xff]
    %v2336 = vld [vmem:[%s3 + $0x7f0] sm:$0xff]
    %v2337 = vld [vmem:[%s3 + $0x7f8] sm:$0xff]
    %v2338 = vld [vmem:[%s4] sm:$0x3]
    %v2340 = vperm.slane %v2338, 0
    %v2341 = vperm.slane %v2338, 1
    %2344 = vmatpush.msra.mxu0 %v2112
    %2345 = vmatpush.msra.mxu0 %v2110
    %2346 = vmatpush.msra.mxu0 %v2108
    %2347 = vmatpush.msra.mxu0 %v2106
    %2348 = vmatpush.msra.mxu0 %v2104
    %2349 = vmatpush.msra.mxu0 %v2102
    %2350 = vmatpush.msra.mxu0 %v2100
    %2351 = vmatpush.msra.mxu0 %v2098
    %2352 = vmatpush.msra.mxu0 %v2096
    %2353 = vmatpush.msra.mxu0 %v2094
    %2354 = vmatpush.msra.mxu0 %v2092
    %2355 = vmatpush.msra.mxu0 %v2090
    %2356 = vmatpush.msra.mxu0 %v2088
    %2357 = vmatpush.msra.mxu0 %v2086
    %2358 = vmatpush.msra.mxu0 %v2084
    %2359 = vmatpush.msra.mxu0 %v2082
    %2360 = vmatmul.f32.gmra.mxu0 %v2074
    %v2361 = vpop.f32.mrf.mxu0
    %v2362 = vadd.f32 %v2340, %v2361
    %2363 = vdwg.mxu0
    %2364 = vmatpush.msra.mxu0 %v2144
    %2365 = vmatpush.msra.mxu0 %v2142
    %2366 = vmatpush.msra.mxu0 %v2140
    %2367 = vmatpush.msra.mxu0 %v2138
    %2368 = vmatpush.msra.mxu0 %v2136
    %2369 = vmatpush.msra.mxu0 %v2134
    %2370 = vmatpush.msra.mxu0 %v2132
    %2371 = vmatpush.msra.mxu0 %v2130
    %2372 = vmatpush.msra.mxu0 %v2128
    %2373 = vmatpush.msra.mxu0 %v2126
    %2374 = vmatpush.msra.mxu0 %v2124
    %2375 = vmatpush.msra.mxu0 %v2122
    %2376 = vmatpush.msra.mxu0 %v2120
    %2377 = vmatpush.msra.mxu0 %v2118
    %2378 = vmatpush.msra.mxu0 %v2116
    %2379 = vmatpush.msra.mxu0 %v2114
    %2380 = vmatmul.f32.gmra.mxu0 %v2075
    %v2381 = vpop.f32.mrf.mxu0
    %v2382 = vadd.f32 %v2362, %v2381
    %2383 = vdwg.mxu0
    %2384 = vmatpush.msra.mxu0 %v2176
    %2385 = vmatpush.msra.mxu0 %v2174
    %2386 = vmatpush.msra.mxu0 %v2172
    %2387 = vmatpush.msra.mxu0 %v2170
    %2388 = vmatpush.msra.mxu0 %v2168
    %2389 = vmatpush.msra.mxu0 %v2166
    %2390 = vmatpush.msra.mxu0 %v2164
    %2391 = vmatpush.msra.mxu0 %v2162
    %2392 = vmatpush.msra.mxu0 %v2160
    %2393 = vmatpush.msra.mxu0 %v2158
    %2394 = vmatpush.msra.mxu0 %v2156
    %2395 = vmatpush.msra.mxu0 %v2154
    %2396 = vmatpush.msra.mxu0 %v2152
    %2397 = vmatpush.msra.mxu0 %v2150
    %2398 = vmatpush.msra.mxu0 %v2148
    %2399 = vmatpush.msra.mxu0 %v2146
    %2400 = vmatmul.f32.gmra.mxu0 %v2076
    %v2401 = vpop.f32.mrf.mxu0
    %v2402 = vadd.f32 %v2382, %v2401
    %2403 = vdwg.mxu0
    %2404 = vmatpush.msra.mxu0 %v2208
    %2405 = vmatpush.msra.mxu0 %v2206
    %2406 = vmatpush.msra.mxu0 %v2204
    %2407 = vmatpush.msra.mxu0 %v2202
    %2408 = vmatpush.msra.mxu0 %v2200
    %2409 = vmatpush.msra.mxu0 %v2198
    %2410 = vmatpush.msra.mxu0 %v2196
    %2411 = vmatpush.msra.mxu0 %v2194
    %2412 = vmatpush.msra.mxu0 %v2192
    %2413 = vmatpush.msra.mxu0 %v2190
    %2414 = vmatpush.msra.mxu0 %v2188
    %2415 = vmatpush.msra.mxu0 %v2186
    %2416 = vmatpush.msra.mxu0 %v2184
    %2417 = vmatpush.msra.mxu0 %v2182
    %2418 = vmatpush.msra.mxu0 %v2180
    %2419 = vmatpush.msra.mxu0 %v2178
    %2420 = vmatmul.f32.gmra.mxu0 %v2077
    %v2421 = vpop.f32.mrf.mxu0
    %v2422 = vadd.f32 %v2402, %v2421
    %2423 = vdwg.mxu0
    %2424 = vmatpush.msra.mxu0 %v2240
    %2425 = vmatpush.msra.mxu0 %v2238
    %2426 = vmatpush.msra.mxu0 %v2236
    %2427 = vmatpush.msra.mxu0 %v2234
    %2428 = vmatpush.msra.mxu0 %v2232
    %2429 = vmatpush.msra.mxu0 %v2230
    %2430 = vmatpush.msra.mxu0 %v2228
    %2431 = vmatpush.msra.mxu0 %v2226
    %2432 = vmatpush.msra.mxu0 %v2224
    %2433 = vmatpush.msra.mxu0 %v2222
    %2434 = vmatpush.msra.mxu0 %v2220
    %2435 = vmatpush.msra.mxu0 %v2218
    %2436 = vmatpush.msra.mxu0 %v2216
    %2437 = vmatpush.msra.mxu0 %v2214
    %2438 = vmatpush.msra.mxu0 %v2212
    %2439 = vmatpush.msra.mxu0 %v2210
    %2440 = vmatmul.f32.gmra.mxu0 %v2078
    %v2441 = vpop.f32.mrf.mxu0
    %v2442 = vadd.f32 %v2422, %v2441
    %2443 = vdwg.mxu0
    %2444 = vmatpush.msra.mxu0 %v2272
    %2445 = vmatpush.msra.mxu0 %v2270
    %2446 = vmatpush.msra.mxu0 %v2268
    %2447 = vmatpush.msra.mxu0 %v2266
    %2448 = vmatpush.msra.mxu0 %v2264
    %2449 = vmatpush.msra.mxu0 %v2262
    %2450 = vmatpush.msra.mxu0 %v2260
    %2451 = vmatpush.msra.mxu0 %v2258
    %2452 = vmatpush.msra.mxu0 %v2256
    %2453 = vmatpush.msra.mxu0 %v2254
    %2454 = vmatpush.msra.mxu0 %v2252
    %2455 = vmatpush.msra.mxu0 %v2250
    %2456 = vmatpush.msra.mxu0 %v2248
    %2457 = vmatpush.msra.mxu0 %v2246
    %2458 = vmatpush.msra.mxu0 %v2244
    %2459 = vmatpush.msra.mxu0 %v2242
    %2460 = vmatmul.f32.gmra.mxu0 %v2079
    %v2461 = vpop.f32.mrf.mxu0
    %v2462 = vadd.f32 %v2442, %v2461
    %2463 = vdwg.mxu0
    %2464 = vmatpush.msra.mxu0 %v2304
    %2465 = vmatpush.msra.mxu0 %v2302
    %2466 = vmatpush.msra.mxu0 %v2300
    %2467 = vmatpush.msra.mxu0 %v2298
    %2468 = vmatpush.msra.mxu0 %v2296
    %2469 = vmatpush.msra.mxu0 %v2294
    %2470 = vmatpush.msra.mxu0 %v2292
    %2471 = vmatpush.msra.mxu0 %v2290
    %2472 = vmatpush.msra.mxu0 %v2288
    %2473 = vmatpush.msra.mxu0 %v2286
    %2474 = vmatpush.msra.mxu0 %v2284
    %2475 = vmatpush.msra.mxu0 %v2282
    %2476 = vmatpush.msra.mxu0 %v2280
    %2477 = vmatpush.msra.mxu0 %v2278
    %2478 = vmatpush.msra.mxu0 %v2276
    %2479 = vmatpush.msra.mxu0 %v2274
    %2480 = vmatmul.f32.gmra.mxu0 %v2080
    %v2481 = vpop.f32.mrf.mxu0
    %v2482 = vadd.f32 %v2462, %v2481
    %2483 = vdwg.mxu0
    %2484 = vmatpush.msra.mxu0 %v2336
    %2485 = vmatpush.msra.mxu0 %v2334
    %2486 = vmatpush.msra.mxu0 %v2332
    %2487 = vmatpush.msra.mxu0 %v2330
    %2488 = vmatpush.msra.mxu0 %v2328
    %2489 = vmatpush.msra.mxu0 %v2326
    %2490 = vmatpush.msra.mxu0 %v2324
    %2491 = vmatpush.msra.mxu0 %v2322
    %2492 = vmatpush.msra.mxu0 %v2320
    %2493 = vmatpush.msra.mxu0 %v2318
    %2494 = vmatpush.msra.mxu0 %v2316
    %2495 = vmatpush.msra.mxu0 %v2314
    %2496 = vmatpush.msra.mxu0 %v2312
    %2497 = vmatpush.msra.mxu0 %v2310
    %2498 = vmatpush.msra.mxu0 %v2308
    %2499 = vmatpush.msra.mxu0 %v2306
    %2500 = vmatmul.f32.gmra.mxu0 %v2081
    %v2501 = vpop.f32.mrf.mxu0
    %v2502 = vadd.f32 %v2482, %v2501
    %2503 = vdwg.mxu0
    %2504 = vmatpush.msra.mxu0 %v2113
    %2505 = vmatpush.msra.mxu0 %v2111
    %2506 = vmatpush.msra.mxu0 %v2109
    %2507 = vmatpush.msra.mxu0 %v2107
    %2508 = vmatpush.msra.mxu0 %v2105
    %2509 = vmatpush.msra.mxu0 %v2103
    %2510 = vmatpush.msra.mxu0 %v2101
    %2511 = vmatpush.msra.mxu0 %v2099
    %2512 = vmatpush.msra.mxu0 %v2097
    %2513 = vmatpush.msra.mxu0 %v2095
    %2514 = vmatpush.msra.mxu0 %v2093
    %2515 = vmatpush.msra.mxu0 %v2091
    %2516 = vmatpush.msra.mxu0 %v2089
    %2517 = vmatpush.msra.mxu0 %v2087
    %2518 = vmatpush.msra.mxu0 %v2085
    %2519 = vmatpush.msra.mxu0 %v2083
    %2520 = vmatmul.f32.gmra.mxu0 %v2074
    %v2521 = vpop.f32.mrf.mxu0
    %v2522 = vadd.f32 %v2341, %v2521
    %2523 = vdwg.mxu0
    %2524 = vmatpush.msra.mxu0 %v2145
    %2525 = vmatpush.msra.mxu0 %v2143
    %2526 = vmatpush.msra.mxu0 %v2141
    %2527 = vmatpush.msra.mxu0 %v2139
    %2528 = vmatpush.msra.mxu0 %v2137
    %2529 = vmatpush.msra.mxu0 %v2135
    %2530 = vmatpush.msra.mxu0 %v2133
    %2531 = vmatpush.msra.mxu0 %v2131
    %2532 = vmatpush.msra.mxu0 %v2129
    %2533 = vmatpush.msra.mxu0 %v2127
    %2534 = vmatpush.msra.mxu0 %v2125
    %2535 = vmatpush.msra.mxu0 %v2123
    %2536 = vmatpush.msra.mxu0 %v2121
    %2537 = vmatpush.msra.mxu0 %v2119
    %2538 = vmatpush.msra.mxu0 %v2117
    %2539 = vmatpush.msra.mxu0 %v2115
    %2540 = vmatmul.f32.gmra.mxu0 %v2075
    %v2541 = vpop.f32.mrf.mxu0
    %v2542 = vadd.f32 %v2522, %v2541
    %2543 = vdwg.mxu0
    %2544 = vmatpush.msra.mxu0 %v2177
    %2545 = vmatpush.msra.mxu0 %v2175
    %2546 = vmatpush.msra.mxu0 %v2173
    %2547 = vmatpush.msra.mxu0 %v2171
    %2548 = vmatpush.msra.mxu0 %v2169
    %2549 = vmatpush.msra.mxu0 %v2167
    %2550 = vmatpush.msra.mxu0 %v2165
    %2551 = vmatpush.msra.mxu0 %v2163
    %2552 = vmatpush.msra.mxu0 %v2161
    %2553 = vmatpush.msra.mxu0 %v2159
    %2554 = vmatpush.msra.mxu0 %v2157
    %2555 = vmatpush.msra.mxu0 %v2155
    %2556 = vmatpush.msra.mxu0 %v2153
    %2557 = vmatpush.msra.mxu0 %v2151
    %2558 = vmatpush.msra.mxu0 %v2149
    %2559 = vmatpush.msra.mxu0 %v2147
    %2560 = vmatmul.f32.gmra.mxu0 %v2076
    %v2561 = vpop.f32.mrf.mxu0
    %v2562 = vadd.f32 %v2542, %v2561
    %2563 = vdwg.mxu0
    %2564 = vmatpush.msra.mxu0 %v2209
    %2565 = vmatpush.msra.mxu0 %v2207
    %2566 = vmatpush.msra.mxu0 %v2205
    %2567 = vmatpush.msra.mxu0 %v2203
    %2568 = vmatpush.msra.mxu0 %v2201
    %2569 = vmatpush.msra.mxu0 %v2199
    %2570 = vmatpush.msra.mxu0 %v2197
    %2571 = vmatpush.msra.mxu0 %v2195
    %2572 = vmatpush.msra.mxu0 %v2193
    %2573 = vmatpush.msra.mxu0 %v2191
    %2574 = vmatpush.msra.mxu0 %v2189
    %2575 = vmatpush.msra.mxu0 %v2187
    %2576 = vmatpush.msra.mxu0 %v2185
    %2577 = vmatpush.msra.mxu0 %v2183
    %2578 = vmatpush.msra.mxu0 %v2181
    %2579 = vmatpush.msra.mxu0 %v2179
    %2580 = vmatmul.f32.gmra.mxu0 %v2077
    %v2581 = vpop.f32.mrf.mxu0
    %v2582 = vadd.f32 %v2562, %v2581
    %2583 = vdwg.mxu0
    %2584 = vmatpush.msra.mxu0 %v2241
    %2585 = vmatpush.msra.mxu0 %v2239
    %2586 = vmatpush.msra.mxu0 %v2237
    %2587 = vmatpush.msra.mxu0 %v2235
    %2588 = vmatpush.msra.mxu0 %v2233
    %2589 = vmatpush.msra.mxu0 %v2231
    %2590 = vmatpush.msra.mxu0 %v2229
    %2591 = vmatpush.msra.mxu0 %v2227
    %2592 = vmatpush.msra.mxu0 %v2225
    %2593 = vmatpush.msra.mxu0 %v2223
    %2594 = vmatpush.msra.mxu0 %v2221
    %2595 = vmatpush.msra.mxu0 %v2219
    %2596 = vmatpush.msra.mxu0 %v2217
    %2597 = vmatpush.msra.mxu0 %v2215
    %2598 = vmatpush.msra.mxu0 %v2213
    %2599 = vmatpush.msra.mxu0 %v2211
    %2600 = vmatmul.f32.gmra.mxu0 %v2078
    %v2601 = vpop.f32.mrf.mxu0
    %v2602 = vadd.f32 %v2582, %v2601
    %2603 = vdwg.mxu0
    %2604 = vmatpush.msra.mxu0 %v2273
    %2605 = vmatpush.msra.mxu0 %v2271
    %2606 = vmatpush.msra.mxu0 %v2269
    %2607 = vmatpush.msra.mxu0 %v2267
    %2608 = vmatpush.msra.mxu0 %v2265
    %2609 = vmatpush.msra.mxu0 %v2263
    %2610 = vmatpush.msra.mxu0 %v2261
    %2611 = vmatpush.msra.mxu0 %v2259
    %2612 = vmatpush.msra.mxu0 %v2257
    %2613 = vmatpush.msra.mxu0 %v2255
    %2614 = vmatpush.msra.mxu0 %v2253
    %2615 = vmatpush.msra.mxu0 %v2251
    %2616 = vmatpush.msra.mxu0 %v2249
    %2617 = vmatpush.msra.mxu0 %v2247
    %2618 = vmatpush.msra.mxu0 %v2245
    %2619 = vmatpush.msra.mxu0 %v2243
    %2620 = vmatmul.f32.gmra.mxu0 %v2079
    %v2621 = vpop.f32.mrf.mxu0
    %v2622 = vadd.f32 %v2602, %v2621
    %2623 = vdwg.mxu0
    %2624 = vmatpush.msra.mxu0 %v2305
    %2625 = vmatpush.msra.mxu0 %v2303
    %2626 = vmatpush.msra.mxu0 %v2301
    %2627 = vmatpush.msra.mxu0 %v2299
    %2628 = vmatpush.msra.mxu0 %v2297
    %2629 = vmatpush.msra.mxu0 %v2295
    %2630 = vmatpush.msra.mxu0 %v2293
    %2631 = vmatpush.msra.mxu0 %v2291
    %2632 = vmatpush.msra.mxu0 %v2289
    %2633 = vmatpush.msra.mxu0 %v2287
    %2634 = vmatpush.msra.mxu0 %v2285
    %2635 = vmatpush.msra.mxu0 %v2283
    %2636 = vmatpush.msra.mxu0 %v2281
    %2637 = vmatpush.msra.mxu0 %v2279
    %2638 = vmatpush.msra.mxu0 %v2277
    %2639 = vmatpush.msra.mxu0 %v2275
    %2640 = vmatmul.f32.gmra.mxu0 %v2080
    %v2641 = vpop.f32.mrf.mxu0
    %v2642 = vadd.f32 %v2622, %v2641
    %2643 = vdwg.mxu0
    %2644 = vmatpush.msra.mxu0 %v2337
    %2645 = vmatpush.msra.mxu0 %v2335
    %2646 = vmatpush.msra.mxu0 %v2333
    %2647 = vmatpush.msra.mxu0 %v2331
    %2648 = vmatpush.msra.mxu0 %v2329
    %2649 = vmatpush.msra.mxu0 %v2327
    %2650 = vmatpush.msra.mxu0 %v2325
    %2651 = vmatpush.msra.mxu0 %v2323
    %2652 = vmatpush.msra.mxu0 %v2321
    %2653 = vmatpush.msra.mxu0 %v2319
    %2654 = vmatpush.msra.mxu0 %v2317
    %2655 = vmatpush.msra.mxu0 %v2315
    %2656 = vmatpush.msra.mxu0 %v2313
    %2657 = vmatpush.msra.mxu0 %v2311
    %2658 = vmatpush.msra.mxu0 %v2309
    %2659 = vmatpush.msra.mxu0 %v2307
    %2660 = vmatmul.f32.gmra.mxu0 %v2081
    %v2661 = vpop.f32.mrf.mxu0
    %v2662 = vadd.f32 %v2642, %v2661
    %2663 = vdwg.mxu0
    %v2664 = vmax.f32 %v2502, 0.0
    %v2665 = vmax.f32 %v2662, 0.0
    %v2666 = vld [vmem:[%s5] sm:$0xff]
    %v2667 = vld [vmem:[%s5 + $0x8] sm:$0xff]
    %v2668 = vld [vmem:[%s5 + $0x10] sm:$0xff]
    %v2669 = vld [vmem:[%s5 + $0x18] sm:$0xff]
    %v2670 = vld [vmem:[%s5 + $0x20] sm:$0xff]
    %v2671 = vld [vmem:[%s5 + $0x28] sm:$0xff]
    %v2672 = vld [vmem:[%s5 + $0x30] sm:$0xff]
    %v2673 = vld [vmem:[%s5 + $0x38] sm:$0xff]
    %v2674 = vld [vmem:[%s5 + $0x40] sm:$0xff]
    %v2675 = vld [vmem:[%s5 + $0x48] sm:$0xff]
    %v2676 = vld [vmem:[%s5 + $0x50] sm:$0xff]
    %v2677 = vld [vmem:[%s5 + $0x58] sm:$0xff]
    %v2678 = vld [vmem:[%s5 + $0x60] sm:$0xff]
    %v2679 = vld [vmem:[%s5 + $0x68] sm:$0xff]
    %v2680 = vld [vmem:[%s5 + $0x70] sm:$0xff]
    %v2681 = vld [vmem:[%s5 + $0x78] sm:$0xff]
    %v2682 = vld [vmem:[%s5 + $0x80] sm:$0xff]
    %v2683 = vld [vmem:[%s5 + $0x88] sm:$0xff]
    %v2684 = vld [vmem:[%s5 + $0x90] sm:$0xff]
    %v2685 = vld [vmem:[%s5 + $0x98] sm:$0xff]
    %v2686 = vld [vmem:[%s5 + $0xa0] sm:$0xff]
    %v2687 = vld [vmem:[%s5 + $0xa8] sm:$0xff]
    %v2688 = vld [vmem:[%s5 + $0xb0] sm:$0xff]
    %v2689 = vld [vmem:[%s5 + $0xb8] sm:$0xff]
    %v2690 = vld [vmem:[%s5 + $0xc0] sm:$0xff]
    %v2691 = vld [vmem:[%s5 + $0xc8] sm:$0xff]
    %v2692 = vld [vmem:[%s5 + $0xd0] sm:$0xff]
    %v2693 = vld [vmem:[%s5 + $0xd8] sm:$0xff]
    %v2694 = vld [vmem:[%s5 + $0xe0] sm:$0xff]
    %v2695 = vld [vmem:[%s5 + $0xe8] sm:$0xff]
    %v2696 = vld [vmem:[%s5 + $0xf0] sm:$0xff]
    %v2697 = vld [vmem:[%s5 + $0xf8] sm:$0xff]
    %v2698 = vld [vmem:[%s6] sm:$0x1]
    %v2700 = vperm.slane %v2698, 0
    %2702 = vmatpush.msra.mxu0 %v2681
    %2703 = vmatpush.msra.mxu0 %v2680
    %2704 = vmatpush.msra.mxu0 %v2679
    %2705 = vmatpush.msra.mxu0 %v2678
    %2706 = vmatpush.msra.mxu0 %v2677
    %2707 = vmatpush.msra.mxu0 %v2676
    %2708 = vmatpush.msra.mxu0 %v2675
    %2709 = vmatpush.msra.mxu0 %v2674
    %2710 = vmatpush.msra.mxu0 %v2673
    %2711 = vmatpush.msra.mxu0 %v2672
    %2712 = vmatpush.msra.mxu0 %v2671
    %2713 = vmatpush.msra.mxu0 %v2670
    %2714 = vmatpush.msra.mxu0 %v2669
    %2715 = vmatpush.msra.mxu0 %v2668
    %2716 = vmatpush.msra.mxu0 %v2667
    %2717 = vmatpush.msra.mxu0 %v2666
    %2718 = vmatmul.f32.gmra.mxu0 %v2664
    %v2719 = vpop.f32.mrf.mxu0
    %v2720 = vadd.f32 %v2700, %v2719
    %2721 = vdwg.mxu0
    %2722 = vmatpush.msra.mxu0 %v2697
    %2723 = vmatpush.msra.mxu0 %v2696
    %2724 = vmatpush.msra.mxu0 %v2695
    %2725 = vmatpush.msra.mxu0 %v2694
    %2726 = vmatpush.msra.mxu0 %v2693
    %2727 = vmatpush.msra.mxu0 %v2692
    %2728 = vmatpush.msra.mxu0 %v2691
    %2729 = vmatpush.msra.mxu0 %v2690
    %2730 = vmatpush.msra.mxu0 %v2689
    %2731 = vmatpush.msra.mxu0 %v2688
    %2732 = vmatpush.msra.mxu0 %v2687
    %2733 = vmatpush.msra.mxu0 %v2686
    %2734 = vmatpush.msra.mxu0 %v2685
    %2735 = vmatpush.msra.mxu0 %v2684
    %2736 = vmatpush.msra.mxu0 %v2683
    %2737 = vmatpush.msra.mxu0 %v2682
    %2738 = vmatmul.f32.gmra.mxu0 %v2665
    %v2739 = vpop.f32.mrf.mxu0
    %v2740 = vadd.f32 %v2720, %v2739
    %2741 = vdwg.mxu0
    %v2742 = vmax.f32 %v2740, 0.0
    %v2743 = vld [vmem:[%s7] sm:$0xff]
    %v2744 = vld [vmem:[%s7 + $0x8] sm:$0xff]
    %v2745 = vld [vmem:[%s7 + $0x10] sm:$0xff]
    %v2746 = vld [vmem:[%s7 + $0x18] sm:$0xff]
    %v2747 = vld [vmem:[%s7 + $0x20] sm:$0xff]
    %v2748 = vld [vmem:[%s7 + $0x28] sm:$0xff]
    %v2749 = vld [vmem:[%s7 + $0x30] sm:$0xff]
    %v2750 = vld [vmem:[%s7 + $0x38] sm:$0xff]
    %v2751 = vld [vmem:[%s7 + $0x40] sm:$0xff]
    %v2752 = vld [vmem:[%s7 + $0x48] sm:$0xff]
    %v2753 = vld [vmem:[%s7 + $0x50] sm:$0xff]
    %v2754 = vld [vmem:[%s7 + $0x58] sm:$0xff]
    %v2755 = vld [vmem:[%s7 + $0x60] sm:$0xff]
    %v2756 = vld [vmem:[%s7 + $0x68] sm:$0xff]
    %v2757 = vld [vmem:[%s7 + $0x70] sm:$0xff]
    %v2758 = vld [vmem:[%s7 + $0x78] sm:$0xff]
    %v2759 = vld [vmem:[%s8] sm:$0x1]
    %v2761 = vperm.slane %v2759, 0
    %2763 = vmatpush.msra.mxu0 %v2758
    %2764 = vmatpush.msra.mxu0 %v2757
    %2765 = vmatpush.msra.mxu0 %v2756
    %2766 = vmatpush.msra.mxu0 %v2755
    %2767 = vmatpush.msra.mxu0 %v2754
    %2768 = vmatpush.msra.mxu0 %v2753
    %2769 = vmatpush.msra.mxu0 %v2752
    %2770 = vmatpush.msra.mxu0 %v2751
    %2771 = vmatpush.msra.mxu0 %v2750
    %2772 = vmatpush.msra.mxu0 %v2749
    %2773 = vmatpush.msra.mxu0 %v2748
    %2774 = vmatpush.msra.mxu0 %v2747
    %2775 = vmatpush.msra.mxu0 %v2746
    %2776 = vmatpush.msra.mxu0 %v2745
    %2777 = vmatpush.msra.mxu0 %v2744
    %2778 = vmatpush.msra.mxu0 %v2743
    %2779 = vmatmul.f32.gmra.mxu0 %v2742
    %v2780 = vpop.f32.mrf.mxu0
    %v2781 = vadd.f32 %v2761, %v2780
    %2782 = vdwg.mxu0
    %2783 = vst [vmem:[#allocation2] sm:$0xff] %v2781
    // Predicated region
    $region38: #{_fcnet_impl.1} parent=1 // pred_check
      _
    $region39: #{_fcnet_impl.1} parent=1 // pred_check_branch
      %2785 = sbr.rel (0) target = $region41
    $region40: #{_fcnet_impl.1} parent=1 // pred_region
      %2787 = vsyncadd [#allocation3], 0
      %s2789 = sshll.u32 [#allocation2], 4
      %s2790 = int_to_ptr.vmem [resolvable:$true] %s2789
      %s2791 = sshll.u32 %s9, 4
      %s2792 = int_to_ptr.hbm [resolvable:$true] %s2791
      %2794 = dma.vmem_to_hbm [thread:$0]  %s2790, 128, %s2792, [#allocation3]
    $region41: #{_fcnet_impl.1} parent=1 // pred_fallthru
      _
    // Predicated region
    $region42: #{_fcnet_impl.1} parent=1 // pred_check
      _
    $region43: #{_fcnet_impl.1} parent=1 // pred_check_branch
      %2796 = sbr.rel (0) target = $region45
    $region44: #{_fcnet_impl.1} parent=1 // pred_region
      %2798 = dma.done [#allocation3], 128
    $region45: #{_fcnet_impl.1} parent=1 // pred_fallthru
      _
    %2799 = vsyncpa [#allocation3], 1

</llo_original>
